<compile_context>
chip_gen: v7x
topology: tpu7x:2x2x1
jax: 0.10.0
libtpu: 0.0.40
codegen_flags: <defaults>
</compile_context>

<pallas_src>
import jax
import jax.numpy as jnp
import numpy as np
from jax import lax
from jax.experimental import pallas as pl
from jax.experimental.pallas import tpu as pltpu

KMAX = 6  # largest conv kernel size (branches use k = 2, 4, 6)


def _round_up(v, m):
    return (v + m - 1) // m * m


# ----------------------------- Pallas kernel ------------------------------ #

def _make_kernel(B, L, Lpad, R, Rx, V, E, H, CP):
    louts = (L - 1, L - 3, L - 5)  # per-branch conv output lengths (k=2,4,6)

    def kernel(tok_ref, emb_ref, wconv_ref, bconv_ref,
               wih_f_ref, whh_f_ref, bf_ref, wih_b_ref, bb_ref,
               wcls_ref, bcls_ref, out_ref):
        f32 = jnp.float32

        # ---- Embedding lookup fused in-kernel as a one-hot matmul.  Pad rows
        # carry token id -1, so their one-hot row (and embedding) is zero.
        tok = tok_ref[...]                                       # (Rx, 1) i32
        vocab_ids = lax.broadcasted_iota(jnp.int32, (Rx, V), 1)
        onehot = jnp.where(tok == vocab_ids, 1.0, 0.0).astype(f32)
        x_flat = jnp.dot(onehot, emb_ref[...],
                         preferred_element_type=f32)             # (Rx, E)

        # ---- Fused conv1/conv2/conv3: one lane-dense matmul per tap.
        y = jnp.zeros((R, CP), f32)
        for j in range(KMAX):
            y = y + jnp.dot(x_flat[j:j + R, :], wconv_ref[j],
                            preferred_element_type=f32)
        y = y + bconv_ref[...]                                   # (1, CP)
        y3 = y.reshape(B, Lpad, CP)                              # Lpad % 8 == 0

        # LayerNorm over the valid time steps of each branch (weight=1, bias=0,
        # eps=1e-5, biased variance), then ReLU and max-pool over time.
        # Invalid time steps are masked out of both the statistics and the max
        # (safe: LN output is zero-mean over valid steps -> valid max >= 0).
        lane = lax.broadcasted_iota(jnp.int32, (1, Lpad, CP), 2)
        tpos = lax.broadcasted_iota(jnp.int32, (1, Lpad, CP), 1)
        lout = jnp.where(lane < H, louts[0],
                         jnp.where(lane < 2 * H, louts[1], louts[2]))
        mask = (tpos < lout).astype(f32)                         # (1, Lpad, CP)
        cnt = lout[:, :1, :].astype(f32)                         # (1, 1, CP)
        mean = jnp.sum(y3 * mask, axis=1, keepdims=True) / cnt
        diff = (y3 - mean) * mask
        var = jnp.sum(diff * diff, axis=1, keepdims=True) / cnt
        yn = (y3 - mean) * lax.rsqrt(var + 1e-5)
        yr = jnp.maximum(yn, 0.0) * mask                         # ReLU (dropout2 = id)
        pooled = jnp.max(yr, axis=1)                             # (B, CP)

        # ---- Bidirectional LSTM; only lstm_output[:, -1, :] is consumed:
        #   forward  -> hidden state after all L steps,
        #   backward -> one cell step on x[:, L-1, :] with zero initial state.
        # Input projection hoisted out of the recurrence.
        whh_f = whh_f_ref[...]                                   # (H, 4H)
        xg = (jnp.dot(x_flat[0:R, :], wih_f_ref[...],
                      preferred_element_type=f32)
              + bf_ref[...]).reshape(B, Lpad, 4 * H)

        glane = lax.broadcasted_iota(jnp.int32, (1, 4 * H), 1)
        g_is_tanh = (glane >= 2 * H) & (glane < 3 * H)           # gate order i,f,g,o

        h = jnp.zeros((B, H), f32)
        c = jnp.zeros((B, H), f32)
        # TODO(synk): switch to lax.fori_loop if L grows well beyond 16
        # (a static unroll does not bound vreg live ranges).
        for t in range(L):
            gates = xg[:, t, :] + jnp.dot(h, whh_f,
                                          preferred_element_type=f32)
            act = jnp.where(g_is_tanh, jnp.tanh(gates), jax.nn.sigmoid(gates))
            c = act[:, H:2 * H] * c + act[:, 0:H] * act[:, 2 * H:3 * H]
            h = act[:, 3 * H:4 * H] * jnp.tanh(c)

        x_last = x_flat[0:R, :].reshape(B, Lpad, E)[:, L - 1, :]  # (B, E)
        gb = jnp.dot(x_last, wih_b_ref[...],
                     preferred_element_type=f32) + bb_ref[...]
        actb = jnp.where(g_is_tanh, jnp.tanh(gb), jax.nn.sigmoid(gb))
        cb = actb[:, 0:H] * actb[:, 2 * H:3 * H]                 # h0 = c0 = 0
        hb = actb[:, 3 * H:4 * H] * jnp.tanh(cb)

        # ---- concat -> ReLU -> classifier (weights pre-padded lane-dense;
        # zero rows absorb the conv pad lanes).  Output store is 128 lanes.
        feat = jnp.maximum(jnp.concatenate([pooled, h, hb], axis=-1), 0.0)
        out_ref[...] = (jnp.dot(feat, wcls_ref[...],
                                preferred_element_type=f32)
                        + bcls_ref[...]).astype(out_ref.dtype)

    return kernel


# ------------------------------ JAX wrapper ------------------------------- #

def build_params(key, vocab_size, E, H, C):
    ks = jax.random.split(key, 16)
    bound = 1.0 / np.sqrt(H)
    return {
        "emb": 0.02 * jax.random.normal(ks[0], (vocab_size, E), jnp.float32),
        "w_conv1": 0.02 * jax.random.normal(ks[1], (H, E, 2), jnp.float32),
        "w_conv2": 0.02 * jax.random.normal(ks[2], (H, E, 4), jnp.float32),
        "w_conv3": 0.02 * jax.random.normal(ks[3], (H, E, 6), jnp.float32),
        "b_conv1": jnp.zeros((H,), jnp.float32),
        "b_conv2": jnp.zeros((H,), jnp.float32),
        "b_conv3": jnp.zeros((H,), jnp.float32),
        # LSTM keeps torch default uniform(-1/sqrt(H), 1/sqrt(H)) init.
        "w_ih_f": jax.random.uniform(ks[4], (4 * H, E), jnp.float32, -bound, bound),
        "w_hh_f": jax.random.uniform(ks[5], (4 * H, H), jnp.float32, -bound, bound),
        "b_ih_f": jax.random.uniform(ks[6], (4 * H,), jnp.float32, -bound, bound),
        "b_hh_f": jax.random.uniform(ks[7], (4 * H,), jnp.float32, -bound, bound),
        "w_ih_b": jax.random.uniform(ks[8], (4 * H, E), jnp.float32, -bound, bound),
        "w_hh_b": jax.random.uniform(ks[9], (4 * H, H), jnp.float32, -bound, bound),
        "b_ih_b": jax.random.uniform(ks[10], (4 * H,), jnp.float32, -bound, bound),
        "b_hh_b": jax.random.uniform(ks[11], (4 * H,), jnp.float32, -bound, bound),
        "w_cls": 0.02 * jax.random.normal(ks[12], (C, 5 * H), jnp.float32),
        "b_cls": jnp.zeros((C,), jnp.float32),
    }


def model_forward(tokens, p):
    B, L = tokens.shape
    V, E = p["emb"].shape
    H = p["w_hh_f"].shape[1]
    C = p["w_cls"].shape[0]

    Lpad = _round_up(L + KMAX - 2, 8)       # per-batch segment (zero padded)
    R = B * Lpad
    Rx = R + _round_up(KMAX - 2, 8)         # extra rows so every tap slice is in range
    CP = _round_up(3 * H, 128)              # fused conv output lanes
    CPAD = _round_up(C, 128)                # lane-dense logits

    # tokens flattened into per-batch segments of Lpad rows; pad id = -1.
    tok = jnp.full((B, Lpad), -1, jnp.int32).at[:, :L].set(tokens.astype(jnp.int32))
    tok = jnp.concatenate([tok.reshape(R), jnp.full((Rx - R,), -1, jnp.int32)])
    tok = tok.reshape(Rx, 1)

    # fused conv weights: per tap j an (E, CP) block [w1_j | w2_j | w3_j | 0].
    def tap(w, j):
        k = w.shape[2]
        return w[:, :, j].T if j < k else jnp.zeros((E, H), jnp.float32)

    wconv = jnp.stack(
        [jnp.concatenate([tap(p["w_conv1"], j), tap(p["w_conv2"], j),
                          tap(p["w_conv3"], j),
                          jnp.zeros((E, CP - 3 * H), jnp.float32)], axis=1)
         for j in range(KMAX)], axis=0)                          # (KMAX, E, CP)
    bconv = jnp.concatenate([p["b_conv1"], p["b_conv2"], p["b_conv3"],
                             jnp.zeros((CP - 3 * H,), jnp.float32)]).reshape(1, CP)

    # classifier weights padded to lane-dense (CP + 2H, CPAD).
    wc = p["w_cls"]                                              # (C, 5H)
    wcls = jnp.zeros((CP + 2 * H, CPAD), jnp.float32)
    wcls = wcls.at[0:3 * H, 0:C].set(wc[:, 0:3 * H].T)
    wcls = wcls.at[CP:CP + 2 * H, 0:C].set(wc[:, 3 * H:5 * H].T)
    bcls = jnp.zeros((1, CPAD), jnp.float32).at[0, 0:C].set(p["b_cls"])

    args = (
        tok, p["emb"].astype(jnp.float32), wconv, bconv,
        p["w_ih_f"].T, p["w_hh_f"].T,
        (p["b_ih_f"] + p["b_hh_f"]).reshape(1, 4 * H),
        p["w_ih_b"].T,                                           # h0 = 0 => whh_b unused
        (p["b_ih_b"] + p["b_hh_b"]).reshape(1, 4 * H),
        wcls, bcls,
    )
    kernel = _make_kernel(B, L, Lpad, R, Rx, V, E, H, CP)

    # TODO(synk): for larger batches add a batch grid with
    # dimension_semantics=("parallel",) (v7x dual TensorCore) and bf16 operands
    # on v6e/v7x; at B=2 the serial LSTM chain dominates and splitting the
    # batch buys nothing, and f32 keeps the 1e-4 reference tolerance.
    out = pl.pallas_call(
        kernel,
        out_shape=jax.ShapeDtypeStruct((B, CPAD), jnp.float32),
        in_specs=[pl.BlockSpec(memory_space=pltpu.MemorySpace.VMEM)] * len(args),
        out_specs=pl.BlockSpec(memory_space=pltpu.MemorySpace.VMEM),
    )(*args)
    return out[:, :C]


# --------------------------- pure-JAX reference ---------------------------- #

def reference_forward(tokens, p):
    x = jnp.take(p["emb"], tokens, axis=0).astype(jnp.float32)   # (B, L, E)
    B, L, E = x.shape
    H = p["w_hh_f"].shape[1]

    def branch(w, b):
        Hh, _, k = w.shape
        Lout = L - k + 1
        out = jnp.zeros((B, Hh, Lout), jnp.float32)
        for j in range(k):
            out = out + jnp.einsum("ble,he->bhl", x[:, j:j + Lout, :], w[:, :, j])
        out = out + b[None, :, None]
        mean = out.mean(axis=-1, keepdims=True)
        var = ((out - mean) ** 2).mean(axis=-1, keepdims=True)
        out = (out - mean) / jnp.sqrt(var + 1e-5)
        out = jnp.maximum(out, 0.0)
        return out.max(axis=-1)                                   # (B, H)

    o1 = branch(p["w_conv1"], p["b_conv1"])
    o2 = branch(p["w_conv2"], p["b_conv2"])
    o3 = branch(p["w_conv3"], p["b_conv3"])

    def cell(x_t, h, c, wih, whh, bih, bhh):
        g = x_t @ wih.T + h @ whh.T + bih + bhh
        i = jax.nn.sigmoid(g[:, :H]); f = jax.nn.sigmoid(g[:, H:2 * H])
        gg = jnp.tanh(g[:, 2 * H:3 * H]); o = jax.nn.sigmoid(g[:, 3 * H:])
        c = f * c + i * gg
        return o * jnp.tanh(c), c

    h = jnp.zeros((B, H)); c = jnp.zeros((B, H))
    for t in range(L):
        h, c = cell(x[:, t, :], h, c, p["w_ih_f"], p["w_hh_f"],
                    p["b_ih_f"], p["b_hh_f"])
    hb, _ = cell(x[:, L - 1, :], jnp.zeros((B, H)), jnp.zeros((B, H)),
                 p["w_ih_b"], p["w_hh_b"], p["b_ih_b"], p["b_hh_b"])

    cat = jnp.concatenate([o1, o2, o3, h, hb], axis=-1)
    cat = jnp.maximum(cat, 0.0)
    return cat @ p["w_cls"].T + p["b_cls"]


# --------------------------------- main ------------------------------------ #

if __name__ == "__main__":
    vocab_size, E, H, C = 100, 32, 32, 4
    B, L = 2, 16

    key = jax.random.PRNGKey(0)
    k_tok, k_par = jax.random.split(key)
    tokens = jax.random.randint(k_tok, (B, L), 0, vocab_size, dtype=jnp.int32)
    params = build_params(k_par, vocab_size, E, H, C)

    out = jax.block_until_ready(model_forward(tokens, params))
    ref = jax.block_until_ready(reference_forward(tokens, params))
    np.testing.assert_allclose(np.asarray(out), np.asarray(ref),
                               rtol=1e-4, atol=1e-4)
    print("KERNEL_OK")
</pallas_src>

<mosaic_0001>
module attributes {stable_mosaic.version = 11 : i64} {
  func.func @kernel(%arg0: memref<56x1xi32, #tpu.memory_space<vmem>>, %arg1: memref<100x32xf32, #tpu.memory_space<vmem>>, %arg2: memref<6x32x128xf32, #tpu.memory_space<vmem>>, %arg3: memref<1x128xf32, #tpu.memory_space<vmem>>, %arg4: memref<32x128xf32, #tpu.memory_space<vmem>>, %arg5: memref<32x128xf32, #tpu.memory_space<vmem>>, %arg6: memref<1x128xf32, #tpu.memory_space<vmem>>, %arg7: memref<32x128xf32, #tpu.memory_space<vmem>>, %arg8: memref<1x128xf32, #tpu.memory_space<vmem>>, %arg9: memref<192x128xf32, #tpu.memory_space<vmem>>, %arg10: memref<1x128xf32, #tpu.memory_space<vmem>>, %arg11: memref<2x128xf32, #tpu.memory_space<vmem>>) attributes {dimension_semantics = [], scalar_prefetch = 0 : i64, scratch_operands = 0 : i64, tpu.core_type = #tpu.core_type<tc>} {
    %c0 = arith.constant 0 : index
    %c0_0 = arith.constant 0 : index
    %0 = vector.load %arg0[%c0, %c0_0] : memref<56x1xi32, #tpu.memory_space<vmem>>, vector<56x1xi32>
    %1 = tpu.iota {dimensions = array<i32: 1>} : vector<56x100xi32>
    %2 = vector.broadcast %0 : vector<56x1xi32> to vector<56x100xi32>
    %3 = arith.cmpi eq, %2, %1 : vector<56x100xi32>
    %cst = arith.constant 1.000000e+00 : f32
    %cst_1 = arith.constant 0.000000e+00 : f32
    %4 = vector.broadcast %cst : f32 to vector<56x100xf32>
    %5 = vector.broadcast %cst_1 : f32 to vector<56x100xf32>
    %6 = arith.select %3, %4, %5 : vector<56x100xi1>, vector<56x100xf32>
    %c0_2 = arith.constant 0 : index
    %c0_3 = arith.constant 0 : index
    %7 = vector.load %arg1[%c0_2, %c0_3] : memref<100x32xf32, #tpu.memory_space<vmem>>, vector<100x32xf32>
    %cst_4 = arith.constant dense<0.000000e+00> : vector<56x32xf32>
    %8 = tpu.matmul %6, %7, %cst_4 {dimension_numbers = #tpu.dot_dimension_numbers<[1], [0], [0], [1], [0, 0, 1, 1], [], []>} : vector<56x100xf32>, vector<100x32xf32>, vector<56x32xf32> -> vector<56x32xf32>
    %cst_5 = arith.constant 0.000000e+00 : f32
    %9 = vector.broadcast %cst_5 : f32 to vector<48x128xf32>
    %10 = vector.extract_strided_slice %8 {offsets = [0, 0], sizes = [48, 32], strides = [1, 1]} : vector<56x32xf32> to vector<48x32xf32>
    %c0_6 = arith.constant 0 : index
    %c0_7 = arith.constant 0 : index
    %c0_8 = arith.constant 0 : index
    %11 = vector.load %arg2[%c0_6, %c0_7, %c0_8] : memref<6x32x128xf32, #tpu.memory_space<vmem>>, vector<1x32x128xf32>
    %12 = vector.shape_cast %11 : vector<1x32x128xf32> to vector<32x128xf32>
    %cst_9 = arith.constant dense<0.000000e+00> : vector<48x128xf32>
    %13 = tpu.matmul %10, %12, %cst_9 {dimension_numbers = #tpu.dot_dimension_numbers<[1], [0], [0], [1], [0, 0, 1, 1], [], []>} : vector<48x32xf32>, vector<32x128xf32>, vector<48x128xf32> -> vector<48x128xf32>
    %14 = arith.addf %9, %13 : vector<48x128xf32>
    %15 = vector.extract_strided_slice %8 {offsets = [1, 0], sizes = [48, 32], strides = [1, 1]} : vector<56x32xf32> to vector<48x32xf32>
    %c1 = arith.constant 1 : index
    %c0_10 = arith.constant 0 : index
    %c0_11 = arith.constant 0 : index
    %16 = vector.load %arg2[%c1, %c0_10, %c0_11] : memref<6x32x128xf32, #tpu.memory_space<vmem>>, vector<1x32x128xf32>
    %17 = vector.shape_cast %16 : vector<1x32x128xf32> to vector<32x128xf32>
    %cst_12 = arith.constant dense<0.000000e+00> : vector<48x128xf32>
    %18 = tpu.matmul %15, %17, %cst_12 {dimension_numbers = #tpu.dot_dimension_numbers<[1], [0], [0], [1], [0, 0, 1, 1], [], []>} : vector<48x32xf32>, vector<32x128xf32>, vector<48x128xf32> -> vector<48x128xf32>
    %19 = arith.addf %14, %18 : vector<48x128xf32>
    %20 = vector.extract_strided_slice %8 {offsets = [2, 0], sizes = [48, 32], strides = [1, 1]} : vector<56x32xf32> to vector<48x32xf32>
    %c2 = arith.constant 2 : index
    %c0_13 = arith.constant 0 : index
    %c0_14 = arith.constant 0 : index
    %21 = vector.load %arg2[%c2, %c0_13, %c0_14] : memref<6x32x128xf32, #tpu.memory_space<vmem>>, vector<1x32x128xf32>
    %22 = vector.shape_cast %21 : vector<1x32x128xf32> to vector<32x128xf32>
    %cst_15 = arith.constant dense<0.000000e+00> : vector<48x128xf32>
    %23 = tpu.matmul %20, %22, %cst_15 {dimension_numbers = #tpu.dot_dimension_numbers<[1], [0], [0], [1], [0, 0, 1, 1], [], []>} : vector<48x32xf32>, vector<32x128xf32>, vector<48x128xf32> -> vector<48x128xf32>
    %24 = arith.addf %19, %23 : vector<48x128xf32>
    %25 = vector.extract_strided_slice %8 {offsets = [3, 0], sizes = [48, 32], strides = [1, 1]} : vector<56x32xf32> to vector<48x32xf32>
    %c3 = arith.constant 3 : index
    %c0_16 = arith.constant 0 : index
    %c0_17 = arith.constant 0 : index
    %26 = vector.load %arg2[%c3, %c0_16, %c0_17] : memref<6x32x128xf32, #tpu.memory_space<vmem>>, vector<1x32x128xf32>
    %27 = vector.shape_cast %26 : vector<1x32x128xf32> to vector<32x128xf32>
    %cst_18 = arith.constant dense<0.000000e+00> : vector<48x128xf32>
    %28 = tpu.matmul %25, %27, %cst_18 {dimension_numbers = #tpu.dot_dimension_numbers<[1], [0], [0], [1], [0, 0, 1, 1], [], []>} : vector<48x32xf32>, vector<32x128xf32>, vector<48x128xf32> -> vector<48x128xf32>
    %29 = arith.addf %24, %28 : vector<48x128xf32>
    %30 = vector.extract_strided_slice %8 {offsets = [4, 0], sizes = [48, 32], strides = [1, 1]} : vector<56x32xf32> to vector<48x32xf32>
    %c4 = arith.constant 4 : index
    %c0_19 = arith.constant 0 : index
    %c0_20 = arith.constant 0 : index
    %31 = vector.load %arg2[%c4, %c0_19, %c0_20] : memref<6x32x128xf32, #tpu.memory_space<vmem>>, vector<1x32x128xf32>
    %32 = vector.shape_cast %31 : vector<1x32x128xf32> to vector<32x128xf32>
    %cst_21 = arith.constant dense<0.000000e+00> : vector<48x128xf32>
    %33 = tpu.matmul %30, %32, %cst_21 {dimension_numbers = #tpu.dot_dimension_numbers<[1], [0], [0], [1], [0, 0, 1, 1], [], []>} : vector<48x32xf32>, vector<32x128xf32>, vector<48x128xf32> -> vector<48x128xf32>
    %34 = arith.addf %29, %33 : vector<48x128xf32>
    %35 = vector.extract_strided_slice %8 {offsets = [5, 0], sizes = [48, 32], strides = [1, 1]} : vector<56x32xf32> to vector<48x32xf32>
    %c5 = arith.constant 5 : index
    %c0_22 = arith.constant 0 : index
    %c0_23 = arith.constant 0 : index
    %36 = vector.load %arg2[%c5, %c0_22, %c0_23] : memref<6x32x128xf32, #tpu.memory_space<vmem>>, vector<1x32x128xf32>
    %37 = vector.shape_cast %36 : vector<1x32x128xf32> to vector<32x128xf32>
    %cst_24 = arith.constant dense<0.000000e+00> : vector<48x128xf32>
    %38 = tpu.matmul %35, %37, %cst_24 {dimension_numbers = #tpu.dot_dimension_numbers<[1], [0], [0], [1], [0, 0, 1, 1], [], []>} : vector<48x32xf32>, vector<32x128xf32>, vector<48x128xf32> -> vector<48x128xf32>
    %39 = arith.addf %34, %38 : vector<48x128xf32>
    %c0_25 = arith.constant 0 : index
    %c0_26 = arith.constant 0 : index
    %40 = vector.load %arg3[%c0_25, %c0_26] : memref<1x128xf32, #tpu.memory_space<vmem>>, vector<1x128xf32>
    %41 = vector.broadcast %40 : vector<1x128xf32> to vector<48x128xf32>
    %42 = arith.addf %39, %41 : vector<48x128xf32>
    %43 = vector.shape_cast %42 : vector<48x128xf32> to vector<2x24x128xf32>
    %44 = tpu.iota {dimensions = array<i32: 2>} : vector<1x24x128xi32>
    %45 = tpu.iota {dimensions = array<i32: 1>} : vector<1x24x128xi32>
    %c32_i32 = arith.constant 32 : i32
    %46 = vector.broadcast %c32_i32 : i32 to vector<1x24x128xi32>
    %47 = arith.cmpi slt, %44, %46 : vector<1x24x128xi32>
    %c64_i32 = arith.constant 64 : i32
    %48 = vector.broadcast %c64_i32 : i32 to vector<1x24x128xi32>
    %49 = arith.cmpi slt, %44, %48 : vector<1x24x128xi32>
    %c13_i32 = arith.constant 13 : i32
    %c11_i32 = arith.constant 11 : i32
    %50 = vector.broadcast %c13_i32 : i32 to vector<1x24x128xi32>
    %51 = vector.broadcast %c11_i32 : i32 to vector<1x24x128xi32>
    %52 = arith.select %49, %50, %51 : vector<1x24x128xi1>, vector<1x24x128xi32>
    %c15_i32 = arith.constant 15 : i32
    %53 = vector.broadcast %c15_i32 : i32 to vector<1x24x128xi32>
    %54 = arith.select %47, %53, %52 : vector<1x24x128xi1>, vector<1x24x128xi32>
    %55 = arith.cmpi slt, %45, %54 : vector<1x24x128xi32>
    %56 = arith.extui %55 : vector<1x24x128xi1> to vector<1x24x128xi32>
    %57 = arith.sitofp %56 : vector<1x24x128xi32> to vector<1x24x128xf32>
    %58 = vector.extract_strided_slice %54 {offsets = [0, 0, 0], sizes = [1, 1, 128], strides = [1, 1, 1]} : vector<1x24x128xi32> to vector<1x1x128xi32>
    %59 = arith.sitofp %58 : vector<1x1x128xi32> to vector<1x1x128xf32>
    %60 = vector.broadcast %57 : vector<1x24x128xf32> to vector<2x24x128xf32>
    %61 = arith.mulf %43, %60 : vector<2x24x128xf32>
    %cst_27 = arith.constant dense<0.000000e+00> : vector<2x128xf32>
    %62 = vector.multi_reduction <add>, %61, %cst_27 [1] : vector<2x24x128xf32> to vector<2x128xf32>
    %63 = vector.shape_cast %62 : vector<2x128xf32> to vector<2x1x128xf32>
    %64 = vector.broadcast %59 : vector<1x1x128xf32> to vector<2x1x128xf32>
    %65 = arith.divf %63, %64 : vector<2x1x128xf32>
    %66 = vector.broadcast %65 : vector<2x1x128xf32> to vector<2x24x128xf32>
    %67 = arith.subf %43, %66 : vector<2x24x128xf32>
    %68 = vector.broadcast %57 : vector<1x24x128xf32> to vector<2x24x128xf32>
    %69 = arith.mulf %67, %68 : vector<2x24x128xf32>
    %70 = arith.mulf %69, %69 : vector<2x24x128xf32>
    %cst_28 = arith.constant dense<0.000000e+00> : vector<2x128xf32>
    %71 = vector.multi_reduction <add>, %70, %cst_28 [1] : vector<2x24x128xf32> to vector<2x128xf32>
    %72 = vector.shape_cast %71 : vector<2x128xf32> to vector<2x1x128xf32>
    %73 = vector.broadcast %59 : vector<1x1x128xf32> to vector<2x1x128xf32>
    %74 = arith.divf %72, %73 : vector<2x1x128xf32>
    %75 = vector.broadcast %65 : vector<2x1x128xf32> to vector<2x24x128xf32>
    %76 = arith.subf %43, %75 : vector<2x24x128xf32>
    %cst_29 = arith.constant 9.99999974E-6 : f32
    %77 = vector.broadcast %cst_29 : f32 to vector<2x1x128xf32>
    %78 = arith.addf %74, %77 : vector<2x1x128xf32>
    %79 = math.rsqrt %78 : vector<2x1x128xf32>
    %80 = vector.broadcast %79 : vector<2x1x128xf32> to vector<2x24x128xf32>
    %81 = arith.mulf %76, %80 : vector<2x24x128xf32>
    %cst_30 = arith.constant 0.000000e+00 : f32
    %82 = vector.broadcast %cst_30 : f32 to vector<2x24x128xf32>
    %83 = arith.maximumf %81, %82 : vector<2x24x128xf32>
    %84 = vector.broadcast %57 : vector<1x24x128xf32> to vector<2x24x128xf32>
    %85 = arith.mulf %83, %84 : vector<2x24x128xf32>
    %cst_31 = arith.constant dense<0xFF800000> : vector<2x128xf32>
    %86 = vector.multi_reduction <maximumf>, %85, %cst_31 [1] : vector<2x24x128xf32> to vector<2x128xf32>
    %c0_32 = arith.constant 0 : index
    %c0_33 = arith.constant 0 : index
    %87 = vector.load %arg5[%c0_32, %c0_33] : memref<32x128xf32, #tpu.memory_space<vmem>>, vector<32x128xf32>
    %88 = vector.extract_strided_slice %8 {offsets = [0, 0], sizes = [48, 32], strides = [1, 1]} : vector<56x32xf32> to vector<48x32xf32>
    %c0_34 = arith.constant 0 : index
    %c0_35 = arith.constant 0 : index
    %89 = vector.load %arg4[%c0_34, %c0_35] : memref<32x128xf32, #tpu.memory_space<vmem>>, vector<32x128xf32>
    %cst_36 = arith.constant dense<0.000000e+00> : vector<48x128xf32>
    %90 = tpu.matmul %88, %89, %cst_36 {dimension_numbers = #tpu.dot_dimension_numbers<[1], [0], [0], [1], [0, 0, 1, 1], [], []>} : vector<48x32xf32>, vector<32x128xf32>, vector<48x128xf32> -> vector<48x128xf32>
    %c0_37 = arith.constant 0 : index
    %c0_38 = arith.constant 0 : index
    %91 = vector.load %arg6[%c0_37, %c0_38] : memref<1x128xf32, #tpu.memory_space<vmem>>, vector<1x128xf32>
    %92 = vector.broadcast %91 : vector<1x128xf32> to vector<48x128xf32>
    %93 = arith.addf %90, %92 : vector<48x128xf32>
    %94 = vector.shape_cast %93 : vector<48x128xf32> to vector<2x24x128xf32>
    %95 = tpu.iota {dimensions = array<i32: 1>} : vector<1x128xi32>
    %c64_i32_39 = arith.constant 64 : i32
    %96 = vector.broadcast %c64_i32_39 : i32 to vector<1x128xi32>
    %97 = arith.cmpi sge, %95, %96 : vector<1x128xi32>
    %c96_i32 = arith.constant 96 : i32
    %98 = vector.broadcast %c96_i32 : i32 to vector<1x128xi32>
    %99 = arith.cmpi slt, %95, %98 : vector<1x128xi32>
    %100 = arith.andi %97, %99 : vector<1x128xi1>
    %cst_40 = arith.constant 0.000000e+00 : f32
    %101 = vector.broadcast %cst_40 : f32 to vector<2x32xf32>
    %cst_41 = arith.constant 0.000000e+00 : f32
    %102 = vector.broadcast %cst_41 : f32 to vector<2x32xf32>
    %103 = vector.extract_strided_slice %94 {offsets = [0, 0, 0], sizes = [2, 1, 128], strides = [1, 1, 1]} : vector<2x24x128xf32> to vector<2x1x128xf32>
    %104 = vector.shape_cast %103 : vector<2x1x128xf32> to vector<2x128xf32>
    %cst_42 = arith.constant dense<0.000000e+00> : vector<2x128xf32>
    %105 = tpu.matmul %101, %87, %cst_42 {dimension_numbers = #tpu.dot_dimension_numbers<[1], [0], [0], [1], [0, 0, 1, 1], [], []>} : vector<2x32xf32>, vector<32x128xf32>, vector<2x128xf32> -> vector<2x128xf32>
    %106 = arith.addf %104, %105 : vector<2x128xf32>
    %107 = math.tanh %106 : vector<2x128xf32>
    %108 = arith.negf %106 : vector<2x128xf32>
    %109 = math.exp %108 : vector<2x128xf32>
    %cst_43 = arith.constant 1.000000e+00 : f32
    %110 = vector.broadcast %cst_43 : f32 to vector<2x128xf32>
    %111 = arith.addf %110, %109 : vector<2x128xf32>
    %112 = arith.divf %110, %111 : vector<2x128xf32>
    %113 = vector.shape_cast %100 : vector<1x128xi1> to vector<1x128xi1>
    %114 = vector.broadcast %113 : vector<1x128xi1> to vector<2x128xi1>
    %115 = arith.select %114, %107, %112 : vector<2x128xi1>, vector<2x128xf32>
    %116 = vector.extract_strided_slice %115 {offsets = [0, 32], sizes = [2, 32], strides = [1, 1]} : vector<2x128xf32> to vector<2x32xf32>
    %117 = arith.mulf %116, %102 : vector<2x32xf32>
    %118 = vector.extract_strided_slice %115 {offsets = [0, 0], sizes = [2, 32], strides = [1, 1]} : vector<2x128xf32> to vector<2x32xf32>
    %119 = vector.extract_strided_slice %115 {offsets = [0, 64], sizes = [2, 32], strides = [1, 1]} : vector<2x128xf32> to vector<2x32xf32>
    %120 = arith.mulf %118, %119 : vector<2x32xf32>
    %121 = arith.addf %117, %120 : vector<2x32xf32>
    %122 = vector.extract_strided_slice %115 {offsets = [0, 96], sizes = [2, 32], strides = [1, 1]} : vector<2x128xf32> to vector<2x32xf32>
    %123 = math.tanh %121 : vector<2x32xf32>
    %124 = arith.mulf %122, %123 : vector<2x32xf32>
    %125 = vector.extract_strided_slice %94 {offsets = [0, 1, 0], sizes = [2, 1, 128], strides = [1, 1, 1]} : vector<2x24x128xf32> to vector<2x1x128xf32>
    %126 = vector.shape_cast %125 : vector<2x1x128xf32> to vector<2x128xf32>
    %cst_44 = arith.constant dense<0.000000e+00> : vector<2x128xf32>
    %127 = tpu.matmul %124, %87, %cst_44 {dimension_numbers = #tpu.dot_dimension_numbers<[1], [0], [0], [1], [0, 0, 1, 1], [], []>} : vector<2x32xf32>, vector<32x128xf32>, vector<2x128xf32> -> vector<2x128xf32>
    %128 = arith.addf %126, %127 : vector<2x128xf32>
    %129 = math.tanh %128 : vector<2x128xf32>
    %130 = arith.negf %128 : vector<2x128xf32>
    %131 = math.exp %130 : vector<2x128xf32>
    %cst_45 = arith.constant 1.000000e+00 : f32
    %132 = vector.broadcast %cst_45 : f32 to vector<2x128xf32>
    %133 = arith.addf %132, %131 : vector<2x128xf32>
    %134 = arith.divf %132, %133 : vector<2x128xf32>
    %135 = vector.shape_cast %100 : vector<1x128xi1> to vector<1x128xi1>
    %136 = vector.broadcast %135 : vector<1x128xi1> to vector<2x128xi1>
    %137 = arith.select %136, %129, %134 : vector<2x128xi1>, vector<2x128xf32>
    %138 = vector.extract_strided_slice %137 {offsets = [0, 32], sizes = [2, 32], strides = [1, 1]} : vector<2x128xf32> to vector<2x32xf32>
    %139 = arith.mulf %138, %121 : vector<2x32xf32>
    %140 = vector.extract_strided_slice %137 {offsets = [0, 0], sizes = [2, 32], strides = [1, 1]} : vector<2x128xf32> to vector<2x32xf32>
    %141 = vector.extract_strided_slice %137 {offsets = [0, 64], sizes = [2, 32], strides = [1, 1]} : vector<2x128xf32> to vector<2x32xf32>
    %142 = arith.mulf %140, %141 : vector<2x32xf32>
    %143 = arith.addf %139, %142 : vector<2x32xf32>
    %144 = vector.extract_strided_slice %137 {offsets = [0, 96], sizes = [2, 32], strides = [1, 1]} : vector<2x128xf32> to vector<2x32xf32>
    %145 = math.tanh %143 : vector<2x32xf32>
    %146 = arith.mulf %144, %145 : vector<2x32xf32>
    %147 = vector.extract_strided_slice %94 {offsets = [0, 2, 0], sizes = [2, 1, 128], strides = [1, 1, 1]} : vector<2x24x128xf32> to vector<2x1x128xf32>
    %148 = vector.shape_cast %147 : vector<2x1x128xf32> to vector<2x128xf32>
    %cst_46 = arith.constant dense<0.000000e+00> : vector<2x128xf32>
    %149 = tpu.matmul %146, %87, %cst_46 {dimension_numbers = #tpu.dot_dimension_numbers<[1], [0], [0], [1], [0, 0, 1, 1], [], []>} : vector<2x32xf32>, vector<32x128xf32>, vector<2x128xf32> -> vector<2x128xf32>
    %150 = arith.addf %148, %149 : vector<2x128xf32>
    %151 = math.tanh %150 : vector<2x128xf32>
    %152 = arith.negf %150 : vector<2x128xf32>
    %153 = math.exp %152 : vector<2x128xf32>
    %cst_47 = arith.constant 1.000000e+00 : f32
    %154 = vector.broadcast %cst_47 : f32 to vector<2x128xf32>
    %155 = arith.addf %154, %153 : vector<2x128xf32>
    %156 = arith.divf %154, %155 : vector<2x128xf32>
    %157 = vector.shape_cast %100 : vector<1x128xi1> to vector<1x128xi1>
    %158 = vector.broadcast %157 : vector<1x128xi1> to vector<2x128xi1>
    %159 = arith.select %158, %151, %156 : vector<2x128xi1>, vector<2x128xf32>
    %160 = vector.extract_strided_slice %159 {offsets = [0, 32], sizes = [2, 32], strides = [1, 1]} : vector<2x128xf32> to vector<2x32xf32>
    %161 = arith.mulf %160, %143 : vector<2x32xf32>
    %162 = vector.extract_strided_slice %159 {offsets = [0, 0], sizes = [2, 32], strides = [1, 1]} : vector<2x128xf32> to vector<2x32xf32>
    %163 = vector.extract_strided_slice %159 {offsets = [0, 64], sizes = [2, 32], strides = [1, 1]} : vector<2x128xf32> to vector<2x32xf32>
    %164 = arith.mulf %162, %163 : vector<2x32xf32>
    %165 = arith.addf %161, %164 : vector<2x32xf32>
    %166 = vector.extract_strided_slice %159 {offsets = [0, 96], sizes = [2, 32], strides = [1, 1]} : vector<2x128xf32> to vector<2x32xf32>
    %167 = math.tanh %165 : vector<2x32xf32>
    %168 = arith.mulf %166, %167 : vector<2x32xf32>
    %169 = vector.extract_strided_slice %94 {offsets = [0, 3, 0], sizes = [2, 1, 128], strides = [1, 1, 1]} : vector<2x24x128xf32> to vector<2x1x128xf32>
    %170 = vector.shape_cast %169 : vector<2x1x128xf32> to vector<2x128xf32>
    %cst_48 = arith.constant dense<0.000000e+00> : vector<2x128xf32>
    %171 = tpu.matmul %168, %87, %cst_48 {dimension_numbers = #tpu.dot_dimension_numbers<[1], [0], [0], [1], [0, 0, 1, 1], [], []>} : vector<2x32xf32>, vector<32x128xf32>, vector<2x128xf32> -> vector<2x128xf32>
    %172 = arith.addf %170, %171 : vector<2x128xf32>
    %173 = math.tanh %172 : vector<2x128xf32>
    %174 = arith.negf %172 : vector<2x128xf32>
    %175 = math.exp %174 : vector<2x128xf32>
    %cst_49 = arith.constant 1.000000e+00 : f32
    %176 = vector.broadcast %cst_49 : f32 to vector<2x128xf32>
    %177 = arith.addf %176, %175 : vector<2x128xf32>
    %178 = arith.divf %176, %177 : vector<2x128xf32>
    %179 = vector.shape_cast %100 : vector<1x128xi1> to vector<1x128xi1>
    %180 = vector.broadcast %179 : vector<1x128xi1> to vector<2x128xi1>
    %181 = arith.select %180, %173, %178 : vector<2x128xi1>, vector<2x128xf32>
    %182 = vector.extract_strided_slice %181 {offsets = [0, 32], sizes = [2, 32], strides = [1, 1]} : vector<2x128xf32> to vector<2x32xf32>
    %183 = arith.mulf %182, %165 : vector<2x32xf32>
    %184 = vector.extract_strided_slice %181 {offsets = [0, 0], sizes = [2, 32], strides = [1, 1]} : vector<2x128xf32> to vector<2x32xf32>
    %185 = vector.extract_strided_slice %181 {offsets = [0, 64], sizes = [2, 32], strides = [1, 1]} : vector<2x128xf32> to vector<2x32xf32>
    %186 = arith.mulf %184, %185 : vector<2x32xf32>
    %187 = arith.addf %183, %186 : vector<2x32xf32>
    %188 = vector.extract_strided_slice %181 {offsets = [0, 96], sizes = [2, 32], strides = [1, 1]} : vector<2x128xf32> to vector<2x32xf32>
    %189 = math.tanh %187 : vector<2x32xf32>
    %190 = arith.mulf %188, %189 : vector<2x32xf32>
    %191 = vector.extract_strided_slice %94 {offsets = [0, 4, 0], sizes = [2, 1, 128], strides = [1, 1, 1]} : vector<2x24x128xf32> to vector<2x1x128xf32>
    %192 = vector.shape_cast %191 : vector<2x1x128xf32> to vector<2x128xf32>
    %cst_50 = arith.constant dense<0.000000e+00> : vector<2x128xf32>
    %193 = tpu.matmul %190, %87, %cst_50 {dimension_numbers = #tpu.dot_dimension_numbers<[1], [0], [0], [1], [0, 0, 1, 1], [], []>} : vector<2x32xf32>, vector<32x128xf32>, vector<2x128xf32> -> vector<2x128xf32>
    %194 = arith.addf %192, %193 : vector<2x128xf32>
    %195 = math.tanh %194 : vector<2x128xf32>
    %196 = arith.negf %194 : vector<2x128xf32>
    %197 = math.exp %196 : vector<2x128xf32>
    %cst_51 = arith.constant 1.000000e+00 : f32
    %198 = vector.broadcast %cst_51 : f32 to vector<2x128xf32>
    %199 = arith.addf %198, %197 : vector<2x128xf32>
    %200 = arith.divf %198, %199 : vector<2x128xf32>
    %201 = vector.shape_cast %100 : vector<1x128xi1> to vector<1x128xi1>
    %202 = vector.broadcast %201 : vector<1x128xi1> to vector<2x128xi1>
    %203 = arith.select %202, %195, %200 : vector<2x128xi1>, vector<2x128xf32>
    %204 = vector.extract_strided_slice %203 {offsets = [0, 32], sizes = [2, 32], strides = [1, 1]} : vector<2x128xf32> to vector<2x32xf32>
    %205 = arith.mulf %204, %187 : vector<2x32xf32>
    %206 = vector.extract_strided_slice %203 {offsets = [0, 0], sizes = [2, 32], strides = [1, 1]} : vector<2x128xf32> to vector<2x32xf32>
    %207 = vector.extract_strided_slice %203 {offsets = [0, 64], sizes = [2, 32], strides = [1, 1]} : vector<2x128xf32> to vector<2x32xf32>
    %208 = arith.mulf %206, %207 : vector<2x32xf32>
    %209 = arith.addf %205, %208 : vector<2x32xf32>
    %210 = vector.extract_strided_slice %203 {offsets = [0, 96], sizes = [2, 32], strides = [1, 1]} : vector<2x128xf32> to vector<2x32xf32>
    %211 = math.tanh %209 : vector<2x32xf32>
    %212 = arith.mulf %210, %211 : vector<2x32xf32>
    %213 = vector.extract_strided_slice %94 {offsets = [0, 5, 0], sizes = [2, 1, 128], strides = [1, 1, 1]} : vector<2x24x128xf32> to vector<2x1x128xf32>
    %214 = vector.shape_cast %213 : vector<2x1x128xf32> to vector<2x128xf32>
    %cst_52 = arith.constant dense<0.000000e+00> : vector<2x128xf32>
    %215 = tpu.matmul %212, %87, %cst_52 {dimension_numbers = #tpu.dot_dimension_numbers<[1], [0], [0], [1], [0, 0, 1, 1], [], []>} : vector<2x32xf32>, vector<32x128xf32>, vector<2x128xf32> -> vector<2x128xf32>
    %216 = arith.addf %214, %215 : vector<2x128xf32>
    %217 = math.tanh %216 : vector<2x128xf32>
    %218 = arith.negf %216 : vector<2x128xf32>
    %219 = math.exp %218 : vector<2x128xf32>
    %cst_53 = arith.constant 1.000000e+00 : f32
    %220 = vector.broadcast %cst_53 : f32 to vector<2x128xf32>
    %221 = arith.addf %220, %219 : vector<2x128xf32>
    %222 = arith.divf %220, %221 : vector<2x128xf32>
    %223 = vector.shape_cast %100 : vector<1x128xi1> to vector<1x128xi1>
    %224 = vector.broadcast %223 : vector<1x128xi1> to vector<2x128xi1>
    %225 = arith.select %224, %217, %222 : vector<2x128xi1>, vector<2x128xf32>
    %226 = vector.extract_strided_slice %225 {offsets = [0, 32], sizes = [2, 32], strides = [1, 1]} : vector<2x128xf32> to vector<2x32xf32>
    %227 = arith.mulf %226, %209 : vector<2x32xf32>
    %228 = vector.extract_strided_slice %225 {offsets = [0, 0], sizes = [2, 32], strides = [1, 1]} : vector<2x128xf32> to vector<2x32xf32>
    %229 = vector.extract_strided_slice %225 {offsets = [0, 64], sizes = [2, 32], strides = [1, 1]} : vector<2x128xf32> to vector<2x32xf32>
    %230 = arith.mulf %228, %229 : vector<2x32xf32>
    %231 = arith.addf %227, %230 : vector<2x32xf32>
    %232 = vector.extract_strided_slice %225 {offsets = [0, 96], sizes = [2, 32], strides = [1, 1]} : vector<2x128xf32> to vector<2x32xf32>
    %233 = math.tanh %231 : vector<2x32xf32>
    %234 = arith.mulf %232, %233 : vector<2x32xf32>
    %235 = vector.extract_strided_slice %94 {offsets = [0, 6, 0], sizes = [2, 1, 128], strides = [1, 1, 1]} : vector<2x24x128xf32> to vector<2x1x128xf32>
    %236 = vector.shape_cast %235 : vector<2x1x128xf32> to vector<2x128xf32>
    %cst_54 = arith.constant dense<0.000000e+00> : vector<2x128xf32>
    %237 = tpu.matmul %234, %87, %cst_54 {dimension_numbers = #tpu.dot_dimension_numbers<[1], [0], [0], [1], [0, 0, 1, 1], [], []>} : vector<2x32xf32>, vector<32x128xf32>, vector<2x128xf32> -> vector<2x128xf32>
    %238 = arith.addf %236, %237 : vector<2x128xf32>
    %239 = math.tanh %238 : vector<2x128xf32>
    %240 = arith.negf %238 : vector<2x128xf32>
    %241 = math.exp %240 : vector<2x128xf32>
    %cst_55 = arith.constant 1.000000e+00 : f32
    %242 = vector.broadcast %cst_55 : f32 to vector<2x128xf32>
    %243 = arith.addf %242, %241 : vector<2x128xf32>
    %244 = arith.divf %242, %243 : vector<2x128xf32>
    %245 = vector.shape_cast %100 : vector<1x128xi1> to vector<1x128xi1>
    %246 = vector.broadcast %245 : vector<1x128xi1> to vector<2x128xi1>
    %247 = arith.select %246, %239, %244 : vector<2x128xi1>, vector<2x128xf32>
    %248 = vector.extract_strided_slice %247 {offsets = [0, 32], sizes = [2, 32], strides = [1, 1]} : vector<2x128xf32> to vector<2x32xf32>
    %249 = arith.mulf %248, %231 : vector<2x32xf32>
    %250 = vector.extract_strided_slice %247 {offsets = [0, 0], sizes = [2, 32], strides = [1, 1]} : vector<2x128xf32> to vector<2x32xf32>
    %251 = vector.extract_strided_slice %247 {offsets = [0, 64], sizes = [2, 32], strides = [1, 1]} : vector<2x128xf32> to vector<2x32xf32>
    %252 = arith.mulf %250, %251 : vector<2x32xf32>
    %253 = arith.addf %249, %252 : vector<2x32xf32>
    %254 = vector.extract_strided_slice %247 {offsets = [0, 96], sizes = [2, 32], strides = [1, 1]} : vector<2x128xf32> to vector<2x32xf32>
    %255 = math.tanh %253 : vector<2x32xf32>
    %256 = arith.mulf %254, %255 : vector<2x32xf32>
    %257 = vector.extract_strided_slice %94 {offsets = [0, 7, 0], sizes = [2, 1, 128], strides = [1, 1, 1]} : vector<2x24x128xf32> to vector<2x1x128xf32>
    %258 = vector.shape_cast %257 : vector<2x1x128xf32> to vector<2x128xf32>
    %cst_56 = arith.constant dense<0.000000e+00> : vector<2x128xf32>
    %259 = tpu.matmul %256, %87, %cst_56 {dimension_numbers = #tpu.dot_dimension_numbers<[1], [0], [0], [1], [0, 0, 1, 1], [], []>} : vector<2x32xf32>, vector<32x128xf32>, vector<2x128xf32> -> vector<2x128xf32>
    %260 = arith.addf %258, %259 : vector<2x128xf32>
    %261 = math.tanh %260 : vector<2x128xf32>
    %262 = arith.negf %260 : vector<2x128xf32>
    %263 = math.exp %262 : vector<2x128xf32>
    %cst_57 = arith.constant 1.000000e+00 : f32
    %264 = vector.broadcast %cst_57 : f32 to vector<2x128xf32>
    %265 = arith.addf %264, %263 : vector<2x128xf32>
    %266 = arith.divf %264, %265 : vector<2x128xf32>
    %267 = vector.shape_cast %100 : vector<1x128xi1> to vector<1x128xi1>
    %268 = vector.broadcast %267 : vector<1x128xi1> to vector<2x128xi1>
    %269 = arith.select %268, %261, %266 : vector<2x128xi1>, vector<2x128xf32>
    %270 = vector.extract_strided_slice %269 {offsets = [0, 32], sizes = [2, 32], strides = [1, 1]} : vector<2x128xf32> to vector<2x32xf32>
    %271 = arith.mulf %270, %253 : vector<2x32xf32>
    %272 = vector.extract_strided_slice %269 {offsets = [0, 0], sizes = [2, 32], strides = [1, 1]} : vector<2x128xf32> to vector<2x32xf32>
    %273 = vector.extract_strided_slice %269 {offsets = [0, 64], sizes = [2, 32], strides = [1, 1]} : vector<2x128xf32> to vector<2x32xf32>
    %274 = arith.mulf %272, %273 : vector<2x32xf32>
    %275 = arith.addf %271, %274 : vector<2x32xf32>
    %276 = vector.extract_strided_slice %269 {offsets = [0, 96], sizes = [2, 32], strides = [1, 1]} : vector<2x128xf32> to vector<2x32xf32>
    %277 = math.tanh %275 : vector<2x32xf32>
    %278 = arith.mulf %276, %277 : vector<2x32xf32>
    %279 = vector.extract_strided_slice %94 {offsets = [0, 8, 0], sizes = [2, 1, 128], strides = [1, 1, 1]} : vector<2x24x128xf32> to vector<2x1x128xf32>
    %280 = vector.shape_cast %279 : vector<2x1x128xf32> to vector<2x128xf32>
    %cst_58 = arith.constant dense<0.000000e+00> : vector<2x128xf32>
    %281 = tpu.matmul %278, %87, %cst_58 {dimension_numbers = #tpu.dot_dimension_numbers<[1], [0], [0], [1], [0, 0, 1, 1], [], []>} : vector<2x32xf32>, vector<32x128xf32>, vector<2x128xf32> -> vector<2x128xf32>
    %282 = arith.addf %280, %281 : vector<2x128xf32>
    %283 = math.tanh %282 : vector<2x128xf32>
    %284 = arith.negf %282 : vector<2x128xf32>
    %285 = math.exp %284 : vector<2x128xf32>
    %cst_59 = arith.constant 1.000000e+00 : f32
    %286 = vector.broadcast %cst_59 : f32 to vector<2x128xf32>
    %287 = arith.addf %286, %285 : vector<2x128xf32>
    %288 = arith.divf %286, %287 : vector<2x128xf32>
    %289 = vector.shape_cast %100 : vector<1x128xi1> to vector<1x128xi1>
    %290 = vector.broadcast %289 : vector<1x128xi1> to vector<2x128xi1>
    %291 = arith.select %290, %283, %288 : vector<2x128xi1>, vector<2x128xf32>
    %292 = vector.extract_strided_slice %291 {offsets = [0, 32], sizes = [2, 32], strides = [1, 1]} : vector<2x128xf32> to vector<2x32xf32>
    %293 = arith.mulf %292, %275 : vector<2x32xf32>
    %294 = vector.extract_strided_slice %291 {offsets = [0, 0], sizes = [2, 32], strides = [1, 1]} : vector<2x128xf32> to vector<2x32xf32>
    %295 = vector.extract_strided_slice %291 {offsets = [0, 64], sizes = [2, 32], strides = [1, 1]} : vector<2x128xf32> to vector<2x32xf32>
    %296 = arith.mulf %294, %295 : vector<2x32xf32>
    %297 = arith.addf %293, %296 : vector<2x32xf32>
    %298 = vector.extract_strided_slice %291 {offsets = [0, 96], sizes = [2, 32], strides = [1, 1]} : vector<2x128xf32> to vector<2x32xf32>
    %299 = math.tanh %297 : vector<2x32xf32>
    %300 = arith.mulf %298, %299 : vector<2x32xf32>
    %301 = vector.extract_strided_slice %94 {offsets = [0, 9, 0], sizes = [2, 1, 128], strides = [1, 1, 1]} : vector<2x24x128xf32> to vector<2x1x128xf32>
    %302 = vector.shape_cast %301 : vector<2x1x128xf32> to vector<2x128xf32>
    %cst_60 = arith.constant dense<0.000000e+00> : vector<2x128xf32>
    %303 = tpu.matmul %300, %87, %cst_60 {dimension_numbers = #tpu.dot_dimension_numbers<[1], [0], [0], [1], [0, 0, 1, 1], [], []>} : vector<2x32xf32>, vector<32x128xf32>, vector<2x128xf32> -> vector<2x128xf32>
    %304 = arith.addf %302, %303 : vector<2x128xf32>
    %305 = math.tanh %304 : vector<2x128xf32>
    %306 = arith.negf %304 : vector<2x128xf32>
    %307 = math.exp %306 : vector<2x128xf32>
    %cst_61 = arith.constant 1.000000e+00 : f32
    %308 = vector.broadcast %cst_61 : f32 to vector<2x128xf32>
    %309 = arith.addf %308, %307 : vector<2x128xf32>
    %310 = arith.divf %308, %309 : vector<2x128xf32>
    %311 = vector.shape_cast %100 : vector<1x128xi1> to vector<1x128xi1>
    %312 = vector.broadcast %311 : vector<1x128xi1> to vector<2x128xi1>
    %313 = arith.select %312, %305, %310 : vector<2x128xi1>, vector<2x128xf32>
    %314 = vector.extract_strided_slice %313 {offsets = [0, 32], sizes = [2, 32], strides = [1, 1]} : vector<2x128xf32> to vector<2x32xf32>
    %315 = arith.mulf %314, %297 : vector<2x32xf32>
    %316 = vector.extract_strided_slice %313 {offsets = [0, 0], sizes = [2, 32], strides = [1, 1]} : vector<2x128xf32> to vector<2x32xf32>
    %317 = vector.extract_strided_slice %313 {offsets = [0, 64], sizes = [2, 32], strides = [1, 1]} : vector<2x128xf32> to vector<2x32xf32>
    %318 = arith.mulf %316, %317 : vector<2x32xf32>
    %319 = arith.addf %315, %318 : vector<2x32xf32>
    %320 = vector.extract_strided_slice %313 {offsets = [0, 96], sizes = [2, 32], strides = [1, 1]} : vector<2x128xf32> to vector<2x32xf32>
    %321 = math.tanh %319 : vector<2x32xf32>
    %322 = arith.mulf %320, %321 : vector<2x32xf32>
    %323 = vector.extract_strided_slice %94 {offsets = [0, 10, 0], sizes = [2, 1, 128], strides = [1, 1, 1]} : vector<2x24x128xf32> to vector<2x1x128xf32>
    %324 = vector.shape_cast %323 : vector<2x1x128xf32> to vector<2x128xf32>
    %cst_62 = arith.constant dense<0.000000e+00> : vector<2x128xf32>
    %325 = tpu.matmul %322, %87, %cst_62 {dimension_numbers = #tpu.dot_dimension_numbers<[1], [0], [0], [1], [0, 0, 1, 1], [], []>} : vector<2x32xf32>, vector<32x128xf32>, vector<2x128xf32> -> vector<2x128xf32>
    %326 = arith.addf %324, %325 : vector<2x128xf32>
    %327 = math.tanh %326 : vector<2x128xf32>
    %328 = arith.negf %326 : vector<2x128xf32>
    %329 = math.exp %328 : vector<2x128xf32>
    %cst_63 = arith.constant 1.000000e+00 : f32
    %330 = vector.broadcast %cst_63 : f32 to vector<2x128xf32>
    %331 = arith.addf %330, %329 : vector<2x128xf32>
    %332 = arith.divf %330, %331 : vector<2x128xf32>
    %333 = vector.shape_cast %100 : vector<1x128xi1> to vector<1x128xi1>
    %334 = vector.broadcast %333 : vector<1x128xi1> to vector<2x128xi1>
    %335 = arith.select %334, %327, %332 : vector<2x128xi1>, vector<2x128xf32>
    %336 = vector.extract_strided_slice %335 {offsets = [0, 32], sizes = [2, 32], strides = [1, 1]} : vector<2x128xf32> to vector<2x32xf32>
    %337 = arith.mulf %336, %319 : vector<2x32xf32>
    %338 = vector.extract_strided_slice %335 {offsets = [0, 0], sizes = [2, 32], strides = [1, 1]} : vector<2x128xf32> to vector<2x32xf32>
    %339 = vector.extract_strided_slice %335 {offsets = [0, 64], sizes = [2, 32], strides = [1, 1]} : vector<2x128xf32> to vector<2x32xf32>
    %340 = arith.mulf %338, %339 : vector<2x32xf32>
    %341 = arith.addf %337, %340 : vector<2x32xf32>
    %342 = vector.extract_strided_slice %335 {offsets = [0, 96], sizes = [2, 32], strides = [1, 1]} : vector<2x128xf32> to vector<2x32xf32>
    %343 = math.tanh %341 : vector<2x32xf32>
    %344 = arith.mulf %342, %343 : vector<2x32xf32>
    %345 = vector.extract_strided_slice %94 {offsets = [0, 11, 0], sizes = [2, 1, 128], strides = [1, 1, 1]} : vector<2x24x128xf32> to vector<2x1x128xf32>
    %346 = vector.shape_cast %345 : vector<2x1x128xf32> to vector<2x128xf32>
    %cst_64 = arith.constant dense<0.000000e+00> : vector<2x128xf32>
    %347 = tpu.matmul %344, %87, %cst_64 {dimension_numbers = #tpu.dot_dimension_numbers<[1], [0], [0], [1], [0, 0, 1, 1], [], []>} : vector<2x32xf32>, vector<32x128xf32>, vector<2x128xf32> -> vector<2x128xf32>
    %348 = arith.addf %346, %347 : vector<2x128xf32>
    %349 = math.tanh %348 : vector<2x128xf32>
    %350 = arith.negf %348 : vector<2x128xf32>
    %351 = math.exp %350 : vector<2x128xf32>
    %cst_65 = arith.constant 1.000000e+00 : f32
    %352 = vector.broadcast %cst_65 : f32 to vector<2x128xf32>
    %353 = arith.addf %352, %351 : vector<2x128xf32>
    %354 = arith.divf %352, %353 : vector<2x128xf32>
    %355 = vector.shape_cast %100 : vector<1x128xi1> to vector<1x128xi1>
    %356 = vector.broadcast %355 : vector<1x128xi1> to vector<2x128xi1>
    %357 = arith.select %356, %349, %354 : vector<2x128xi1>, vector<2x128xf32>
    %358 = vector.extract_strided_slice %357 {offsets = [0, 32], sizes = [2, 32], strides = [1, 1]} : vector<2x128xf32> to vector<2x32xf32>
    %359 = arith.mulf %358, %341 : vector<2x32xf32>
    %360 = vector.extract_strided_slice %357 {offsets = [0, 0], sizes = [2, 32], strides = [1, 1]} : vector<2x128xf32> to vector<2x32xf32>
    %361 = vector.extract_strided_slice %357 {offsets = [0, 64], sizes = [2, 32], strides = [1, 1]} : vector<2x128xf32> to vector<2x32xf32>
    %362 = arith.mulf %360, %361 : vector<2x32xf32>
    %363 = arith.addf %359, %362 : vector<2x32xf32>
    %364 = vector.extract_strided_slice %357 {offsets = [0, 96], sizes = [2, 32], strides = [1, 1]} : vector<2x128xf32> to vector<2x32xf32>
    %365 = math.tanh %363 : vector<2x32xf32>
    %366 = arith.mulf %364, %365 : vector<2x32xf32>
    %367 = vector.extract_strided_slice %94 {offsets = [0, 12, 0], sizes = [2, 1, 128], strides = [1, 1, 1]} : vector<2x24x128xf32> to vector<2x1x128xf32>
    %368 = vector.shape_cast %367 : vector<2x1x128xf32> to vector<2x128xf32>
    %cst_66 = arith.constant dense<0.000000e+00> : vector<2x128xf32>
    %369 = tpu.matmul %366, %87, %cst_66 {dimension_numbers = #tpu.dot_dimension_numbers<[1], [0], [0], [1], [0, 0, 1, 1], [], []>} : vector<2x32xf32>, vector<32x128xf32>, vector<2x128xf32> -> vector<2x128xf32>
    %370 = arith.addf %368, %369 : vector<2x128xf32>
    %371 = math.tanh %370 : vector<2x128xf32>
    %372 = arith.negf %370 : vector<2x128xf32>
    %373 = math.exp %372 : vector<2x128xf32>
    %cst_67 = arith.constant 1.000000e+00 : f32
    %374 = vector.broadcast %cst_67 : f32 to vector<2x128xf32>
    %375 = arith.addf %374, %373 : vector<2x128xf32>
    %376 = arith.divf %374, %375 : vector<2x128xf32>
    %377 = vector.shape_cast %100 : vector<1x128xi1> to vector<1x128xi1>
    %378 = vector.broadcast %377 : vector<1x128xi1> to vector<2x128xi1>
    %379 = arith.select %378, %371, %376 : vector<2x128xi1>, vector<2x128xf32>
    %380 = vector.extract_strided_slice %379 {offsets = [0, 32], sizes = [2, 32], strides = [1, 1]} : vector<2x128xf32> to vector<2x32xf32>
    %381 = arith.mulf %380, %363 : vector<2x32xf32>
    %382 = vector.extract_strided_slice %379 {offsets = [0, 0], sizes = [2, 32], strides = [1, 1]} : vector<2x128xf32> to vector<2x32xf32>
    %383 = vector.extract_strided_slice %379 {offsets = [0, 64], sizes = [2, 32], strides = [1, 1]} : vector<2x128xf32> to vector<2x32xf32>
    %384 = arith.mulf %382, %383 : vector<2x32xf32>
    %385 = arith.addf %381, %384 : vector<2x32xf32>
    %386 = vector.extract_strided_slice %379 {offsets = [0, 96], sizes = [2, 32], strides = [1, 1]} : vector<2x128xf32> to vector<2x32xf32>
    %387 = math.tanh %385 : vector<2x32xf32>
    %388 = arith.mulf %386, %387 : vector<2x32xf32>
    %389 = vector.extract_strided_slice %94 {offsets = [0, 13, 0], sizes = [2, 1, 128], strides = [1, 1, 1]} : vector<2x24x128xf32> to vector<2x1x128xf32>
    %390 = vector.shape_cast %389 : vector<2x1x128xf32> to vector<2x128xf32>
    %cst_68 = arith.constant dense<0.000000e+00> : vector<2x128xf32>
    %391 = tpu.matmul %388, %87, %cst_68 {dimension_numbers = #tpu.dot_dimension_numbers<[1], [0], [0], [1], [0, 0, 1, 1], [], []>} : vector<2x32xf32>, vector<32x128xf32>, vector<2x128xf32> -> vector<2x128xf32>
    %392 = arith.addf %390, %391 : vector<2x128xf32>
    %393 = math.tanh %392 : vector<2x128xf32>
    %394 = arith.negf %392 : vector<2x128xf32>
    %395 = math.exp %394 : vector<2x128xf32>
    %cst_69 = arith.constant 1.000000e+00 : f32
    %396 = vector.broadcast %cst_69 : f32 to vector<2x128xf32>
    %397 = arith.addf %396, %395 : vector<2x128xf32>
    %398 = arith.divf %396, %397 : vector<2x128xf32>
    %399 = vector.shape_cast %100 : vector<1x128xi1> to vector<1x128xi1>
    %400 = vector.broadcast %399 : vector<1x128xi1> to vector<2x128xi1>
    %401 = arith.select %400, %393, %398 : vector<2x128xi1>, vector<2x128xf32>
    %402 = vector.extract_strided_slice %401 {offsets = [0, 32], sizes = [2, 32], strides = [1, 1]} : vector<2x128xf32> to vector<2x32xf32>
    %403 = arith.mulf %402, %385 : vector<2x32xf32>
    %404 = vector.extract_strided_slice %401 {offsets = [0, 0], sizes = [2, 32], strides = [1, 1]} : vector<2x128xf32> to vector<2x32xf32>
    %405 = vector.extract_strided_slice %401 {offsets = [0, 64], sizes = [2, 32], strides = [1, 1]} : vector<2x128xf32> to vector<2x32xf32>
    %406 = arith.mulf %404, %405 : vector<2x32xf32>
    %407 = arith.addf %403, %406 : vector<2x32xf32>
    %408 = vector.extract_strided_slice %401 {offsets = [0, 96], sizes = [2, 32], strides = [1, 1]} : vector<2x128xf32> to vector<2x32xf32>
    %409 = math.tanh %407 : vector<2x32xf32>
    %410 = arith.mulf %408, %409 : vector<2x32xf32>
    %411 = vector.extract_strided_slice %94 {offsets = [0, 14, 0], sizes = [2, 1, 128], strides = [1, 1, 1]} : vector<2x24x128xf32> to vector<2x1x128xf32>
    %412 = vector.shape_cast %411 : vector<2x1x128xf32> to vector<2x128xf32>
    %cst_70 = arith.constant dense<0.000000e+00> : vector<2x128xf32>
    %413 = tpu.matmul %410, %87, %cst_70 {dimension_numbers = #tpu.dot_dimension_numbers<[1], [0], [0], [1], [0, 0, 1, 1], [], []>} : vector<2x32xf32>, vector<32x128xf32>, vector<2x128xf32> -> vector<2x128xf32>
    %414 = arith.addf %412, %413 : vector<2x128xf32>
    %415 = math.tanh %414 : vector<2x128xf32>
    %416 = arith.negf %414 : vector<2x128xf32>
    %417 = math.exp %416 : vector<2x128xf32>
    %cst_71 = arith.constant 1.000000e+00 : f32
    %418 = vector.broadcast %cst_71 : f32 to vector<2x128xf32>
    %419 = arith.addf %418, %417 : vector<2x128xf32>
    %420 = arith.divf %418, %419 : vector<2x128xf32>
    %421 = vector.shape_cast %100 : vector<1x128xi1> to vector<1x128xi1>
    %422 = vector.broadcast %421 : vector<1x128xi1> to vector<2x128xi1>
    %423 = arith.select %422, %415, %420 : vector<2x128xi1>, vector<2x128xf32>
    %424 = vector.extract_strided_slice %423 {offsets = [0, 32], sizes = [2, 32], strides = [1, 1]} : vector<2x128xf32> to vector<2x32xf32>
    %425 = arith.mulf %424, %407 : vector<2x32xf32>
    %426 = vector.extract_strided_slice %423 {offsets = [0, 0], sizes = [2, 32], strides = [1, 1]} : vector<2x128xf32> to vector<2x32xf32>
    %427 = vector.extract_strided_slice %423 {offsets = [0, 64], sizes = [2, 32], strides = [1, 1]} : vector<2x128xf32> to vector<2x32xf32>
    %428 = arith.mulf %426, %427 : vector<2x32xf32>
    %429 = arith.addf %425, %428 : vector<2x32xf32>
    %430 = vector.extract_strided_slice %423 {offsets = [0, 96], sizes = [2, 32], strides = [1, 1]} : vector<2x128xf32> to vector<2x32xf32>
    %431 = math.tanh %429 : vector<2x32xf32>
    %432 = arith.mulf %430, %431 : vector<2x32xf32>
    %433 = vector.extract_strided_slice %94 {offsets = [0, 15, 0], sizes = [2, 1, 128], strides = [1, 1, 1]} : vector<2x24x128xf32> to vector<2x1x128xf32>
    %434 = vector.shape_cast %433 : vector<2x1x128xf32> to vector<2x128xf32>
    %cst_72 = arith.constant dense<0.000000e+00> : vector<2x128xf32>
    %435 = tpu.matmul %432, %87, %cst_72 {dimension_numbers = #tpu.dot_dimension_numbers<[1], [0], [0], [1], [0, 0, 1, 1], [], []>} : vector<2x32xf32>, vector<32x128xf32>, vector<2x128xf32> -> vector<2x128xf32>
    %436 = arith.addf %434, %435 : vector<2x128xf32>
    %437 = math.tanh %436 : vector<2x128xf32>
    %438 = arith.negf %436 : vector<2x128xf32>
    %439 = math.exp %438 : vector<2x128xf32>
    %cst_73 = arith.constant 1.000000e+00 : f32
    %440 = vector.broadcast %cst_73 : f32 to vector<2x128xf32>
    %441 = arith.addf %440, %439 : vector<2x128xf32>
    %442 = arith.divf %440, %441 : vector<2x128xf32>
    %443 = vector.shape_cast %100 : vector<1x128xi1> to vector<1x128xi1>
    %444 = vector.broadcast %443 : vector<1x128xi1> to vector<2x128xi1>
    %445 = arith.select %444, %437, %442 : vector<2x128xi1>, vector<2x128xf32>
    %446 = vector.extract_strided_slice %445 {offsets = [0, 32], sizes = [2, 32], strides = [1, 1]} : vector<2x128xf32> to vector<2x32xf32>
    %447 = arith.mulf %446, %429 : vector<2x32xf32>
    %448 = vector.extract_strided_slice %445 {offsets = [0, 0], sizes = [2, 32], strides = [1, 1]} : vector<2x128xf32> to vector<2x32xf32>
    %449 = vector.extract_strided_slice %445 {offsets = [0, 64], sizes = [2, 32], strides = [1, 1]} : vector<2x128xf32> to vector<2x32xf32>
    %450 = arith.mulf %448, %449 : vector<2x32xf32>
    %451 = arith.addf %447, %450 : vector<2x32xf32>
    %452 = vector.extract_strided_slice %445 {offsets = [0, 96], sizes = [2, 32], strides = [1, 1]} : vector<2x128xf32> to vector<2x32xf32>
    %453 = math.tanh %451 : vector<2x32xf32>
    %454 = arith.mulf %452, %453 : vector<2x32xf32>
    %455 = vector.extract_strided_slice %8 {offsets = [0, 0], sizes = [48, 32], strides = [1, 1]} : vector<56x32xf32> to vector<48x32xf32>
    %456 = vector.shape_cast %455 : vector<48x32xf32> to vector<2x24x32xf32>
    %457 = vector.extract_strided_slice %456 {offsets = [0, 15, 0], sizes = [2, 1, 32], strides = [1, 1, 1]} : vector<2x24x32xf32> to vector<2x1x32xf32>
    %458 = vector.shape_cast %457 : vector<2x1x32xf32> to vector<2x32xf32>
    %c0_74 = arith.constant 0 : index
    %c0_75 = arith.constant 0 : index
    %459 = vector.load %arg7[%c0_74, %c0_75] : memref<32x128xf32, #tpu.memory_space<vmem>>, vector<32x128xf32>
    %cst_76 = arith.constant dense<0.000000e+00> : vector<2x128xf32>
    %460 = tpu.matmul %458, %459, %cst_76 {dimension_numbers = #tpu.dot_dimension_numbers<[1], [0], [0], [1], [0, 0, 1, 1], [], []>} : vector<2x32xf32>, vector<32x128xf32>, vector<2x128xf32> -> vector<2x128xf32>
    %c0_77 = arith.constant 0 : index
    %c0_78 = arith.constant 0 : index
    %461 = vector.load %arg8[%c0_77, %c0_78] : memref<1x128xf32, #tpu.memory_space<vmem>>, vector<1x128xf32>
    %462 = vector.broadcast %461 : vector<1x128xf32> to vector<2x128xf32>
    %463 = arith.addf %460, %462 : vector<2x128xf32>
    %464 = math.tanh %463 : vector<2x128xf32>
    %465 = arith.negf %463 : vector<2x128xf32>
    %466 = math.exp %465 : vector<2x128xf32>
    %cst_79 = arith.constant 1.000000e+00 : f32
    %467 = vector.broadcast %cst_79 : f32 to vector<2x128xf32>
    %468 = arith.addf %467, %466 : vector<2x128xf32>
    %469 = arith.divf %467, %468 : vector<2x128xf32>
    %470 = vector.shape_cast %100 : vector<1x128xi1> to vector<1x128xi1>
    %471 = vector.broadcast %470 : vector<1x128xi1> to vector<2x128xi1>
    %472 = arith.select %471, %464, %469 : vector<2x128xi1>, vector<2x128xf32>
    %473 = vector.extract_strided_slice %472 {offsets = [0, 0], sizes = [2, 32], strides = [1, 1]} : vector<2x128xf32> to vector<2x32xf32>
    %474 = vector.extract_strided_slice %472 {offsets = [0, 64], sizes = [2, 32], strides = [1, 1]} : vector<2x128xf32> to vector<2x32xf32>
    %475 = arith.mulf %473, %474 : vector<2x32xf32>
    %476 = vector.extract_strided_slice %472 {offsets = [0, 96], sizes = [2, 32], strides = [1, 1]} : vector<2x128xf32> to vector<2x32xf32>
    %477 = math.tanh %475 : vector<2x32xf32>
    %478 = arith.mulf %476, %477 : vector<2x32xf32>
    %479 = tpu.concatenate %86, %454, %478 in 1 : vector<2x128xf32>, vector<2x32xf32>, vector<2x32xf32> -> vector<2x192xf32>
    %cst_80 = arith.constant 0.000000e+00 : f32
    %480 = vector.broadcast %cst_80 : f32 to vector<2x192xf32>
    %481 = arith.maximumf %479, %480 : vector<2x192xf32>
    %c0_81 = arith.constant 0 : index
    %c0_82 = arith.constant 0 : index
    %482 = vector.load %arg9[%c0_81, %c0_82] : memref<192x128xf32, #tpu.memory_space<vmem>>, vector<192x128xf32>
    %cst_83 = arith.constant dense<0.000000e+00> : vector<2x128xf32>
    %483 = tpu.matmul %481, %482, %cst_83 {dimension_numbers = #tpu.dot_dimension_numbers<[1], [0], [0], [1], [0, 0, 1, 1], [], []>} : vector<2x192xf32>, vector<192x128xf32>, vector<2x128xf32> -> vector<2x128xf32>
    %c0_84 = arith.constant 0 : index
    %c0_85 = arith.constant 0 : index
    %484 = vector.load %arg10[%c0_84, %c0_85] : memref<1x128xf32, #tpu.memory_space<vmem>>, vector<1x128xf32>
    %485 = vector.broadcast %484 : vector<1x128xf32> to vector<2x128xf32>
    %486 = arith.addf %483, %485 : vector<2x128xf32>
    %c0_86 = arith.constant 0 : index
    %c0_87 = arith.constant 0 : index
    %487 = vector.load %arg11[%c0_86, %c0_87] : memref<2x128xf32, #tpu.memory_space<vmem>>, vector<2x128xf32>
    tpu.vector_store %arg11[%c0_86, %c0_87], %486 {strides = array<i32>} : memref<2x128xf32, #tpu.memory_space<vmem>>, vector<2x128xf32>,
    return
  }
}

</mosaic_0001>

<llo_original>
// kernel: tpu_custom_call.1
$region0: #{tpu_custom_call.1}
  #allocation0 [shape = 'u32[]', space=smem, size = 0x4, offset = 0x4, fixed_abs, tag = 'smem constant byte address 0x4 - core index']
  #allocation1 [shape = 'u32[144,128]{1,0:T(1,128)}', space=vmem, size = 0x12000, scoped, tag = 'internal scratch']
  %s0 = inlined_call_operand.vmem [shape: s32[56,1], index: 0, kind: input, shape index: {}]
  %s1 = inlined_call_operand.vmem [shape: f32[100,32], index: 1, kind: input, shape index: {}]
  %s2 = inlined_call_operand.vmem [shape: f32[6,32,128], index: 2, kind: input, shape index: {}]
  %s3 = inlined_call_operand.vmem [shape: f32[1,128], index: 3, kind: input, shape index: {}]
  %s4 = inlined_call_operand.hbm [shape: f32[32,128], index: 4, kind: input, shape index: {}]
  %s5 = inlined_call_operand.hbm [shape: f32[32,128], index: 5, kind: input, shape index: {}]
  %s6 = inlined_call_operand.vmem [shape: f32[1,128], index: 6, kind: input, shape index: {}]
  %s7 = inlined_call_operand.hbm [shape: f32[32,128], index: 7, kind: input, shape index: {}]
  %s8 = inlined_call_operand.vmem [shape: f32[1,128], index: 8, kind: input, shape index: {}]
  %s9 = inlined_call_operand.hbm [shape: f32[192,128], index: 9, kind: input, shape index: {}]
  %s10 = inlined_call_operand.vmem [shape: f32[1,128], index: 10, kind: input, shape index: {}]
  %s11 = inlined_call_operand.hbm [shape: f32[2,128], index: 11, kind: output, shape index: {}]
  %s12 = sld [smem:[#allocation0]]
  $region70: #{tpu_custom_call.1} parent=0
    _
  %s14 = ssub.s32 1, %s12
  %s15 = scalar_select 0, %s14, %s12
  $region1: #{tpu_custom_call.1} parent=0
    #allocation2 [shape = 'u8[16384]{0}', space=vmem, size = 0x4000, scoped, tag = 'input window, operand 4, single buffered']
    #allocation3 [shape = 's32[1]{0}', space=sflag, size = 0x4, scoped, tag = 'scoped memory for tpu_custom_call.1']
    #allocation4 [shape = 's32[1]{0}', space=sflag, size = 0x4, scoped, tag = 'scoped memory for tpu_custom_call.1']
    #allocation5 [shape = 'u8[16384]{0}', space=vmem, size = 0x4000, scoped, tag = 'input window, operand 5, single buffered']
    #allocation6 [shape = 's32[1]{0}', space=sflag, size = 0x4, scoped, tag = 'scoped memory for tpu_custom_call.1']
    #allocation7 [shape = 'u8[16384]{0}', space=vmem, size = 0x4000, scoped, tag = 'input window, operand 7, single buffered']
    #allocation8 [shape = 'u8[98304]{0}', space=vmem, size = 0x18000, scoped, tag = 'input window, operand 9, single buffered']
    #allocation9 [shape = 's32[1]{0}', space=sflag, size = 0x4, scoped, tag = 'scoped memory for tpu_custom_call.1']
    #allocation10 [shape = 'u8[1024]{0}', space=vmem, size = 0x400, scoped, tag = 'output window, operand 0, single buffered']
    %16 = vsyncpa [#allocation3], 0
    %17 = vsyncpa [#allocation6], 0
    %18 = vsyncpa [#allocation9], 0
    %19 = vsyncpa [#allocation4], 0
    // Predicated region
    $region2: #{tpu_custom_call.1} parent=1 // pred_check
      _
    $region3: #{tpu_custom_call.1} parent=1 // pred_check_branch
      %21 = sbr.rel (0) target = $region5
    $region4: #{tpu_custom_call.1} parent=1 // pred_region
      _
    $region5: #{tpu_custom_call.1} parent=1 // pred_fallthru
      _
    // Predicated region
    $region6: #{tpu_custom_call.1} parent=1 // pred_check
      _
    $region7: #{tpu_custom_call.1} parent=1 // pred_check_branch
      %23 = sbr.rel (0) target = $region9
    $region8: #{tpu_custom_call.1} parent=1 // pred_region
      _
    $region9: #{tpu_custom_call.1} parent=1 // pred_fallthru
      _
    // Predicated region
    $region10: #{tpu_custom_call.1} parent=1 // pred_check
      _
    $region11: #{tpu_custom_call.1} parent=1 // pred_check_branch
      %25 = sbr.rel (0) target = $region13
    $region12: #{tpu_custom_call.1} parent=1 // pred_region
      _
    $region13: #{tpu_custom_call.1} parent=1 // pred_fallthru
      _
    // Predicated region
    $region14: #{tpu_custom_call.1} parent=1 // pred_check
      _
    $region15: #{tpu_custom_call.1} parent=1 // pred_check_branch
      %27 = sbr.rel (0) target = $region17
    $region16: #{tpu_custom_call.1} parent=1 // pred_region
      _
    $region17: #{tpu_custom_call.1} parent=1 // pred_fallthru
      _
    // Predicated region
    $region18: #{tpu_custom_call.1} parent=1 // pred_check
      _
    $region19: #{tpu_custom_call.1} parent=1 // pred_check_branch
      %29 = sbr.rel (0) target = $region21
    $region20: #{tpu_custom_call.1} parent=1 // pred_region
      %s31 = ssub.s32 512, 512
      %32 = vsyncadd [#allocation3], %s31
      %s33 = sshll.u32 [#allocation2], 4
      %s34 = int_to_ptr.vmem [resolvable:$true] %s33
      %39 = dma.hbm_to_vmem [thread:$0]  %s4, 512, %s34, [#allocation3], 128, 128, 8
    $region21: #{tpu_custom_call.1} parent=1 // pred_fallthru
      _
    // Predicated region
    $region22: #{tpu_custom_call.1} parent=1 // pred_check
      _
    $region23: #{tpu_custom_call.1} parent=1 // pred_check_branch
      %41 = sbr.rel (0) target = $region25
    $region24: #{tpu_custom_call.1} parent=1 // pred_region
      %s43 = ssub.s32 512, 512
      %44 = vsyncadd [#allocation6], %s43
      %s45 = sshll.u32 [#allocation5], 4
      %s46 = int_to_ptr.vmem [resolvable:$true] %s45
      %51 = dma.hbm_to_vmem [thread:$0]  %s5, 512, %s46, [#allocation6], 128, 128, 8
    $region25: #{tpu_custom_call.1} parent=1 // pred_fallthru
      _
    // Predicated region
    $region26: #{tpu_custom_call.1} parent=1 // pred_check
      _
    $region27: #{tpu_custom_call.1} parent=1 // pred_check_branch
      %53 = sbr.rel (0) target = $region29
    $region28: #{tpu_custom_call.1} parent=1 // pred_region
      _
    $region29: #{tpu_custom_call.1} parent=1 // pred_fallthru
      _
    // Predicated region
    $region30: #{tpu_custom_call.1} parent=1 // pred_check
      _
    $region31: #{tpu_custom_call.1} parent=1 // pred_check_branch
      %55 = sbr.rel (0) target = $region33
    $region32: #{tpu_custom_call.1} parent=1 // pred_region
      %s57 = ssub.s32 512, 512
      %58 = vsyncadd [#allocation6], %s57
      %s59 = sshll.u32 [#allocation7], 4
      %s60 = int_to_ptr.vmem [resolvable:$true] %s59
      %65 = dma.hbm_to_vmem [thread:$0]  %s7, 512, %s60, [#allocation6], 128, 128, 8
    $region33: #{tpu_custom_call.1} parent=1 // pred_fallthru
      _
    // Predicated region
    $region34: #{tpu_custom_call.1} parent=1 // pred_check
      _
    $region35: #{tpu_custom_call.1} parent=1 // pred_check_branch
      %67 = sbr.rel (0) target = $region37
    $region36: #{tpu_custom_call.1} parent=1 // pred_region
      _
    $region37: #{tpu_custom_call.1} parent=1 // pred_fallthru
      _
    // Predicated region
    $region38: #{tpu_custom_call.1} parent=1 // pred_check
      _
    $region39: #{tpu_custom_call.1} parent=1 // pred_check_branch
      %69 = sbr.rel (0) target = $region41
    $region40: #{tpu_custom_call.1} parent=1 // pred_region
      %s71 = ssub.s32 3072, 3072
      %72 = vsyncadd [#allocation9], %s71
      %s73 = sshll.u32 [#allocation8], 4
      %s74 = int_to_ptr.vmem [resolvable:$true] %s73
      %79 = dma.hbm_to_vmem [thread:$0]  %s9, 3072, %s74, [#allocation9], 128, 128, 8
    $region41: #{tpu_custom_call.1} parent=1 // pred_fallthru
      _
    // Predicated region
    $region42: #{tpu_custom_call.1} parent=1 // pred_check
      _
    $region43: #{tpu_custom_call.1} parent=1 // pred_check_branch
      %81 = sbr.rel (0) target = $region45
    $region44: #{tpu_custom_call.1} parent=1 // pred_region
      _
    $region45: #{tpu_custom_call.1} parent=1 // pred_fallthru
      _
    // Predicated region
    $region46: #{tpu_custom_call.1} parent=1 // pred_check
      _
    $region47: #{tpu_custom_call.1} parent=1 // pred_check_branch
      %83 = sbr.rel (0) target = $region49
    $region48: #{tpu_custom_call.1} parent=1 // pred_region
      %84 = dma.done [#allocation3], 512
    $region49: #{tpu_custom_call.1} parent=1 // pred_fallthru
      _
    // Predicated region
    $region50: #{tpu_custom_call.1} parent=1 // pred_check
      _
    $region51: #{tpu_custom_call.1} parent=1 // pred_check_branch
      %86 = sbr.rel (0) target = $region53
    $region52: #{tpu_custom_call.1} parent=1 // pred_region
      %87 = dma.done [#allocation6], 512
    $region53: #{tpu_custom_call.1} parent=1 // pred_fallthru
      _
    // Predicated region
    $region54: #{tpu_custom_call.1} parent=1 // pred_check
      _
    $region55: #{tpu_custom_call.1} parent=1 // pred_check_branch
      %89 = sbr.rel (0) target = $region57
    $region56: #{tpu_custom_call.1} parent=1 // pred_region
      %90 = dma.done [#allocation6], 512
    $region57: #{tpu_custom_call.1} parent=1 // pred_fallthru
      _
    // Predicated region
    $region58: #{tpu_custom_call.1} parent=1 // pred_check
      _
    $region59: #{tpu_custom_call.1} parent=1 // pred_check_branch
      %92 = sbr.rel (0) target = $region61
    $region60: #{tpu_custom_call.1} parent=1 // pred_region
      %93 = dma.done [#allocation9], 3072
    $region61: #{tpu_custom_call.1} parent=1 // pred_fallthru
      _
    %v94 = vld [vmem:[%s0] sm:$0xff]
    %v95 = vld [vmem:[%s0 + $0x8] sm:$0xff]
    %v96 = vld [vmem:[%s0 + $0x10] sm:$0xff]
    %v97 = vld [vmem:[%s0 + $0x18] sm:$0xff]
    %v98 = vld [vmem:[%s0 + $0x20] sm:$0xff]
    %v99 = vld [vmem:[%s0 + $0x28] sm:$0xff]
    %v100 = vld [vmem:[%s0 + $0x30] sm:$0xff]
    %v101 = vlaneseq
    %v102 = vand.u32 %v101, 127
    %103 = vset.pattern.permute.xlu0 0
    %104 = vperm.xlu0 %103, %v94
    %v105 = vpop.permute.xlu0 %104
    %106 = vset.pattern.permute.xlu0 0
    %107 = vperm.xlu0 %106, %v95
    %v108 = vpop.permute.xlu0 %107
    %109 = vset.pattern.permute.xlu0 0
    %110 = vperm.xlu0 %109, %v96
    %v111 = vpop.permute.xlu0 %110
    %112 = vset.pattern.permute.xlu0 0
    %113 = vperm.xlu0 %112, %v97
    %v114 = vpop.permute.xlu0 %113
    %115 = vset.pattern.permute.xlu0 0
    %116 = vperm.xlu0 %115, %v98
    %v117 = vpop.permute.xlu0 %116
    %118 = vset.pattern.permute.xlu0 0
    %119 = vperm.xlu0 %118, %v99
    %v120 = vpop.permute.xlu0 %119
    %121 = vset.pattern.permute.xlu0 0
    %122 = vperm.xlu0 %121, %v100
    %v123 = vpop.permute.xlu0 %122
    %vm124 = vcmp.eq.s32.totalorder %v105, %v102
    %vm125 = vcmp.eq.s32.totalorder %v108, %v102
    %vm126 = vcmp.eq.s32.totalorder %v111, %v102
    %vm127 = vcmp.eq.s32.totalorder %v114, %v102
    %vm128 = vcmp.eq.s32.totalorder %v117, %v102
    %vm129 = vcmp.eq.s32.totalorder %v120, %v102
    %vm130 = vcmp.eq.s32.totalorder %v123, %v102
    %v131 = vsel %vm124, 1.0, 0.0
    %v132 = vsel %vm125, 1.0, 0.0
    %v133 = vsel %vm126, 1.0, 0.0
    %v134 = vsel %vm127, 1.0, 0.0
    %v135 = vsel %vm128, 1.0, 0.0
    %v136 = vsel %vm129, 1.0, 0.0
    %v137 = vsel %vm130, 1.0, 0.0
    %v138 = vld [vmem:[%s1] sm:$0xff]
    %v139 = vld [vmem:[%s1 + $0x8] sm:$0xff]
    %v140 = vld [vmem:[%s1 + $0x10] sm:$0xff]
    %v141 = vld [vmem:[%s1 + $0x18] sm:$0xff]
    %v142 = vld [vmem:[%s1 + $0x20] sm:$0xff]
    %v143 = vld [vmem:[%s1 + $0x28] sm:$0xff]
    %v144 = vld [vmem:[%s1 + $0x30] sm:$0xff]
    %v145 = vld [vmem:[%s1 + $0x38] sm:$0xff]
    %v146 = vld [vmem:[%s1 + $0x40] sm:$0xff]
    %v147 = vld [vmem:[%s1 + $0x48] sm:$0xff]
    %v148 = vld [vmem:[%s1 + $0x50] sm:$0xff]
    %v149 = vld [vmem:[%s1 + $0x58] sm:$0xff]
    %v150 = vld [vmem:[%s1 + $0x60] sm:$0xf]
    %vm151 = vcmask 818176
    %v153 = vsel %vm151, %v131, 0
    %v156 = vsel %vm151, %v132, 0
    %v159 = vsel %vm151, %v133, 0
    %v162 = vsel %vm151, %v134, 0
    %v165 = vsel %vm151, %v135, 0
    %v168 = vsel %vm151, %v136, 0
    %v171 = vsel %vm151, %v137, 0
    %vm173 = vcmask 1043456
    %v175 = vsel %vm173, %v150, 0
    %177 = vmatprep.subr.mxu0 0.0
    %178 = vmatpush1.msra.mxu0 %v138
    %179 = vmatprep.subr.mxu0 0.0
    %180 = vmatpush1.msra.mxu0 %v139
    %181 = vmatprep.subr.mxu0 0.0
    %182 = vmatpush1.msra.mxu0 %v140
    %183 = vmatprep.subr.mxu0 0.0
    %184 = vmatpush1.msra.mxu0 %v141
    %185 = vmatprep.subr.mxu0 0.0
    %186 = vmatpush1.msra.mxu0 %v142
    %187 = vmatprep.subr.mxu0 0.0
    %188 = vmatpush1.msra.mxu0 %v143
    %189 = vmatprep.subr.mxu0 0.0
    %190 = vmatpush1.msra.mxu0 %v144
    %191 = vmatprep.subr.mxu0 0.0
    %192 = vmatpush1.msra.mxu0 %v145
    %193 = vmatprep.subr.mxu0 0.0
    %194 = vmatpush1.msra.mxu0 %v146
    %195 = vmatprep.subr.mxu0 0.0
    %196 = vmatpush1.msra.mxu0 %v147
    %197 = vmatprep.subr.mxu0 0.0
    %198 = vmatpush1.msra.mxu0 %v148
    %199 = vmatprep.subr.mxu0 0.0
    %200 = vmatpush1.msra.mxu0 %v149
    %201 = vmatprep.subr.mxu0 0.0
    %202 = vmatpush1.msra.mxu0 %v175
    %203 = vmatprep.subr.mxu0 0.0
    %204 = vmatpush1.msra.mxu0 0.0
    %205 = vmatprep.subr.mxu0 0.0
    %206 = vmatpush1.msra.mxu0 0.0
    %207 = vmatprep.subr.mxu0 0.0
    %208 = vmatpush1.msra.mxu0 0.0
    %209 = vmatprep.subr.mxu0 0.0
    %210 = vmatpush1.msra.mxu0 0.0
    %211 = vmatprep.subr.mxu0 0.0
    %212 = vmatpush1.msra.mxu0 0.0
    %213 = vmatprep.subr.mxu0 0.0
    %214 = vmatpush1.msra.mxu0 0.0
    %215 = vmatprep.subr.mxu0 0.0
    %216 = vmatpush1.msra.mxu0 0.0
    %217 = vmatprep.subr.mxu0 0.0
    %218 = vmatpush1.msra.mxu0 0.0
    %219 = vmatprep.subr.mxu0 0.0
    %220 = vmatpush1.msra.mxu0 0.0
    %221 = vmatprep.subr.mxu0 0.0
    %222 = vmatpush1.msra.mxu0 0.0
    %223 = vmatprep.subr.mxu0 0.0
    %224 = vmatpush1.msra.mxu0 0.0
    %225 = vmatprep.subr.mxu0 0.0
    %226 = vmatpush1.msra.mxu0 0.0
    %227 = vmatprep.subr.mxu0 0.0
    %228 = vmatpush1.msra.mxu0 0.0
    %229 = vmatprep.subr.mxu0 0.0
    %230 = vmatpush1.msra.mxu0 0.0
    %231 = vmatprep.subr.mxu0 0.0
    %232 = vmatpush1.msra.mxu0 0.0
    %233 = vmatprep.subr.mxu0 0.0
    %234 = vmatpush1.msra.mxu0 0.0
    %235 = vmatprep.subr.mxu0 0.0
    %236 = vmatpush1.msra.mxu0 0.0
    %237 = vmatprep.subr.mxu0 0.0
    %238 = vmatpush1.msra.mxu0 0.0
    %239 = vmatprep.subr.mxu0 0.0
    %240 = vmatpush1.msra.mxu0 0.0
    %241 = vmatprep.mubr.f32.mxu0 0.0
    %242 = vmatmul.mubr.f32.gmra.mrb[0].mxu0 %v153
    %v243 = vpop.f32.mrb[0].mxu0
    %v244 = vadd.f32 0.0, %v243
    %v245 = vpop.f32.mrb[0].mxu0
    %246 = vmatprep.mubr.f32.mxu0 0.0
    %247 = vmatmul.mubr.f32.gmra.mrb[0].mxu0 %v156
    %v248 = vpop.f32.mrb[0].mxu0
    %v249 = vadd.f32 0.0, %v248
    %v250 = vpop.f32.mrb[0].mxu0
    %251 = vmatprep.mubr.f32.mxu0 0.0
    %252 = vmatmul.mubr.f32.gmra.mrb[0].mxu0 %v159
    %v253 = vpop.f32.mrb[0].mxu0
    %v254 = vadd.f32 0.0, %v253
    %v255 = vpop.f32.mrb[0].mxu0
    %256 = vmatprep.mubr.f32.mxu0 0.0
    %257 = vmatmul.mubr.f32.gmra.mrb[0].mxu0 %v162
    %v258 = vpop.f32.mrb[0].mxu0
    %v259 = vadd.f32 0.0, %v258
    %v260 = vpop.f32.mrb[0].mxu0
    %261 = vmatprep.mubr.f32.mxu0 0.0
    %262 = vmatmul.mubr.f32.gmra.mrb[0].mxu0 %v165
    %v263 = vpop.f32.mrb[0].mxu0
    %v264 = vadd.f32 0.0, %v263
    %v265 = vpop.f32.mrb[0].mxu0
    %266 = vmatprep.mubr.f32.mxu0 0.0
    %267 = vmatmul.mubr.f32.gmra.mrb[0].mxu0 %v168
    %v268 = vpop.f32.mrb[0].mxu0
    %v269 = vadd.f32 0.0, %v268
    %v270 = vpop.f32.mrb[0].mxu0
    %271 = vmatprep.mubr.f32.mxu0 0.0
    %272 = vmatmul.mubr.f32.gmra.mrb[0].mxu0 %v171
    %v273 = vpop.f32.mrb[0].mxu0
    %v274 = vadd.f32 0.0, %v273
    %v275 = vpop.f32.mrb[0].mxu0
    %276 = vdwg.mxu0
    %v277 = vld [vmem:[%s2] sm:$0xff]
    %v278 = vld [vmem:[%s2 + $0x8] sm:$0xff]
    %v279 = vld [vmem:[%s2 + $0x10] sm:$0xff]
    %v280 = vld [vmem:[%s2 + $0x18] sm:$0xff]
    %s281 = scalar_lea.vmem %s2, 32
    %v282 = vld [vmem:[%s281] sm:$0xff]
    %v283 = vld [vmem:[%s281 + $0x8] sm:$0xff]
    %v284 = vld [vmem:[%s281 + $0x10] sm:$0xff]
    %v285 = vld [vmem:[%s281 + $0x18] sm:$0xff]
    %vm293 = vcmask 1046528
    %v294 = vrot.slane %v244, 1
    %v295 = vrot.slane %v249, 1
    %v296 = vsel %vm293, %v294, %v295
    %v297 = vrot.slane %v254, 1
    %v298 = vsel %vm293, %v295, %v297
    %v299 = vrot.slane %v259, 1
    %v300 = vsel %vm293, %v297, %v299
    %v301 = vrot.slane %v264, 1
    %v302 = vsel %vm293, %v299, %v301
    %v303 = vrot.slane %v269, 1
    %v304 = vsel %vm293, %v301, %v303
    %v305 = vrot.slane %v274, 1
    %v306 = vsel %vm293, %v303, %v305
    %vm307 = vcmask 261120
    %v308 = vsel %vm307, %v296, 0
    %v310 = vsel %vm307, %v298, 0
    %v312 = vsel %vm307, %v300, 0
    %v314 = vsel %vm307, %v302, 0
    %v316 = vsel %vm307, %v304, 0
    %v318 = vsel %vm307, %v306, 0
    %320 = vmatprep.subr.mxu0 0.0
    %321 = vmatpush1.msra.mxu0 %v282
    %322 = vmatprep.subr.mxu0 0.0
    %323 = vmatpush1.msra.mxu0 %v283
    %324 = vmatprep.subr.mxu0 0.0
    %325 = vmatpush1.msra.mxu0 %v284
    %326 = vmatprep.subr.mxu0 0.0
    %327 = vmatpush1.msra.mxu0 %v285
    %328 = vmatprep.subr.mxu0 0.0
    %329 = vmatpush1.msra.mxu0 0.0
    %330 = vmatprep.subr.mxu0 0.0
    %331 = vmatpush1.msra.mxu0 0.0
    %332 = vmatprep.subr.mxu0 0.0
    %333 = vmatpush1.msra.mxu0 0.0
    %334 = vmatprep.subr.mxu0 0.0
    %335 = vmatpush1.msra.mxu0 0.0
    %336 = vmatprep.subr.mxu0 0.0
    %337 = vmatpush1.msra.mxu0 0.0
    %338 = vmatprep.subr.mxu0 0.0
    %339 = vmatpush1.msra.mxu0 0.0
    %340 = vmatprep.subr.mxu0 0.0
    %341 = vmatpush1.msra.mxu0 0.0
    %342 = vmatprep.subr.mxu0 0.0
    %343 = vmatpush1.msra.mxu0 0.0
    %344 = vmatprep.subr.mxu0 0.0
    %345 = vmatpush1.msra.mxu0 0.0
    %346 = vmatprep.subr.mxu0 0.0
    %347 = vmatpush1.msra.mxu0 0.0
    %348 = vmatprep.subr.mxu0 0.0
    %349 = vmatpush1.msra.mxu0 0.0
    %350 = vmatprep.subr.mxu0 0.0
    %351 = vmatpush1.msra.mxu0 0.0
    %352 = vmatprep.subr.mxu0 0.0
    %353 = vmatpush1.msra.mxu0 0.0
    %354 = vmatprep.subr.mxu0 0.0
    %355 = vmatpush1.msra.mxu0 0.0
    %356 = vmatprep.subr.mxu0 0.0
    %357 = vmatpush1.msra.mxu0 0.0
    %358 = vmatprep.subr.mxu0 0.0
    %359 = vmatpush1.msra.mxu0 0.0
    %360 = vmatprep.subr.mxu0 0.0
    %361 = vmatpush1.msra.mxu0 0.0
    %362 = vmatprep.subr.mxu0 0.0
    %363 = vmatpush1.msra.mxu0 0.0
    %364 = vmatprep.subr.mxu0 0.0
    %365 = vmatpush1.msra.mxu0 0.0
    %366 = vmatprep.subr.mxu0 0.0
    %367 = vmatpush1.msra.mxu0 0.0
    %368 = vmatprep.subr.mxu0 0.0
    %369 = vmatpush1.msra.mxu0 0.0
    %370 = vmatprep.subr.mxu0 0.0
    %371 = vmatpush1.msra.mxu0 0.0
    %372 = vmatprep.subr.mxu0 0.0
    %373 = vmatpush1.msra.mxu0 0.0
    %374 = vmatprep.subr.mxu0 0.0
    %375 = vmatpush1.msra.mxu0 0.0
    %376 = vmatprep.subr.mxu0 0.0
    %377 = vmatpush1.msra.mxu0 0.0
    %378 = vmatprep.subr.mxu0 0.0
    %379 = vmatpush1.msra.mxu0 0.0
    %380 = vmatprep.subr.mxu0 0.0
    %381 = vmatpush1.msra.mxu0 0.0
    %382 = vmatprep.subr.mxu0 0.0
    %383 = vmatpush1.msra.mxu0 0.0
    %384 = vmatprep.mubr.f32.mxu0 0.0
    %385 = vmatmul.mubr.f32.gmra.mrb[0].mxu0 %v308
    %v386 = vpop.f32.mrb[0].mxu0
    %v387 = vadd.f32 0.0, %v386
    %v388 = vpop.f32.mrb[0].mxu0
    %389 = vmatprep.mubr.f32.mxu0 0.0
    %390 = vmatmul.mubr.f32.gmra.mrb[0].mxu0 %v310
    %v391 = vpop.f32.mrb[0].mxu0
    %v392 = vadd.f32 0.0, %v391
    %v393 = vpop.f32.mrb[0].mxu0
    %394 = vmatprep.mubr.f32.mxu0 0.0
    %395 = vmatmul.mubr.f32.gmra.mrb[0].mxu0 %v312
    %v396 = vpop.f32.mrb[0].mxu0
    %v397 = vadd.f32 0.0, %v396
    %v398 = vpop.f32.mrb[0].mxu0
    %399 = vmatprep.mubr.f32.mxu0 0.0
    %400 = vmatmul.mubr.f32.gmra.mrb[0].mxu0 %v314
    %v401 = vpop.f32.mrb[0].mxu0
    %v402 = vadd.f32 0.0, %v401
    %v403 = vpop.f32.mrb[0].mxu0
    %404 = vmatprep.mubr.f32.mxu0 0.0
    %405 = vmatmul.mubr.f32.gmra.mrb[0].mxu0 %v316
    %v406 = vpop.f32.mrb[0].mxu0
    %v407 = vadd.f32 0.0, %v406
    %v408 = vpop.f32.mrb[0].mxu0
    %409 = vmatprep.mubr.f32.mxu0 0.0
    %410 = vmatmul.mubr.f32.gmra.mrb[0].mxu0 %v318
    %v411 = vpop.f32.mrb[0].mxu0
    %v412 = vadd.f32 0.0, %v411
    %v413 = vpop.f32.mrb[0].mxu0
    %414 = vdwg.mxu0
    %v415 = vsel %vm307, %v244, 0
    %v417 = vsel %vm307, %v249, 0
    %v419 = vsel %vm307, %v254, 0
    %v421 = vsel %vm307, %v259, 0
    %v423 = vsel %vm307, %v264, 0
    %v425 = vsel %vm307, %v269, 0
    %427 = vmatprep.subr.mxu0 0.0
    %428 = vmatpush1.msra.mxu0 %v277
    %429 = vmatprep.subr.mxu0 0.0
    %430 = vmatpush1.msra.mxu0 %v278
    %431 = vmatprep.subr.mxu0 0.0
    %432 = vmatpush1.msra.mxu0 %v279
    %433 = vmatprep.subr.mxu0 0.0
    %434 = vmatpush1.msra.mxu0 %v280
    %435 = vmatprep.subr.mxu0 0.0
    %436 = vmatpush1.msra.mxu0 0.0
    %437 = vmatprep.subr.mxu0 0.0
    %438 = vmatpush1.msra.mxu0 0.0
    %439 = vmatprep.subr.mxu0 0.0
    %440 = vmatpush1.msra.mxu0 0.0
    %441 = vmatprep.subr.mxu0 0.0
    %442 = vmatpush1.msra.mxu0 0.0
    %443 = vmatprep.subr.mxu0 0.0
    %444 = vmatpush1.msra.mxu0 0.0
    %445 = vmatprep.subr.mxu0 0.0
    %446 = vmatpush1.msra.mxu0 0.0
    %447 = vmatprep.subr.mxu0 0.0
    %448 = vmatpush1.msra.mxu0 0.0
    %449 = vmatprep.subr.mxu0 0.0
    %450 = vmatpush1.msra.mxu0 0.0
    %451 = vmatprep.subr.mxu0 0.0
    %452 = vmatpush1.msra.mxu0 0.0
    %453 = vmatprep.subr.mxu0 0.0
    %454 = vmatpush1.msra.mxu0 0.0
    %455 = vmatprep.subr.mxu0 0.0
    %456 = vmatpush1.msra.mxu0 0.0
    %457 = vmatprep.subr.mxu0 0.0
    %458 = vmatpush1.msra.mxu0 0.0
    %459 = vmatprep.subr.mxu0 0.0
    %460 = vmatpush1.msra.mxu0 0.0
    %461 = vmatprep.subr.mxu0 0.0
    %462 = vmatpush1.msra.mxu0 0.0
    %463 = vmatprep.subr.mxu0 0.0
    %464 = vmatpush1.msra.mxu0 0.0
    %465 = vmatprep.subr.mxu0 0.0
    %466 = vmatpush1.msra.mxu0 0.0
    %467 = vmatprep.subr.mxu0 0.0
    %468 = vmatpush1.msra.mxu0 0.0
    %469 = vmatprep.subr.mxu0 0.0
    %470 = vmatpush1.msra.mxu0 0.0
    %471 = vmatprep.subr.mxu0 0.0
    %472 = vmatpush1.msra.mxu0 0.0
    %473 = vmatprep.subr.mxu0 0.0
    %474 = vmatpush1.msra.mxu0 0.0
    %475 = vmatprep.subr.mxu0 0.0
    %476 = vmatpush1.msra.mxu0 0.0
    %477 = vmatprep.subr.mxu0 0.0
    %478 = vmatpush1.msra.mxu0 0.0
    %479 = vmatprep.subr.mxu0 0.0
    %480 = vmatpush1.msra.mxu0 0.0
    %481 = vmatprep.subr.mxu0 0.0
    %482 = vmatpush1.msra.mxu0 0.0
    %483 = vmatprep.subr.mxu0 0.0
    %484 = vmatpush1.msra.mxu0 0.0
    %485 = vmatprep.subr.mxu0 0.0
    %486 = vmatpush1.msra.mxu0 0.0
    %487 = vmatprep.subr.mxu0 0.0
    %488 = vmatpush1.msra.mxu0 0.0
    %489 = vmatprep.subr.mxu0 0.0
    %490 = vmatpush1.msra.mxu0 0.0
    %491 = vmatprep.mubr.f32.mxu0 0.0
    %492 = vmatmul.mubr.f32.gmra.mrb[0].mxu0 %v415
    %v493 = vpop.f32.mrb[0].mxu0
    %v494 = vadd.f32 %v387, %v493
    %v495 = vpop.f32.mrb[0].mxu0
    %496 = vmatprep.mubr.f32.mxu0 0.0
    %497 = vmatmul.mubr.f32.gmra.mrb[0].mxu0 %v417
    %v498 = vpop.f32.mrb[0].mxu0
    %v499 = vadd.f32 %v392, %v498
    %v500 = vpop.f32.mrb[0].mxu0
    %501 = vmatprep.mubr.f32.mxu0 0.0
    %502 = vmatmul.mubr.f32.gmra.mrb[0].mxu0 %v419
    %v503 = vpop.f32.mrb[0].mxu0
    %v504 = vadd.f32 %v397, %v503
    %v505 = vpop.f32.mrb[0].mxu0
    %506 = vmatprep.mubr.f32.mxu0 0.0
    %507 = vmatmul.mubr.f32.gmra.mrb[0].mxu0 %v421
    %v508 = vpop.f32.mrb[0].mxu0
    %v509 = vadd.f32 %v402, %v508
    %v510 = vpop.f32.mrb[0].mxu0
    %511 = vmatprep.mubr.f32.mxu0 0.0
    %512 = vmatmul.mubr.f32.gmra.mrb[0].mxu0 %v423
    %v513 = vpop.f32.mrb[0].mxu0
    %v514 = vadd.f32 %v407, %v513
    %v515 = vpop.f32.mrb[0].mxu0
    %516 = vmatprep.mubr.f32.mxu0 0.0
    %517 = vmatmul.mubr.f32.gmra.mrb[0].mxu0 %v425
    %v518 = vpop.f32.mrb[0].mxu0
    %v519 = vadd.f32 %v412, %v518
    %v520 = vpop.f32.mrb[0].mxu0
    %521 = vdwg.mxu0
    %s522 = scalar_lea.vmem %s2, 64
    %v523 = vld [vmem:[%s522] sm:$0xff]
    %v524 = vld [vmem:[%s522 + $0x8] sm:$0xff]
    %v525 = vld [vmem:[%s522 + $0x10] sm:$0xff]
    %v526 = vld [vmem:[%s522 + $0x18] sm:$0xff]
    %vm527 = vcmask 1045504
    %v528 = vrot.slane %v244, 2
    %v529 = vrot.slane %v249, 2
    %v530 = vsel %vm527, %v528, %v529
    %v531 = vrot.slane %v254, 2
    %v532 = vsel %vm527, %v529, %v531
    %v533 = vrot.slane %v259, 2
    %v534 = vsel %vm527, %v531, %v533
    %v535 = vrot.slane %v264, 2
    %v536 = vsel %vm527, %v533, %v535
    %v537 = vrot.slane %v269, 2
    %v538 = vsel %vm527, %v535, %v537
    %v539 = vrot.slane %v274, 2
    %v540 = vsel %vm527, %v537, %v539
    %v541 = vsel %vm307, %v530, 0
    %v543 = vsel %vm307, %v532, 0
    %v545 = vsel %vm307, %v534, 0
    %v547 = vsel %vm307, %v536, 0
    %v549 = vsel %vm307, %v538, 0
    %v551 = vsel %vm307, %v540, 0
    %553 = vmatprep.subr.mxu0 0.0
    %554 = vmatpush1.msra.mxu0 %v523
    %555 = vmatprep.subr.mxu0 0.0
    %556 = vmatpush1.msra.mxu0 %v524
    %557 = vmatprep.subr.mxu0 0.0
    %558 = vmatpush1.msra.mxu0 %v525
    %559 = vmatprep.subr.mxu0 0.0
    %560 = vmatpush1.msra.mxu0 %v526
    %561 = vmatprep.subr.mxu0 0.0
    %562 = vmatpush1.msra.mxu0 0.0
    %563 = vmatprep.subr.mxu0 0.0
    %564 = vmatpush1.msra.mxu0 0.0
    %565 = vmatprep.subr.mxu0 0.0
    %566 = vmatpush1.msra.mxu0 0.0
    %567 = vmatprep.subr.mxu0 0.0
    %568 = vmatpush1.msra.mxu0 0.0
    %569 = vmatprep.subr.mxu0 0.0
    %570 = vmatpush1.msra.mxu0 0.0
    %571 = vmatprep.subr.mxu0 0.0
    %572 = vmatpush1.msra.mxu0 0.0
    %573 = vmatprep.subr.mxu0 0.0
    %574 = vmatpush1.msra.mxu0 0.0
    %575 = vmatprep.subr.mxu0 0.0
    %576 = vmatpush1.msra.mxu0 0.0
    %577 = vmatprep.subr.mxu0 0.0
    %578 = vmatpush1.msra.mxu0 0.0
    %579 = vmatprep.subr.mxu0 0.0
    %580 = vmatpush1.msra.mxu0 0.0
    %581 = vmatprep.subr.mxu0 0.0
    %582 = vmatpush1.msra.mxu0 0.0
    %583 = vmatprep.subr.mxu0 0.0
    %584 = vmatpush1.msra.mxu0 0.0
    %585 = vmatprep.subr.mxu0 0.0
    %586 = vmatpush1.msra.mxu0 0.0
    %587 = vmatprep.subr.mxu0 0.0
    %588 = vmatpush1.msra.mxu0 0.0
    %589 = vmatprep.subr.mxu0 0.0
    %590 = vmatpush1.msra.mxu0 0.0
    %591 = vmatprep.subr.mxu0 0.0
    %592 = vmatpush1.msra.mxu0 0.0
    %593 = vmatprep.subr.mxu0 0.0
    %594 = vmatpush1.msra.mxu0 0.0
    %595 = vmatprep.subr.mxu0 0.0
    %596 = vmatpush1.msra.mxu0 0.0
    %597 = vmatprep.subr.mxu0 0.0
    %598 = vmatpush1.msra.mxu0 0.0
    %599 = vmatprep.subr.mxu0 0.0
    %600 = vmatpush1.msra.mxu0 0.0
    %601 = vmatprep.subr.mxu0 0.0
    %602 = vmatpush1.msra.mxu0 0.0
    %603 = vmatprep.subr.mxu0 0.0
    %604 = vmatpush1.msra.mxu0 0.0
    %605 = vmatprep.subr.mxu0 0.0
    %606 = vmatpush1.msra.mxu0 0.0
    %607 = vmatprep.subr.mxu0 0.0
    %608 = vmatpush1.msra.mxu0 0.0
    %609 = vmatprep.subr.mxu0 0.0
    %610 = vmatpush1.msra.mxu0 0.0
    %611 = vmatprep.subr.mxu0 0.0
    %612 = vmatpush1.msra.mxu0 0.0
    %613 = vmatprep.subr.mxu0 0.0
    %614 = vmatpush1.msra.mxu0 0.0
    %615 = vmatprep.subr.mxu0 0.0
    %616 = vmatpush1.msra.mxu0 0.0
    %617 = vmatprep.mubr.f32.mxu0 0.0
    %618 = vmatmul.mubr.f32.gmra.mrb[0].mxu0 %v541
    %v619 = vpop.f32.mrb[0].mxu0
    %v620 = vadd.f32 0.0, %v619
    %v621 = vpop.f32.mrb[0].mxu0
    %622 = vmatprep.mubr.f32.mxu0 0.0
    %623 = vmatmul.mubr.f32.gmra.mrb[0].mxu0 %v543
    %v624 = vpop.f32.mrb[0].mxu0
    %v625 = vadd.f32 0.0, %v624
    %v626 = vpop.f32.mrb[0].mxu0
    %627 = vmatprep.mubr.f32.mxu0 0.0
    %628 = vmatmul.mubr.f32.gmra.mrb[0].mxu0 %v545
    %v629 = vpop.f32.mrb[0].mxu0
    %v630 = vadd.f32 0.0, %v629
    %v631 = vpop.f32.mrb[0].mxu0
    %632 = vmatprep.mubr.f32.mxu0 0.0
    %633 = vmatmul.mubr.f32.gmra.mrb[0].mxu0 %v547
    %v634 = vpop.f32.mrb[0].mxu0
    %v635 = vadd.f32 0.0, %v634
    %v636 = vpop.f32.mrb[0].mxu0
    %637 = vmatprep.mubr.f32.mxu0 0.0
    %638 = vmatmul.mubr.f32.gmra.mrb[0].mxu0 %v549
    %v639 = vpop.f32.mrb[0].mxu0
    %v640 = vadd.f32 0.0, %v639
    %v641 = vpop.f32.mrb[0].mxu0
    %642 = vmatprep.mubr.f32.mxu0 0.0
    %643 = vmatmul.mubr.f32.gmra.mrb[0].mxu0 %v551
    %v644 = vpop.f32.mrb[0].mxu0
    %v645 = vadd.f32 0.0, %v644
    %v646 = vpop.f32.mrb[0].mxu0
    %647 = vdwg.mxu0
    %v648 = vadd.f32 %v494, %v620
    %v649 = vadd.f32 %v499, %v625
    %v650 = vadd.f32 %v504, %v630
    %v651 = vadd.f32 %v509, %v635
    %v652 = vadd.f32 %v514, %v640
    %v653 = vadd.f32 %v519, %v645
    %s654 = scalar_lea.vmem %s2, 96
    %v655 = vld [vmem:[%s654] sm:$0xff]
    %v656 = vld [vmem:[%s654 + $0x8] sm:$0xff]
    %v657 = vld [vmem:[%s654 + $0x10] sm:$0xff]
    %v658 = vld [vmem:[%s654 + $0x18] sm:$0xff]
    %vm659 = vcmask 1044480
    %v660 = vrot.slane %v244, 3
    %v661 = vrot.slane %v249, 3
    %v662 = vsel %vm659, %v660, %v661
    %v663 = vrot.slane %v254, 3
    %v664 = vsel %vm659, %v661, %v663
    %v665 = vrot.slane %v259, 3
    %v666 = vsel %vm659, %v663, %v665
    %v667 = vrot.slane %v264, 3
    %v668 = vsel %vm659, %v665, %v667
    %v669 = vrot.slane %v269, 3
    %v670 = vsel %vm659, %v667, %v669
    %v671 = vrot.slane %v274, 3
    %v672 = vsel %vm659, %v669, %v671
    %v673 = vsel %vm307, %v662, 0
    %v675 = vsel %vm307, %v664, 0
    %v677 = vsel %vm307, %v666, 0
    %v679 = vsel %vm307, %v668, 0
    %v681 = vsel %vm307, %v670, 0
    %v683 = vsel %vm307, %v672, 0
    %685 = vmatprep.subr.mxu0 0.0
    %686 = vmatpush1.msra.mxu0 %v655
    %687 = vmatprep.subr.mxu0 0.0
    %688 = vmatpush1.msra.mxu0 %v656
    %689 = vmatprep.subr.mxu0 0.0
    %690 = vmatpush1.msra.mxu0 %v657
    %691 = vmatprep.subr.mxu0 0.0
    %692 = vmatpush1.msra.mxu0 %v658
    %693 = vmatprep.subr.mxu0 0.0
    %694 = vmatpush1.msra.mxu0 0.0
    %695 = vmatprep.subr.mxu0 0.0
    %696 = vmatpush1.msra.mxu0 0.0
    %697 = vmatprep.subr.mxu0 0.0
    %698 = vmatpush1.msra.mxu0 0.0
    %699 = vmatprep.subr.mxu0 0.0
    %700 = vmatpush1.msra.mxu0 0.0
    %701 = vmatprep.subr.mxu0 0.0
    %702 = vmatpush1.msra.mxu0 0.0
    %703 = vmatprep.subr.mxu0 0.0
    %704 = vmatpush1.msra.mxu0 0.0
    %705 = vmatprep.subr.mxu0 0.0
    %706 = vmatpush1.msra.mxu0 0.0
    %707 = vmatprep.subr.mxu0 0.0
    %708 = vmatpush1.msra.mxu0 0.0
    %709 = vmatprep.subr.mxu0 0.0
    %710 = vmatpush1.msra.mxu0 0.0
    %711 = vmatprep.subr.mxu0 0.0
    %712 = vmatpush1.msra.mxu0 0.0
    %713 = vmatprep.subr.mxu0 0.0
    %714 = vmatpush1.msra.mxu0 0.0
    %715 = vmatprep.subr.mxu0 0.0
    %716 = vmatpush1.msra.mxu0 0.0
    %717 = vmatprep.subr.mxu0 0.0
    %718 = vmatpush1.msra.mxu0 0.0
    %719 = vmatprep.subr.mxu0 0.0
    %720 = vmatpush1.msra.mxu0 0.0
    %721 = vmatprep.subr.mxu0 0.0
    %722 = vmatpush1.msra.mxu0 0.0
    %723 = vmatprep.subr.mxu0 0.0
    %724 = vmatpush1.msra.mxu0 0.0
    %725 = vmatprep.subr.mxu0 0.0
    %726 = vmatpush1.msra.mxu0 0.0
    %727 = vmatprep.subr.mxu0 0.0
    %728 = vmatpush1.msra.mxu0 0.0
    %729 = vmatprep.subr.mxu0 0.0
    %730 = vmatpush1.msra.mxu0 0.0
    %731 = vmatprep.subr.mxu0 0.0
    %732 = vmatpush1.msra.mxu0 0.0
    %733 = vmatprep.subr.mxu0 0.0
    %734 = vmatpush1.msra.mxu0 0.0
    %735 = vmatprep.subr.mxu0 0.0
    %736 = vmatpush1.msra.mxu0 0.0
    %737 = vmatprep.subr.mxu0 0.0
    %738 = vmatpush1.msra.mxu0 0.0
    %739 = vmatprep.subr.mxu0 0.0
    %740 = vmatpush1.msra.mxu0 0.0
    %741 = vmatprep.subr.mxu0 0.0
    %742 = vmatpush1.msra.mxu0 0.0
    %743 = vmatprep.subr.mxu0 0.0
    %744 = vmatpush1.msra.mxu0 0.0
    %745 = vmatprep.subr.mxu0 0.0
    %746 = vmatpush1.msra.mxu0 0.0
    %747 = vmatprep.subr.mxu0 0.0
    %748 = vmatpush1.msra.mxu0 0.0
    %749 = vmatprep.mubr.f32.mxu0 0.0
    %750 = vmatmul.mubr.f32.gmra.mrb[0].mxu0 %v673
    %v751 = vpop.f32.mrb[0].mxu0
    %v752 = vadd.f32 0.0, %v751
    %v753 = vpop.f32.mrb[0].mxu0
    %754 = vmatprep.mubr.f32.mxu0 0.0
    %755 = vmatmul.mubr.f32.gmra.mrb[0].mxu0 %v675
    %v756 = vpop.f32.mrb[0].mxu0
    %v757 = vadd.f32 0.0, %v756
    %v758 = vpop.f32.mrb[0].mxu0
    %759 = vmatprep.mubr.f32.mxu0 0.0
    %760 = vmatmul.mubr.f32.gmra.mrb[0].mxu0 %v677
    %v761 = vpop.f32.mrb[0].mxu0
    %v762 = vadd.f32 0.0, %v761
    %v763 = vpop.f32.mrb[0].mxu0
    %764 = vmatprep.mubr.f32.mxu0 0.0
    %765 = vmatmul.mubr.f32.gmra.mrb[0].mxu0 %v679
    %v766 = vpop.f32.mrb[0].mxu0
    %v767 = vadd.f32 0.0, %v766
    %v768 = vpop.f32.mrb[0].mxu0
    %769 = vmatprep.mubr.f32.mxu0 0.0
    %770 = vmatmul.mubr.f32.gmra.mrb[0].mxu0 %v681
    %v771 = vpop.f32.mrb[0].mxu0
    %v772 = vadd.f32 0.0, %v771
    %v773 = vpop.f32.mrb[0].mxu0
    %774 = vmatprep.mubr.f32.mxu0 0.0
    %775 = vmatmul.mubr.f32.gmra.mrb[0].mxu0 %v683
    %v776 = vpop.f32.mrb[0].mxu0
    %v777 = vadd.f32 0.0, %v776
    %v778 = vpop.f32.mrb[0].mxu0
    %779 = vdwg.mxu0
    %v780 = vadd.f32 %v648, %v752
    %v781 = vadd.f32 %v649, %v757
    %v782 = vadd.f32 %v650, %v762
    %v783 = vadd.f32 %v651, %v767
    %v784 = vadd.f32 %v652, %v772
    %v785 = vadd.f32 %v653, %v777
    %s786 = scalar_lea.vmem %s2, 128
    %v787 = vld [vmem:[%s786] sm:$0xff]
    %v788 = vld [vmem:[%s786 + $0x8] sm:$0xff]
    %v789 = vld [vmem:[%s786 + $0x10] sm:$0xff]
    %v790 = vld [vmem:[%s786 + $0x18] sm:$0xff]
    %v791 = vrot.slane %v244, 4
    %v792 = vrot.slane %v249, 4
    %v793 = vsel %vm173, %v791, %v792
    %v794 = vrot.slane %v254, 4
    %v795 = vsel %vm173, %v792, %v794
    %v796 = vrot.slane %v259, 4
    %v797 = vsel %vm173, %v794, %v796
    %v798 = vrot.slane %v264, 4
    %v799 = vsel %vm173, %v796, %v798
    %v800 = vrot.slane %v269, 4
    %v801 = vsel %vm173, %v798, %v800
    %v802 = vrot.slane %v274, 4
    %v803 = vsel %vm173, %v800, %v802
    %v804 = vsel %vm307, %v793, 0
    %v806 = vsel %vm307, %v795, 0
    %v808 = vsel %vm307, %v797, 0
    %v810 = vsel %vm307, %v799, 0
    %v812 = vsel %vm307, %v801, 0
    %v814 = vsel %vm307, %v803, 0
    %816 = vmatprep.subr.mxu0 0.0
    %817 = vmatpush1.msra.mxu0 %v787
    %818 = vmatprep.subr.mxu0 0.0
    %819 = vmatpush1.msra.mxu0 %v788
    %820 = vmatprep.subr.mxu0 0.0
    %821 = vmatpush1.msra.mxu0 %v789
    %822 = vmatprep.subr.mxu0 0.0
    %823 = vmatpush1.msra.mxu0 %v790
    %824 = vmatprep.subr.mxu0 0.0
    %825 = vmatpush1.msra.mxu0 0.0
    %826 = vmatprep.subr.mxu0 0.0
    %827 = vmatpush1.msra.mxu0 0.0
    %828 = vmatprep.subr.mxu0 0.0
    %829 = vmatpush1.msra.mxu0 0.0
    %830 = vmatprep.subr.mxu0 0.0
    %831 = vmatpush1.msra.mxu0 0.0
    %832 = vmatprep.subr.mxu0 0.0
    %833 = vmatpush1.msra.mxu0 0.0
    %834 = vmatprep.subr.mxu0 0.0
    %835 = vmatpush1.msra.mxu0 0.0
    %836 = vmatprep.subr.mxu0 0.0
    %837 = vmatpush1.msra.mxu0 0.0
    %838 = vmatprep.subr.mxu0 0.0
    %839 = vmatpush1.msra.mxu0 0.0
    %840 = vmatprep.subr.mxu0 0.0
    %841 = vmatpush1.msra.mxu0 0.0
    %842 = vmatprep.subr.mxu0 0.0
    %843 = vmatpush1.msra.mxu0 0.0
    %844 = vmatprep.subr.mxu0 0.0
    %845 = vmatpush1.msra.mxu0 0.0
    %846 = vmatprep.subr.mxu0 0.0
    %847 = vmatpush1.msra.mxu0 0.0
    %848 = vmatprep.subr.mxu0 0.0
    %849 = vmatpush1.msra.mxu0 0.0
    %850 = vmatprep.subr.mxu0 0.0
    %851 = vmatpush1.msra.mxu0 0.0
    %852 = vmatprep.subr.mxu0 0.0
    %853 = vmatpush1.msra.mxu0 0.0
    %854 = vmatprep.subr.mxu0 0.0
    %855 = vmatpush1.msra.mxu0 0.0
    %856 = vmatprep.subr.mxu0 0.0
    %857 = vmatpush1.msra.mxu0 0.0
    %858 = vmatprep.subr.mxu0 0.0
    %859 = vmatpush1.msra.mxu0 0.0
    %860 = vmatprep.subr.mxu0 0.0
    %861 = vmatpush1.msra.mxu0 0.0
    %862 = vmatprep.subr.mxu0 0.0
    %863 = vmatpush1.msra.mxu0 0.0
    %864 = vmatprep.subr.mxu0 0.0
    %865 = vmatpush1.msra.mxu0 0.0
    %866 = vmatprep.subr.mxu0 0.0
    %867 = vmatpush1.msra.mxu0 0.0
    %868 = vmatprep.subr.mxu0 0.0
    %869 = vmatpush1.msra.mxu0 0.0
    %870 = vmatprep.subr.mxu0 0.0
    %871 = vmatpush1.msra.mxu0 0.0
    %872 = vmatprep.subr.mxu0 0.0
    %873 = vmatpush1.msra.mxu0 0.0
    %874 = vmatprep.subr.mxu0 0.0
    %875 = vmatpush1.msra.mxu0 0.0
    %876 = vmatprep.subr.mxu0 0.0
    %877 = vmatpush1.msra.mxu0 0.0
    %878 = vmatprep.subr.mxu0 0.0
    %879 = vmatpush1.msra.mxu0 0.0
    %880 = vmatprep.mubr.f32.mxu0 0.0
    %881 = vmatmul.mubr.f32.gmra.mrb[0].mxu0 %v804
    %v882 = vpop.f32.mrb[0].mxu0
    %v883 = vadd.f32 0.0, %v882
    %v884 = vpop.f32.mrb[0].mxu0
    %885 = vmatprep.mubr.f32.mxu0 0.0
    %886 = vmatmul.mubr.f32.gmra.mrb[0].mxu0 %v806
    %v887 = vpop.f32.mrb[0].mxu0
    %v888 = vadd.f32 0.0, %v887
    %v889 = vpop.f32.mrb[0].mxu0
    %890 = vmatprep.mubr.f32.mxu0 0.0
    %891 = vmatmul.mubr.f32.gmra.mrb[0].mxu0 %v808
    %v892 = vpop.f32.mrb[0].mxu0
    %v893 = vadd.f32 0.0, %v892
    %v894 = vpop.f32.mrb[0].mxu0
    %895 = vmatprep.mubr.f32.mxu0 0.0
    %896 = vmatmul.mubr.f32.gmra.mrb[0].mxu0 %v810
    %v897 = vpop.f32.mrb[0].mxu0
    %v898 = vadd.f32 0.0, %v897
    %v899 = vpop.f32.mrb[0].mxu0
    %900 = vmatprep.mubr.f32.mxu0 0.0
    %901 = vmatmul.mubr.f32.gmra.mrb[0].mxu0 %v812
    %v902 = vpop.f32.mrb[0].mxu0
    %v903 = vadd.f32 0.0, %v902
    %v904 = vpop.f32.mrb[0].mxu0
    %905 = vmatprep.mubr.f32.mxu0 0.0
    %906 = vmatmul.mubr.f32.gmra.mrb[0].mxu0 %v814
    %v907 = vpop.f32.mrb[0].mxu0
    %v908 = vadd.f32 0.0, %v907
    %v909 = vpop.f32.mrb[0].mxu0
    %910 = vdwg.mxu0
    %v911 = vadd.f32 %v780, %v883
    %v912 = vadd.f32 %v781, %v888
    %v913 = vadd.f32 %v782, %v893
    %v914 = vadd.f32 %v783, %v898
    %v915 = vadd.f32 %v784, %v903
    %v916 = vadd.f32 %v785, %v908
    %s917 = scalar_lea.vmem %s2, 160
    %v918 = vld [vmem:[%s917] sm:$0xff]
    %v919 = vld [vmem:[%s917 + $0x8] sm:$0xff]
    %v920 = vld [vmem:[%s917 + $0x10] sm:$0xff]
    %v921 = vld [vmem:[%s917 + $0x18] sm:$0xff]
    %vm922 = vcmask 1042432
    %v923 = vrot.slane %v244, 5
    %v924 = vrot.slane %v249, 5
    %v925 = vsel %vm922, %v923, %v924
    %v926 = vrot.slane %v254, 5
    %v927 = vsel %vm922, %v924, %v926
    %v928 = vrot.slane %v259, 5
    %v929 = vsel %vm922, %v926, %v928
    %v930 = vrot.slane %v264, 5
    %v931 = vsel %vm922, %v928, %v930
    %v932 = vrot.slane %v269, 5
    %v933 = vsel %vm922, %v930, %v932
    %v934 = vrot.slane %v274, 5
    %v935 = vsel %vm922, %v932, %v934
    %v936 = vsel %vm307, %v925, 0
    %v938 = vsel %vm307, %v927, 0
    %v940 = vsel %vm307, %v929, 0
    %v942 = vsel %vm307, %v931, 0
    %v944 = vsel %vm307, %v933, 0
    %v946 = vsel %vm307, %v935, 0
    %948 = vmatprep.subr.mxu0 0.0
    %949 = vmatpush1.msra.mxu0 %v918
    %950 = vmatprep.subr.mxu0 0.0
    %951 = vmatpush1.msra.mxu0 %v919
    %952 = vmatprep.subr.mxu0 0.0
    %953 = vmatpush1.msra.mxu0 %v920
    %954 = vmatprep.subr.mxu0 0.0
    %955 = vmatpush1.msra.mxu0 %v921
    %956 = vmatprep.subr.mxu0 0.0
    %957 = vmatpush1.msra.mxu0 0.0
    %958 = vmatprep.subr.mxu0 0.0
    %959 = vmatpush1.msra.mxu0 0.0
    %960 = vmatprep.subr.mxu0 0.0
    %961 = vmatpush1.msra.mxu0 0.0
    %962 = vmatprep.subr.mxu0 0.0
    %963 = vmatpush1.msra.mxu0 0.0
    %964 = vmatprep.subr.mxu0 0.0
    %965 = vmatpush1.msra.mxu0 0.0
    %966 = vmatprep.subr.mxu0 0.0
    %967 = vmatpush1.msra.mxu0 0.0
    %968 = vmatprep.subr.mxu0 0.0
    %969 = vmatpush1.msra.mxu0 0.0
    %970 = vmatprep.subr.mxu0 0.0
    %971 = vmatpush1.msra.mxu0 0.0
    %972 = vmatprep.subr.mxu0 0.0
    %973 = vmatpush1.msra.mxu0 0.0
    %974 = vmatprep.subr.mxu0 0.0
    %975 = vmatpush1.msra.mxu0 0.0
    %976 = vmatprep.subr.mxu0 0.0
    %977 = vmatpush1.msra.mxu0 0.0
    %978 = vmatprep.subr.mxu0 0.0
    %979 = vmatpush1.msra.mxu0 0.0
    %980 = vmatprep.subr.mxu0 0.0
    %981 = vmatpush1.msra.mxu0 0.0
    %982 = vmatprep.subr.mxu0 0.0
    %983 = vmatpush1.msra.mxu0 0.0
    %984 = vmatprep.subr.mxu0 0.0
    %985 = vmatpush1.msra.mxu0 0.0
    %986 = vmatprep.subr.mxu0 0.0
    %987 = vmatpush1.msra.mxu0 0.0
    %988 = vmatprep.subr.mxu0 0.0
    %989 = vmatpush1.msra.mxu0 0.0
    %990 = vmatprep.subr.mxu0 0.0
    %991 = vmatpush1.msra.mxu0 0.0
    %992 = vmatprep.subr.mxu0 0.0
    %993 = vmatpush1.msra.mxu0 0.0
    %994 = vmatprep.subr.mxu0 0.0
    %995 = vmatpush1.msra.mxu0 0.0
    %996 = vmatprep.subr.mxu0 0.0
    %997 = vmatpush1.msra.mxu0 0.0
    %998 = vmatprep.subr.mxu0 0.0
    %999 = vmatpush1.msra.mxu0 0.0
    %1000 = vmatprep.subr.mxu0 0.0
    %1001 = vmatpush1.msra.mxu0 0.0
    %1002 = vmatprep.subr.mxu0 0.0
    %1003 = vmatpush1.msra.mxu0 0.0
    %1004 = vmatprep.subr.mxu0 0.0
    %1005 = vmatpush1.msra.mxu0 0.0
    %1006 = vmatprep.subr.mxu0 0.0
    %1007 = vmatpush1.msra.mxu0 0.0
    %1008 = vmatprep.subr.mxu0 0.0
    %1009 = vmatpush1.msra.mxu0 0.0
    %1010 = vmatprep.subr.mxu0 0.0
    %1011 = vmatpush1.msra.mxu0 0.0
    %1012 = vmatprep.mubr.f32.mxu0 0.0
    %1013 = vmatmul.mubr.f32.gmra.mrb[0].mxu0 %v936
    %v1014 = vpop.f32.mrb[0].mxu0
    %v1015 = vadd.f32 0.0, %v1014
    %v1016 = vpop.f32.mrb[0].mxu0
    %1017 = vmatprep.mubr.f32.mxu0 0.0
    %1018 = vmatmul.mubr.f32.gmra.mrb[0].mxu0 %v938
    %v1019 = vpop.f32.mrb[0].mxu0
    %v1020 = vadd.f32 0.0, %v1019
    %v1021 = vpop.f32.mrb[0].mxu0
    %1022 = vmatprep.mubr.f32.mxu0 0.0
    %1023 = vmatmul.mubr.f32.gmra.mrb[0].mxu0 %v940
    %v1024 = vpop.f32.mrb[0].mxu0
    %v1025 = vadd.f32 0.0, %v1024
    %v1026 = vpop.f32.mrb[0].mxu0
    %1027 = vmatprep.mubr.f32.mxu0 0.0
    %1028 = vmatmul.mubr.f32.gmra.mrb[0].mxu0 %v942
    %v1029 = vpop.f32.mrb[0].mxu0
    %v1030 = vadd.f32 0.0, %v1029
    %v1031 = vpop.f32.mrb[0].mxu0
    %1032 = vmatprep.mubr.f32.mxu0 0.0
    %1033 = vmatmul.mubr.f32.gmra.mrb[0].mxu0 %v944
    %v1034 = vpop.f32.mrb[0].mxu0
    %v1035 = vadd.f32 0.0, %v1034
    %v1036 = vpop.f32.mrb[0].mxu0
    %1037 = vmatprep.mubr.f32.mxu0 0.0
    %1038 = vmatmul.mubr.f32.gmra.mrb[0].mxu0 %v946
    %v1039 = vpop.f32.mrb[0].mxu0
    %v1040 = vadd.f32 0.0, %v1039
    %v1041 = vpop.f32.mrb[0].mxu0
    %1042 = vdwg.mxu0
    %v1043 = vadd.f32 %v911, %v1015
    %v1044 = vadd.f32 %v912, %v1020
    %v1045 = vadd.f32 %v913, %v1025
    %v1046 = vadd.f32 %v914, %v1030
    %v1047 = vadd.f32 %v915, %v1035
    %v1048 = vadd.f32 %v916, %v1040
    %v1049 = vld [vmem:[%s3] sm:$0x1]
    %v1051 = vlaneseq
    %v1052 = vshrl.u32 %v1051, 7
    %v1053 = vsub.s32 0, %v1052
    %v1054 = vrot.slane %v1049, %v1053
    %v1056 = vadd.f32 %v1043, %v1054
    %v1057 = vadd.f32 %v1044, %v1054
    %v1058 = vadd.f32 %v1045, %v1054
    %v1059 = vadd.f32 %v1046, %v1054
    %v1060 = vadd.f32 %v1047, %v1054
    %v1061 = vadd.f32 %v1048, %v1054
    %v1062 = vlaneseq
    %v1063 = vshrl.u32 %v1062, 7
    %v1064 = vadd.s32 %v1063, 8
    %v1065 = vadd.s32 %v1063, 16
    %vm1066 = vcmp.lt.s32.totalorder %v102, 32
    %vm1067 = vcmp.lt.s32.totalorder %v102, 64
    %v1068 = vsel %vm1067, 13, 11
    %v1069 = vsel %vm1066, 15, %v1068
    %vm1070 = vcmp.lt.s32.totalorder %v1063, %v1069
    %vm1071 = vcmp.lt.s32.totalorder %v1064, %v1069
    %vm1072 = vcmp.lt.s32.totalorder %v1065, %v1069
    %v1073 = vsel %vm1070, 1, 0
    %v1074 = vsel %vm1071, 1, 0
    %v1075 = vsel %vm1072, 1, 0
    %v1076 = vcvt.s32.f32 %v1073
    %v1077 = vcvt.s32.f32 %v1074
    %v1078 = vcvt.s32.f32 %v1075
    %v1079 = vcvt.s32.f32 %v1069
    %v1080 = vmul.f32 %v1056, %v1076
    %v1081 = vmul.f32 %v1057, %v1077
    %v1082 = vmul.f32 %v1058, %v1078
    %v1083 = vmul.f32 %v1059, %v1076
    %v1084 = vmul.f32 %v1060, %v1077
    %v1085 = vmul.f32 %v1061, %v1078
    %v1086 = vadd.f32 %v1080, %v1081
    %v1087 = vadd.f32 %v1086, %v1082
    %v1088 = vrot.slane %v1087, 4
    %v1089 = vadd.f32 %v1087, %v1088
    %v1090 = vrot.slane %v1089, 2
    %v1091 = vadd.f32 %v1089, %v1090
    %v1092 = vrot.slane %v1091, 1
    %v1093 = vadd.f32 %v1091, %v1092
    %v1094 = vadd.f32 %v1083, %v1084
    %v1095 = vadd.f32 %v1094, %v1085
    %v1096 = vrot.slane %v1095, 4
    %v1097 = vadd.f32 %v1095, %v1096
    %v1098 = vrot.slane %v1097, 2
    %v1099 = vadd.f32 %v1097, %v1098
    %v1100 = vrot.slane %v1099, 1
    %v1101 = vadd.f32 %v1099, %v1100
    %v1102 = vrcp.pop %v1079
    %v1103 = vmul.f32 %v1093, %v1102
    %v1104 = vmul.f32 %v1101, %v1102
    %v1105 = vsub.f32 %v1056, %v1103
    %v1106 = vsub.f32 %v1057, %v1103
    %v1107 = vsub.f32 %v1058, %v1103
    %v1108 = vsub.f32 %v1059, %v1104
    %v1109 = vsub.f32 %v1060, %v1104
    %v1110 = vsub.f32 %v1061, %v1104
    %v1111 = vmul.f32 %v1105, %v1076
    %v1112 = vmul.f32 %v1106, %v1077
    %v1113 = vmul.f32 %v1107, %v1078
    %v1114 = vmul.f32 %v1108, %v1076
    %v1115 = vmul.f32 %v1109, %v1077
    %v1116 = vmul.f32 %v1110, %v1078
    %v1117 = vmul.f32 %v1111, %v1111
    %v1118 = vmul.f32 %v1112, %v1112
    %v1119 = vmul.f32 %v1113, %v1113
    %v1120 = vmul.f32 %v1114, %v1114
    %v1121 = vmul.f32 %v1115, %v1115
    %v1122 = vmul.f32 %v1116, %v1116
    %v1123 = vadd.f32 %v1117, %v1118
    %v1124 = vadd.f32 %v1123, %v1119
    %v1125 = vrot.slane %v1124, 4
    %v1126 = vadd.f32 %v1124, %v1125
    %v1127 = vrot.slane %v1126, 2
    %v1128 = vadd.f32 %v1126, %v1127
    %v1129 = vrot.slane %v1128, 1
    %v1130 = vadd.f32 %v1128, %v1129
    %v1131 = vadd.f32 %v1120, %v1121
    %v1132 = vadd.f32 %v1131, %v1122
    %v1133 = vrot.slane %v1132, 4
    %v1134 = vadd.f32 %v1132, %v1133
    %v1135 = vrot.slane %v1134, 2
    %v1136 = vadd.f32 %v1134, %v1135
    %v1137 = vrot.slane %v1136, 1
    %v1138 = vadd.f32 %v1136, %v1137
    %v1139 = vmul.f32 %v1130, %v1102
    %v1140 = vmul.f32 %v1138, %v1102
    %v1141 = vadd.f32 %v1139, 1e-05
    %v1142 = vadd.f32 %v1140, 1e-05
    %v1143 = vrsqrt.pop %v1141
    %v1144 = vrsqrt.pop %v1142
    %v1145 = vmul.f32 %v1105, %v1143
    %v1146 = vmul.f32 %v1106, %v1143
    %v1147 = vmul.f32 %v1107, %v1143
    %v1148 = vmul.f32 %v1108, %v1144
    %v1149 = vmul.f32 %v1109, %v1144
    %v1150 = vmul.f32 %v1110, %v1144
    %v1151 = vmax.f32 %v1145, 0.0
    %v1152 = vmax.f32 %v1146, 0.0
    %v1153 = vmax.f32 %v1147, 0.0
    %v1154 = vmax.f32 %v1148, 0.0
    %v1155 = vmax.f32 %v1149, 0.0
    %v1156 = vmax.f32 %v1150, 0.0
    %v1157 = vmul.f32 %v1151, %v1076
    %v1158 = vmul.f32 %v1152, %v1077
    %v1159 = vmul.f32 %v1153, %v1078
    %v1160 = vmul.f32 %v1154, %v1076
    %v1161 = vmul.f32 %v1155, %v1077
    %v1162 = vmul.f32 %v1156, %v1078
    %v1163 = vmax.f32 %v1157, %v1159
    %v1164 = vmax.f32 %v1163, %v1158
    %v1165 = vrot.slane %v1164, 4
    %v1166 = vmax.f32 %v1164, %v1165
    %v1167 = vrot.slane %v1166, 2
    %v1168 = vmax.f32 %v1166, %v1167
    %v1169 = vrot.slane %v1168, 1
    %v1170 = vmax.f32 %v1168, %v1169
    %v1171 = vmax.f32 %v1160, %v1162
    %v1172 = vmax.f32 %v1171, %v1161
    %v1173 = vrot.slane %v1172, 4
    %v1174 = vmax.f32 %v1172, %v1173
    %v1175 = vrot.slane %v1174, 2
    %v1176 = vmax.f32 %v1174, %v1175
    %v1177 = vrot.slane %v1176, 1
    %v1178 = vmax.f32 %v1176, %v1177
    %v1179 = vld [vmem:[#allocation5] sm:$0xff]
    %v1180 = vld [vmem:[#allocation5 + $0x8] sm:$0xff]
    %v1181 = vld [vmem:[#allocation5 + $0x10] sm:$0xff]
    %v1182 = vld [vmem:[#allocation5 + $0x18] sm:$0xff]
    %v1183 = vld [vmem:[#allocation2] sm:$0xff]
    %v1184 = vld [vmem:[#allocation2 + $0x8] sm:$0xff]
    %v1185 = vld [vmem:[#allocation2 + $0x10] sm:$0xff]
    %v1186 = vld [vmem:[#allocation2 + $0x18] sm:$0xff]
    %v1187 = vld [vmem:[%s6] sm:$0x1]
    %v1189 = vlaneseq
    %v1190 = vshrl.u32 %v1189, 7
    %v1191 = vsub.s32 0, %v1190
    %v1192 = vrot.slane %v1187, %v1191
    %1194 = vmatprep.subr.mxu0 0.0
    %1195 = vmatpush1.msra.mxu0 %v1183
    %1196 = vmatprep.subr.mxu0 0.0
    %1197 = vmatpush1.msra.mxu0 %v1184
    %1198 = vmatprep.subr.mxu0 0.0
    %1199 = vmatpush1.msra.mxu0 %v1185
    %1200 = vmatprep.subr.mxu0 0.0
    %1201 = vmatpush1.msra.mxu0 %v1186
    %1202 = vmatprep.subr.mxu0 0.0
    %1203 = vmatpush1.msra.mxu0 0.0
    %1204 = vmatprep.subr.mxu0 0.0
    %1205 = vmatpush1.msra.mxu0 0.0
    %1206 = vmatprep.subr.mxu0 0.0
    %1207 = vmatpush1.msra.mxu0 0.0
    %1208 = vmatprep.subr.mxu0 0.0
    %1209 = vmatpush1.msra.mxu0 0.0
    %1210 = vmatprep.subr.mxu0 0.0
    %1211 = vmatpush1.msra.mxu0 0.0
    %1212 = vmatprep.subr.mxu0 0.0
    %1213 = vmatpush1.msra.mxu0 0.0
    %1214 = vmatprep.subr.mxu0 0.0
    %1215 = vmatpush1.msra.mxu0 0.0
    %1216 = vmatprep.subr.mxu0 0.0
    %1217 = vmatpush1.msra.mxu0 0.0
    %1218 = vmatprep.subr.mxu0 0.0
    %1219 = vmatpush1.msra.mxu0 0.0
    %1220 = vmatprep.subr.mxu0 0.0
    %1221 = vmatpush1.msra.mxu0 0.0
    %1222 = vmatprep.subr.mxu0 0.0
    %1223 = vmatpush1.msra.mxu0 0.0
    %1224 = vmatprep.subr.mxu0 0.0
    %1225 = vmatpush1.msra.mxu0 0.0
    %1226 = vmatprep.subr.mxu0 0.0
    %1227 = vmatpush1.msra.mxu0 0.0
    %1228 = vmatprep.subr.mxu0 0.0
    %1229 = vmatpush1.msra.mxu0 0.0
    %1230 = vmatprep.subr.mxu0 0.0
    %1231 = vmatpush1.msra.mxu0 0.0
    %1232 = vmatprep.subr.mxu0 0.0
    %1233 = vmatpush1.msra.mxu0 0.0
    %1234 = vmatprep.subr.mxu0 0.0
    %1235 = vmatpush1.msra.mxu0 0.0
    %1236 = vmatprep.subr.mxu0 0.0
    %1237 = vmatpush1.msra.mxu0 0.0
    %1238 = vmatprep.subr.mxu0 0.0
    %1239 = vmatpush1.msra.mxu0 0.0
    %1240 = vmatprep.subr.mxu0 0.0
    %1241 = vmatpush1.msra.mxu0 0.0
    %1242 = vmatprep.subr.mxu0 0.0
    %1243 = vmatpush1.msra.mxu0 0.0
    %1244 = vmatprep.subr.mxu0 0.0
    %1245 = vmatpush1.msra.mxu0 0.0
    %1246 = vmatprep.subr.mxu0 0.0
    %1247 = vmatpush1.msra.mxu0 0.0
    %1248 = vmatprep.subr.mxu0 0.0
    %1249 = vmatpush1.msra.mxu0 0.0
    %1250 = vmatprep.subr.mxu0 0.0
    %1251 = vmatpush1.msra.mxu0 0.0
    %1252 = vmatprep.subr.mxu0 0.0
    %1253 = vmatpush1.msra.mxu0 0.0
    %1254 = vmatprep.subr.mxu0 0.0
    %1255 = vmatpush1.msra.mxu0 0.0
    %1256 = vmatprep.subr.mxu0 0.0
    %1257 = vmatpush1.msra.mxu0 0.0
    %1258 = vmatprep.mubr.f32.mxu0 0.0
    %1259 = vmatmul.mubr.f32.gmra.mrb[0].mxu0 %v415
    %v1260 = vpop.f32.mrb[0].mxu0
    %v1261 = vadd.f32 %v1192, %v1260
    %v1262 = vpop.f32.mrb[0].mxu0
    %1263 = vmatprep.mubr.f32.mxu0 0.0
    %1264 = vmatmul.mubr.f32.gmra.mrb[0].mxu0 %v417
    %v1265 = vpop.f32.mrb[0].mxu0
    %v1266 = vadd.f32 %v1192, %v1265
    %v1267 = vpop.f32.mrb[0].mxu0
    %1268 = vmatprep.mubr.f32.mxu0 0.0
    %1269 = vmatmul.mubr.f32.gmra.mrb[0].mxu0 %v419
    %v1270 = vpop.f32.mrb[0].mxu0
    %v1271 = vpop.f32.mrb[0].mxu0
    %1272 = vmatprep.mubr.f32.mxu0 0.0
    %1273 = vmatmul.mubr.f32.gmra.mrb[0].mxu0 %v421
    %v1274 = vpop.f32.mrb[0].mxu0
    %v1275 = vadd.f32 %v1192, %v1274
    %v1276 = vpop.f32.mrb[0].mxu0
    %1277 = vmatprep.mubr.f32.mxu0 0.0
    %1278 = vmatmul.mubr.f32.gmra.mrb[0].mxu0 %v423
    %v1279 = vpop.f32.mrb[0].mxu0
    %v1280 = vadd.f32 %v1192, %v1279
    %v1281 = vpop.f32.mrb[0].mxu0
    %1282 = vmatprep.mubr.f32.mxu0 0.0
    %1283 = vmatmul.mubr.f32.gmra.mrb[0].mxu0 %v425
    %v1284 = vpop.f32.mrb[0].mxu0
    %v1285 = vpop.f32.mrb[0].mxu0
    %1286 = vdwg.mxu0
    %vm1287 = vcmp.ge.s32.totalorder %v102, 64
    %vm1288 = vcmp.lt.s32.totalorder %v102, 96
    %vm1289 = vmand %vm1287, %vm1288
    %v1291 = vsel %vm307, 0.0, 0
    %1293 = vmatprep.subr.mxu0 0.0
    %1294 = vmatpush1.msra.mxu0 %v1179
    %1295 = vmatprep.subr.mxu0 0.0
    %1296 = vmatpush1.msra.mxu0 %v1180
    %1297 = vmatprep.subr.mxu0 0.0
    %1298 = vmatpush1.msra.mxu0 %v1181
    %1299 = vmatprep.subr.mxu0 0.0
    %1300 = vmatpush1.msra.mxu0 %v1182
    %1301 = vmatprep.subr.mxu0 0.0
    %1302 = vmatpush1.msra.mxu0 0.0
    %1303 = vmatprep.subr.mxu0 0.0
    %1304 = vmatpush1.msra.mxu0 0.0
    %1305 = vmatprep.subr.mxu0 0.0
    %1306 = vmatpush1.msra.mxu0 0.0
    %1307 = vmatprep.subr.mxu0 0.0
    %1308 = vmatpush1.msra.mxu0 0.0
    %1309 = vmatprep.subr.mxu0 0.0
    %1310 = vmatpush1.msra.mxu0 0.0
    %1311 = vmatprep.subr.mxu0 0.0
    %1312 = vmatpush1.msra.mxu0 0.0
    %1313 = vmatprep.subr.mxu0 0.0
    %1314 = vmatpush1.msra.mxu0 0.0
    %1315 = vmatprep.subr.mxu0 0.0
    %1316 = vmatpush1.msra.mxu0 0.0
    %1317 = vmatprep.subr.mxu0 0.0
    %1318 = vmatpush1.msra.mxu0 0.0
    %1319 = vmatprep.subr.mxu0 0.0
    %1320 = vmatpush1.msra.mxu0 0.0
    %1321 = vmatprep.subr.mxu0 0.0
    %1322 = vmatpush1.msra.mxu0 0.0
    %1323 = vmatprep.subr.mxu0 0.0
    %1324 = vmatpush1.msra.mxu0 0.0
    %1325 = vmatprep.subr.mxu0 0.0
    %1326 = vmatpush1.msra.mxu0 0.0
    %1327 = vmatprep.subr.mxu0 0.0
    %1328 = vmatpush1.msra.mxu0 0.0
    %1329 = vmatprep.subr.mxu0 0.0
    %1330 = vmatpush1.msra.mxu0 0.0
    %1331 = vmatprep.subr.mxu0 0.0
    %1332 = vmatpush1.msra.mxu0 0.0
    %1333 = vmatprep.subr.mxu0 0.0
    %1334 = vmatpush1.msra.mxu0 0.0
    %1335 = vmatprep.subr.mxu0 0.0
    %1336 = vmatpush1.msra.mxu0 0.0
    %1337 = vmatprep.subr.mxu0 0.0
    %1338 = vmatpush1.msra.mxu0 0.0
    %1339 = vmatprep.subr.mxu0 0.0
    %1340 = vmatpush1.msra.mxu0 0.0
    %1341 = vmatprep.subr.mxu0 0.0
    %1342 = vmatpush1.msra.mxu0 0.0
    %1343 = vmatprep.subr.mxu0 0.0
    %1344 = vmatpush1.msra.mxu0 0.0
    %1345 = vmatprep.subr.mxu0 0.0
    %1346 = vmatpush1.msra.mxu0 0.0
    %1347 = vmatprep.subr.mxu0 0.0
    %1348 = vmatpush1.msra.mxu0 0.0
    %1349 = vmatprep.subr.mxu0 0.0
    %1350 = vmatpush1.msra.mxu0 0.0
    %1351 = vmatprep.subr.mxu0 0.0
    %1352 = vmatpush1.msra.mxu0 0.0
    %1353 = vmatprep.subr.mxu0 0.0
    %1354 = vmatpush1.msra.mxu0 0.0
    %1355 = vmatprep.subr.mxu0 0.0
    %1356 = vmatpush1.msra.mxu0 0.0
    %1357 = vmatprep.mubr.f32.mxu0 0.0
    %1358 = vmatmul.mubr.f32.gmra.mrb[0].mxu0 %v1291
    %v1359 = vpop.f32.mrb[0].mxu0
    %v1360 = vadd.f32 0.0, %v1359
    %v1361 = vpop.f32.mrb[0].mxu0
    %1362 = vdwg.mxu0
    %v1364 = vrot.slane %v1360, 1
    %v1367 = vadd.f32 %v1261, %v1360
    %v1368 = vadd.f32 %v1275, %v1364
    %v1369 = vtanh.pop %v1367
    %v1370 = vtanh.pop %v1368
    %v1371 = vxor.u32 %v1367, 2147483648
    %v1372 = vxor.u32 %v1368, 2147483648
    %v1373 = vmul.f32 %v1371, 1.442695
    %v1374 = vpow.pop %v1373
    %v1375 = vmul.f32 %v1372, 1.442695
    %v1376 = vpow.pop %v1375
    %v1377 = vadd.f32 %v1374, 1.0
    %v1378 = vadd.f32 %v1376, 1.0
    %v1379 = vrcp.pop %v1377
    %v1380 = vmul.f32 1.0, %v1379
    %v1381 = vrcp.pop %v1378
    %v1382 = vmul.f32 1.0, %v1381
    %v1383 = vsel %vm1289, 1, 0
    %vm1384 = vcmp.eq.s32.totalorder %v1383, 1
    %v1387 = vrot.slane %v1370, 7
    %vm1388 = vcmask 1041409
    %v1389 = vsel %vm1388, %v1387, %v1369
    %v1393 = vrot.slane %v1382, 7
    %v1394 = vsel %vm1388, %v1393, %v1380
    %v1396 = vsel %vm1384, %v1389, %v1394
    %v1397 = vmul.f32 %v1396, 0.0
    %1399 = vrot.lane.b32.xlu0 %v1396, 64
    %v1400 = vpop.permute.xlu0 %1399
    %v1402 = vmul.f32 %v1396, %v1400
    %1404 = vrot.lane.b32.xlu0 %v1402, 32
    %v1405 = vpop.permute.xlu0 %1404
    %v1407 = vadd.f32 %v1397, %v1405
    %v1408 = vtanh.pop %v1407
    %1410 = vrot.lane.b32.xlu0 %v1408, 64
    %v1411 = vpop.permute.xlu0 %1410
    %v1413 = vmul.f32 %v1396, %v1411
    %1415 = vrot.lane.b32.xlu0 %v1413, 32
    %v1416 = vpop.permute.xlu0 %1415
    %v1417 = vsel %vm307, %v1416, 0
    %1419 = vmatprep.subr.mxu0 0.0
    %1420 = vmatpush1.msra.mxu0 %v1179
    %1421 = vmatprep.subr.mxu0 0.0
    %1422 = vmatpush1.msra.mxu0 %v1180
    %1423 = vmatprep.subr.mxu0 0.0
    %1424 = vmatpush1.msra.mxu0 %v1181
    %1425 = vmatprep.subr.mxu0 0.0
    %1426 = vmatpush1.msra.mxu0 %v1182
    %1427 = vmatprep.subr.mxu0 0.0
    %1428 = vmatpush1.msra.mxu0 0.0
    %1429 = vmatprep.subr.mxu0 0.0
    %1430 = vmatpush1.msra.mxu0 0.0
    %1431 = vmatprep.subr.mxu0 0.0
    %1432 = vmatpush1.msra.mxu0 0.0
    %1433 = vmatprep.subr.mxu0 0.0
    %1434 = vmatpush1.msra.mxu0 0.0
    %1435 = vmatprep.subr.mxu0 0.0
    %1436 = vmatpush1.msra.mxu0 0.0
    %1437 = vmatprep.subr.mxu0 0.0
    %1438 = vmatpush1.msra.mxu0 0.0
    %1439 = vmatprep.subr.mxu0 0.0
    %1440 = vmatpush1.msra.mxu0 0.0
    %1441 = vmatprep.subr.mxu0 0.0
    %1442 = vmatpush1.msra.mxu0 0.0
    %1443 = vmatprep.subr.mxu0 0.0
    %1444 = vmatpush1.msra.mxu0 0.0
    %1445 = vmatprep.subr.mxu0 0.0
    %1446 = vmatpush1.msra.mxu0 0.0
    %1447 = vmatprep.subr.mxu0 0.0
    %1448 = vmatpush1.msra.mxu0 0.0
    %1449 = vmatprep.subr.mxu0 0.0
    %1450 = vmatpush1.msra.mxu0 0.0
    %1451 = vmatprep.subr.mxu0 0.0
    %1452 = vmatpush1.msra.mxu0 0.0
    %1453 = vmatprep.subr.mxu0 0.0
    %1454 = vmatpush1.msra.mxu0 0.0
    %1455 = vmatprep.subr.mxu0 0.0
    %1456 = vmatpush1.msra.mxu0 0.0
    %1457 = vmatprep.subr.mxu0 0.0
    %1458 = vmatpush1.msra.mxu0 0.0
    %1459 = vmatprep.subr.mxu0 0.0
    %1460 = vmatpush1.msra.mxu0 0.0
    %1461 = vmatprep.subr.mxu0 0.0
    %1462 = vmatpush1.msra.mxu0 0.0
    %1463 = vmatprep.subr.mxu0 0.0
    %1464 = vmatpush1.msra.mxu0 0.0
    %1465 = vmatprep.subr.mxu0 0.0
    %1466 = vmatpush1.msra.mxu0 0.0
    %1467 = vmatprep.subr.mxu0 0.0
    %1468 = vmatpush1.msra.mxu0 0.0
    %1469 = vmatprep.subr.mxu0 0.0
    %1470 = vmatpush1.msra.mxu0 0.0
    %1471 = vmatprep.subr.mxu0 0.0
    %1472 = vmatpush1.msra.mxu0 0.0
    %1473 = vmatprep.subr.mxu0 0.0
    %1474 = vmatpush1.msra.mxu0 0.0
    %1475 = vmatprep.subr.mxu0 0.0
    %1476 = vmatpush1.msra.mxu0 0.0
    %1477 = vmatprep.subr.mxu0 0.0
    %1478 = vmatpush1.msra.mxu0 0.0
    %1479 = vmatprep.subr.mxu0 0.0
    %1480 = vmatpush1.msra.mxu0 0.0
    %1481 = vmatprep.subr.mxu0 0.0
    %1482 = vmatpush1.msra.mxu0 0.0
    %1483 = vmatprep.mubr.f32.mxu0 0.0
    %1484 = vmatmul.mubr.f32.gmra.mrb[0].mxu0 %v1417
    %v1485 = vpop.f32.mrb[0].mxu0
    %v1486 = vadd.f32 0.0, %v1485
    %v1487 = vpop.f32.mrb[0].mxu0
    %1488 = vdwg.mxu0
    %v1490 = vrot.slane %v1486, 7
    %v1493 = vadd.f32 %v1261, %v1490
    %v1494 = vadd.f32 %v1275, %v1486
    %v1495 = vtanh.pop %v1493
    %v1496 = vtanh.pop %v1494
    %v1497 = vxor.u32 %v1493, 2147483648
    %v1498 = vxor.u32 %v1494, 2147483648
    %v1499 = vmul.f32 %v1497, 1.442695
    %v1500 = vpow.pop %v1499
    %v1501 = vmul.f32 %v1498, 1.442695
    %v1502 = vpow.pop %v1501
    %v1503 = vadd.f32 %v1500, 1.0
    %v1504 = vadd.f32 %v1502, 1.0
    %v1505 = vrcp.pop %v1503
    %v1506 = vmul.f32 1.0, %v1505
    %v1507 = vrcp.pop %v1504
    %v1508 = vmul.f32 1.0, %v1507
    %v1511 = vrot.slane %v1495, 1
    %v1512 = vsel %vm1388, %v1496, %v1511
    %v1516 = vrot.slane %v1506, 1
    %v1517 = vsel %vm1388, %v1508, %v1516
    %v1519 = vsel %vm1384, %v1512, %v1517
    %v1520 = vmul.f32 %v1519, %v1407
    %1522 = vrot.lane.b32.xlu0 %v1519, 64
    %v1523 = vpop.permute.xlu0 %1522
    %v1525 = vmul.f32 %v1519, %v1523
    %1527 = vrot.lane.b32.xlu0 %v1525, 32
    %v1528 = vpop.permute.xlu0 %1527
    %v1530 = vadd.f32 %v1520, %v1528
    %v1531 = vtanh.pop %v1530
    %1533 = vrot.lane.b32.xlu0 %v1531, 64
    %v1534 = vpop.permute.xlu0 %1533
    %v1536 = vmul.f32 %v1519, %v1534
    %1538 = vrot.lane.b32.xlu0 %v1536, 32
    %v1539 = vpop.permute.xlu0 %1538
    %v1540 = vsel %vm307, %v1539, 0
    %1542 = vmatprep.subr.mxu0 0.0
    %1543 = vmatpush1.msra.mxu0 %v1179
    %1544 = vmatprep.subr.mxu0 0.0
    %1545 = vmatpush1.msra.mxu0 %v1180
    %1546 = vmatprep.subr.mxu0 0.0
    %1547 = vmatpush1.msra.mxu0 %v1181
    %1548 = vmatprep.subr.mxu0 0.0
    %1549 = vmatpush1.msra.mxu0 %v1182
    %1550 = vmatprep.subr.mxu0 0.0
    %1551 = vmatpush1.msra.mxu0 0.0
    %1552 = vmatprep.subr.mxu0 0.0
    %1553 = vmatpush1.msra.mxu0 0.0
    %1554 = vmatprep.subr.mxu0 0.0
    %1555 = vmatpush1.msra.mxu0 0.0
    %1556 = vmatprep.subr.mxu0 0.0
    %1557 = vmatpush1.msra.mxu0 0.0
    %1558 = vmatprep.subr.mxu0 0.0
    %1559 = vmatpush1.msra.mxu0 0.0
    %1560 = vmatprep.subr.mxu0 0.0
    %1561 = vmatpush1.msra.mxu0 0.0
    %1562 = vmatprep.subr.mxu0 0.0
    %1563 = vmatpush1.msra.mxu0 0.0
    %1564 = vmatprep.subr.mxu0 0.0
    %1565 = vmatpush1.msra.mxu0 0.0
    %1566 = vmatprep.subr.mxu0 0.0
    %1567 = vmatpush1.msra.mxu0 0.0
    %1568 = vmatprep.subr.mxu0 0.0
    %1569 = vmatpush1.msra.mxu0 0.0
    %1570 = vmatprep.subr.mxu0 0.0
    %1571 = vmatpush1.msra.mxu0 0.0
    %1572 = vmatprep.subr.mxu0 0.0
    %1573 = vmatpush1.msra.mxu0 0.0
    %1574 = vmatprep.subr.mxu0 0.0
    %1575 = vmatpush1.msra.mxu0 0.0
    %1576 = vmatprep.subr.mxu0 0.0
    %1577 = vmatpush1.msra.mxu0 0.0
    %1578 = vmatprep.subr.mxu0 0.0
    %1579 = vmatpush1.msra.mxu0 0.0
    %1580 = vmatprep.subr.mxu0 0.0
    %1581 = vmatpush1.msra.mxu0 0.0
    %1582 = vmatprep.subr.mxu0 0.0
    %1583 = vmatpush1.msra.mxu0 0.0
    %1584 = vmatprep.subr.mxu0 0.0
    %1585 = vmatpush1.msra.mxu0 0.0
    %1586 = vmatprep.subr.mxu0 0.0
    %1587 = vmatpush1.msra.mxu0 0.0
    %1588 = vmatprep.subr.mxu0 0.0
    %1589 = vmatpush1.msra.mxu0 0.0
    %1590 = vmatprep.subr.mxu0 0.0
    %1591 = vmatpush1.msra.mxu0 0.0
    %1592 = vmatprep.subr.mxu0 0.0
    %1593 = vmatpush1.msra.mxu0 0.0
    %1594 = vmatprep.subr.mxu0 0.0
    %1595 = vmatpush1.msra.mxu0 0.0
    %1596 = vmatprep.subr.mxu0 0.0
    %1597 = vmatpush1.msra.mxu0 0.0
    %1598 = vmatprep.subr.mxu0 0.0
    %1599 = vmatpush1.msra.mxu0 0.0
    %1600 = vmatprep.subr.mxu0 0.0
    %1601 = vmatpush1.msra.mxu0 0.0
    %1602 = vmatprep.subr.mxu0 0.0
    %1603 = vmatpush1.msra.mxu0 0.0
    %1604 = vmatprep.subr.mxu0 0.0
    %1605 = vmatpush1.msra.mxu0 0.0
    %1606 = vmatprep.mubr.f32.mxu0 0.0
    %1607 = vmatmul.mubr.f32.gmra.mrb[0].mxu0 %v1540
    %v1608 = vpop.f32.mrb[0].mxu0
    %v1609 = vadd.f32 0.0, %v1608
    %v1610 = vpop.f32.mrb[0].mxu0
    %1611 = vdwg.mxu0
    %v1613 = vrot.slane %v1609, 6
    %v1614 = vrot.slane %v1609, 7
    %v1617 = vadd.f32 %v1261, %v1613
    %v1618 = vadd.f32 %v1275, %v1614
    %v1619 = vtanh.pop %v1617
    %v1620 = vtanh.pop %v1618
    %v1621 = vxor.u32 %v1617, 2147483648
    %v1622 = vxor.u32 %v1618, 2147483648
    %v1623 = vmul.f32 %v1621, 1.442695
    %v1624 = vpow.pop %v1623
    %v1625 = vmul.f32 %v1622, 1.442695
    %v1626 = vpow.pop %v1625
    %v1627 = vadd.f32 %v1624, 1.0
    %v1628 = vadd.f32 %v1626, 1.0
    %v1629 = vrcp.pop %v1627
    %v1630 = vmul.f32 1.0, %v1629
    %v1631 = vrcp.pop %v1628
    %v1632 = vmul.f32 1.0, %v1631
    %v1635 = vrot.slane %v1619, 2
    %v1636 = vrot.slane %v1620, 1
    %v1637 = vsel %vm1388, %v1636, %v1635
    %v1641 = vrot.slane %v1630, 2
    %v1642 = vrot.slane %v1632, 1
    %v1643 = vsel %vm1388, %v1642, %v1641
    %v1645 = vsel %vm1384, %v1637, %v1643
    %v1646 = vmul.f32 %v1645, %v1530
    %1648 = vrot.lane.b32.xlu0 %v1645, 64
    %v1649 = vpop.permute.xlu0 %1648
    %v1651 = vmul.f32 %v1645, %v1649
    %1653 = vrot.lane.b32.xlu0 %v1651, 32
    %v1654 = vpop.permute.xlu0 %1653
    %v1656 = vadd.f32 %v1646, %v1654
    %v1657 = vtanh.pop %v1656
    %1659 = vrot.lane.b32.xlu0 %v1657, 64
    %v1660 = vpop.permute.xlu0 %1659
    %v1662 = vmul.f32 %v1645, %v1660
    %1664 = vrot.lane.b32.xlu0 %v1662, 32
    %v1665 = vpop.permute.xlu0 %1664
    %v1666 = vsel %vm307, %v1665, 0
    %1668 = vmatprep.subr.mxu0 0.0
    %1669 = vmatpush1.msra.mxu0 %v1179
    %1670 = vmatprep.subr.mxu0 0.0
    %1671 = vmatpush1.msra.mxu0 %v1180
    %1672 = vmatprep.subr.mxu0 0.0
    %1673 = vmatpush1.msra.mxu0 %v1181
    %1674 = vmatprep.subr.mxu0 0.0
    %1675 = vmatpush1.msra.mxu0 %v1182
    %1676 = vmatprep.subr.mxu0 0.0
    %1677 = vmatpush1.msra.mxu0 0.0
    %1678 = vmatprep.subr.mxu0 0.0
    %1679 = vmatpush1.msra.mxu0 0.0
    %1680 = vmatprep.subr.mxu0 0.0
    %1681 = vmatpush1.msra.mxu0 0.0
    %1682 = vmatprep.subr.mxu0 0.0
    %1683 = vmatpush1.msra.mxu0 0.0
    %1684 = vmatprep.subr.mxu0 0.0
    %1685 = vmatpush1.msra.mxu0 0.0
    %1686 = vmatprep.subr.mxu0 0.0
    %1687 = vmatpush1.msra.mxu0 0.0
    %1688 = vmatprep.subr.mxu0 0.0
    %1689 = vmatpush1.msra.mxu0 0.0
    %1690 = vmatprep.subr.mxu0 0.0
    %1691 = vmatpush1.msra.mxu0 0.0
    %1692 = vmatprep.subr.mxu0 0.0
    %1693 = vmatpush1.msra.mxu0 0.0
    %1694 = vmatprep.subr.mxu0 0.0
    %1695 = vmatpush1.msra.mxu0 0.0
    %1696 = vmatprep.subr.mxu0 0.0
    %1697 = vmatpush1.msra.mxu0 0.0
    %1698 = vmatprep.subr.mxu0 0.0
    %1699 = vmatpush1.msra.mxu0 0.0
    %1700 = vmatprep.subr.mxu0 0.0
    %1701 = vmatpush1.msra.mxu0 0.0
    %1702 = vmatprep.subr.mxu0 0.0
    %1703 = vmatpush1.msra.mxu0 0.0
    %1704 = vmatprep.subr.mxu0 0.0
    %1705 = vmatpush1.msra.mxu0 0.0
    %1706 = vmatprep.subr.mxu0 0.0
    %1707 = vmatpush1.msra.mxu0 0.0
    %1708 = vmatprep.subr.mxu0 0.0
    %1709 = vmatpush1.msra.mxu0 0.0
    %1710 = vmatprep.subr.mxu0 0.0
    %1711 = vmatpush1.msra.mxu0 0.0
    %1712 = vmatprep.subr.mxu0 0.0
    %1713 = vmatpush1.msra.mxu0 0.0
    %1714 = vmatprep.subr.mxu0 0.0
    %1715 = vmatpush1.msra.mxu0 0.0
    %1716 = vmatprep.subr.mxu0 0.0
    %1717 = vmatpush1.msra.mxu0 0.0
    %1718 = vmatprep.subr.mxu0 0.0
    %1719 = vmatpush1.msra.mxu0 0.0
    %1720 = vmatprep.subr.mxu0 0.0
    %1721 = vmatpush1.msra.mxu0 0.0
    %1722 = vmatprep.subr.mxu0 0.0
    %1723 = vmatpush1.msra.mxu0 0.0
    %1724 = vmatprep.subr.mxu0 0.0
    %1725 = vmatpush1.msra.mxu0 0.0
    %1726 = vmatprep.subr.mxu0 0.0
    %1727 = vmatpush1.msra.mxu0 0.0
    %1728 = vmatprep.subr.mxu0 0.0
    %1729 = vmatpush1.msra.mxu0 0.0
    %1730 = vmatprep.subr.mxu0 0.0
    %1731 = vmatpush1.msra.mxu0 0.0
    %1732 = vmatprep.mubr.f32.mxu0 0.0
    %1733 = vmatmul.mubr.f32.gmra.mrb[0].mxu0 %v1666
    %v1734 = vpop.f32.mrb[0].mxu0
    %v1735 = vadd.f32 0.0, %v1734
    %v1736 = vpop.f32.mrb[0].mxu0
    %1737 = vdwg.mxu0
    %v1739 = vrot.slane %v1735, 5
    %v1740 = vrot.slane %v1735, 6
    %v1743 = vadd.f32 %v1261, %v1739
    %v1744 = vadd.f32 %v1275, %v1740
    %v1745 = vtanh.pop %v1743
    %v1746 = vtanh.pop %v1744
    %v1747 = vxor.u32 %v1743, 2147483648
    %v1748 = vxor.u32 %v1744, 2147483648
    %v1749 = vmul.f32 %v1747, 1.442695
    %v1750 = vpow.pop %v1749
    %v1751 = vmul.f32 %v1748, 1.442695
    %v1752 = vpow.pop %v1751
    %v1753 = vadd.f32 %v1750, 1.0
    %v1754 = vadd.f32 %v1752, 1.0
    %v1755 = vrcp.pop %v1753
    %v1756 = vmul.f32 1.0, %v1755
    %v1757 = vrcp.pop %v1754
    %v1758 = vmul.f32 1.0, %v1757
    %v1761 = vrot.slane %v1745, 3
    %v1762 = vrot.slane %v1746, 2
    %v1763 = vsel %vm1388, %v1762, %v1761
    %v1767 = vrot.slane %v1756, 3
    %v1768 = vrot.slane %v1758, 2
    %v1769 = vsel %vm1388, %v1768, %v1767
    %v1771 = vsel %vm1384, %v1763, %v1769
    %v1772 = vmul.f32 %v1771, %v1656
    %1774 = vrot.lane.b32.xlu0 %v1771, 64
    %v1775 = vpop.permute.xlu0 %1774
    %v1777 = vmul.f32 %v1771, %v1775
    %1779 = vrot.lane.b32.xlu0 %v1777, 32
    %v1780 = vpop.permute.xlu0 %1779
    %v1782 = vadd.f32 %v1772, %v1780
    %v1783 = vtanh.pop %v1782
    %1785 = vrot.lane.b32.xlu0 %v1783, 64
    %v1786 = vpop.permute.xlu0 %1785
    %v1788 = vmul.f32 %v1771, %v1786
    %1790 = vrot.lane.b32.xlu0 %v1788, 32
    %v1791 = vpop.permute.xlu0 %1790
    %v1792 = vsel %vm307, %v1791, 0
    %1794 = vmatprep.subr.mxu0 0.0
    %1795 = vmatpush1.msra.mxu0 %v1179
    %1796 = vmatprep.subr.mxu0 0.0
    %1797 = vmatpush1.msra.mxu0 %v1180
    %1798 = vmatprep.subr.mxu0 0.0
    %1799 = vmatpush1.msra.mxu0 %v1181
    %1800 = vmatprep.subr.mxu0 0.0
    %1801 = vmatpush1.msra.mxu0 %v1182
    %1802 = vmatprep.subr.mxu0 0.0
    %1803 = vmatpush1.msra.mxu0 0.0
    %1804 = vmatprep.subr.mxu0 0.0
    %1805 = vmatpush1.msra.mxu0 0.0
    %1806 = vmatprep.subr.mxu0 0.0
    %1807 = vmatpush1.msra.mxu0 0.0
    %1808 = vmatprep.subr.mxu0 0.0
    %1809 = vmatpush1.msra.mxu0 0.0
    %1810 = vmatprep.subr.mxu0 0.0
    %1811 = vmatpush1.msra.mxu0 0.0
    %1812 = vmatprep.subr.mxu0 0.0
    %1813 = vmatpush1.msra.mxu0 0.0
    %1814 = vmatprep.subr.mxu0 0.0
    %1815 = vmatpush1.msra.mxu0 0.0
    %1816 = vmatprep.subr.mxu0 0.0
    %1817 = vmatpush1.msra.mxu0 0.0
    %1818 = vmatprep.subr.mxu0 0.0
    %1819 = vmatpush1.msra.mxu0 0.0
    %1820 = vmatprep.subr.mxu0 0.0
    %1821 = vmatpush1.msra.mxu0 0.0
    %1822 = vmatprep.subr.mxu0 0.0
    %1823 = vmatpush1.msra.mxu0 0.0
    %1824 = vmatprep.subr.mxu0 0.0
    %1825 = vmatpush1.msra.mxu0 0.0
    %1826 = vmatprep.subr.mxu0 0.0
    %1827 = vmatpush1.msra.mxu0 0.0
    %1828 = vmatprep.subr.mxu0 0.0
    %1829 = vmatpush1.msra.mxu0 0.0
    %1830 = vmatprep.subr.mxu0 0.0
    %1831 = vmatpush1.msra.mxu0 0.0
    %1832 = vmatprep.subr.mxu0 0.0
    %1833 = vmatpush1.msra.mxu0 0.0
    %1834 = vmatprep.subr.mxu0 0.0
    %1835 = vmatpush1.msra.mxu0 0.0
    %1836 = vmatprep.subr.mxu0 0.0
    %1837 = vmatpush1.msra.mxu0 0.0
    %1838 = vmatprep.subr.mxu0 0.0
    %1839 = vmatpush1.msra.mxu0 0.0
    %1840 = vmatprep.subr.mxu0 0.0
    %1841 = vmatpush1.msra.mxu0 0.0
    %1842 = vmatprep.subr.mxu0 0.0
    %1843 = vmatpush1.msra.mxu0 0.0
    %1844 = vmatprep.subr.mxu0 0.0
    %1845 = vmatpush1.msra.mxu0 0.0
    %1846 = vmatprep.subr.mxu0 0.0
    %1847 = vmatpush1.msra.mxu0 0.0
    %1848 = vmatprep.subr.mxu0 0.0
    %1849 = vmatpush1.msra.mxu0 0.0
    %1850 = vmatprep.subr.mxu0 0.0
    %1851 = vmatpush1.msra.mxu0 0.0
    %1852 = vmatprep.subr.mxu0 0.0
    %1853 = vmatpush1.msra.mxu0 0.0
    %1854 = vmatprep.subr.mxu0 0.0
    %1855 = vmatpush1.msra.mxu0 0.0
    %1856 = vmatprep.subr.mxu0 0.0
    %1857 = vmatpush1.msra.mxu0 0.0
    %1858 = vmatprep.mubr.f32.mxu0 0.0
    %1859 = vmatmul.mubr.f32.gmra.mrb[0].mxu0 %v1792
    %v1860 = vpop.f32.mrb[0].mxu0
    %v1861 = vadd.f32 0.0, %v1860
    %v1862 = vpop.f32.mrb[0].mxu0
    %1863 = vdwg.mxu0
    %v1865 = vrot.slane %v1861, 4
    %v1866 = vrot.slane %v1861, 5
    %v1869 = vadd.f32 %v1261, %v1865
    %v1870 = vadd.f32 %v1275, %v1866
    %v1871 = vtanh.pop %v1869
    %v1872 = vtanh.pop %v1870
    %v1873 = vxor.u32 %v1869, 2147483648
    %v1874 = vxor.u32 %v1870, 2147483648
    %v1875 = vmul.f32 %v1873, 1.442695
    %v1876 = vpow.pop %v1875
    %v1877 = vmul.f32 %v1874, 1.442695
    %v1878 = vpow.pop %v1877
    %v1879 = vadd.f32 %v1876, 1.0
    %v1880 = vadd.f32 %v1878, 1.0
    %v1881 = vrcp.pop %v1879
    %v1882 = vmul.f32 1.0, %v1881
    %v1883 = vrcp.pop %v1880
    %v1884 = vmul.f32 1.0, %v1883
    %v1887 = vrot.slane %v1871, 4
    %v1888 = vrot.slane %v1872, 3
    %v1889 = vsel %vm1388, %v1888, %v1887
    %v1893 = vrot.slane %v1882, 4
    %v1894 = vrot.slane %v1884, 3
    %v1895 = vsel %vm1388, %v1894, %v1893
    %v1897 = vsel %vm1384, %v1889, %v1895
    %v1898 = vmul.f32 %v1897, %v1782
    %1900 = vrot.lane.b32.xlu0 %v1897, 64
    %v1901 = vpop.permute.xlu0 %1900
    %v1903 = vmul.f32 %v1897, %v1901
    %1905 = vrot.lane.b32.xlu0 %v1903, 32
    %v1906 = vpop.permute.xlu0 %1905
    %v1908 = vadd.f32 %v1898, %v1906
    %v1909 = vtanh.pop %v1908
    %1911 = vrot.lane.b32.xlu0 %v1909, 64
    %v1912 = vpop.permute.xlu0 %1911
    %v1914 = vmul.f32 %v1897, %v1912
    %1916 = vrot.lane.b32.xlu0 %v1914, 32
    %v1917 = vpop.permute.xlu0 %1916
    %v1918 = vsel %vm307, %v1917, 0
    %1920 = vmatprep.subr.mxu0 0.0
    %1921 = vmatpush1.msra.mxu0 %v1179
    %1922 = vmatprep.subr.mxu0 0.0
    %1923 = vmatpush1.msra.mxu0 %v1180
    %1924 = vmatprep.subr.mxu0 0.0
    %1925 = vmatpush1.msra.mxu0 %v1181
    %1926 = vmatprep.subr.mxu0 0.0
    %1927 = vmatpush1.msra.mxu0 %v1182
    %1928 = vmatprep.subr.mxu0 0.0
    %1929 = vmatpush1.msra.mxu0 0.0
    %1930 = vmatprep.subr.mxu0 0.0
    %1931 = vmatpush1.msra.mxu0 0.0
    %1932 = vmatprep.subr.mxu0 0.0
    %1933 = vmatpush1.msra.mxu0 0.0
    %1934 = vmatprep.subr.mxu0 0.0
    %1935 = vmatpush1.msra.mxu0 0.0
    %1936 = vmatprep.subr.mxu0 0.0
    %1937 = vmatpush1.msra.mxu0 0.0
    %1938 = vmatprep.subr.mxu0 0.0
    %1939 = vmatpush1.msra.mxu0 0.0
    %1940 = vmatprep.subr.mxu0 0.0
    %1941 = vmatpush1.msra.mxu0 0.0
    %1942 = vmatprep.subr.mxu0 0.0
    %1943 = vmatpush1.msra.mxu0 0.0
    %1944 = vmatprep.subr.mxu0 0.0
    %1945 = vmatpush1.msra.mxu0 0.0
    %1946 = vmatprep.subr.mxu0 0.0
    %1947 = vmatpush1.msra.mxu0 0.0
    %1948 = vmatprep.subr.mxu0 0.0
    %1949 = vmatpush1.msra.mxu0 0.0
    %1950 = vmatprep.subr.mxu0 0.0
    %1951 = vmatpush1.msra.mxu0 0.0
    %1952 = vmatprep.subr.mxu0 0.0
    %1953 = vmatpush1.msra.mxu0 0.0
    %1954 = vmatprep.subr.mxu0 0.0
    %1955 = vmatpush1.msra.mxu0 0.0
    %1956 = vmatprep.subr.mxu0 0.0
    %1957 = vmatpush1.msra.mxu0 0.0
    %1958 = vmatprep.subr.mxu0 0.0
    %1959 = vmatpush1.msra.mxu0 0.0
    %1960 = vmatprep.subr.mxu0 0.0
    %1961 = vmatpush1.msra.mxu0 0.0
    %1962 = vmatprep.subr.mxu0 0.0
    %1963 = vmatpush1.msra.mxu0 0.0
    %1964 = vmatprep.subr.mxu0 0.0
    %1965 = vmatpush1.msra.mxu0 0.0
    %1966 = vmatprep.subr.mxu0 0.0
    %1967 = vmatpush1.msra.mxu0 0.0
    %1968 = vmatprep.subr.mxu0 0.0
    %1969 = vmatpush1.msra.mxu0 0.0
    %1970 = vmatprep.subr.mxu0 0.0
    %1971 = vmatpush1.msra.mxu0 0.0
    %1972 = vmatprep.subr.mxu0 0.0
    %1973 = vmatpush1.msra.mxu0 0.0
    %1974 = vmatprep.subr.mxu0 0.0
    %1975 = vmatpush1.msra.mxu0 0.0
    %1976 = vmatprep.subr.mxu0 0.0
    %1977 = vmatpush1.msra.mxu0 0.0
    %1978 = vmatprep.subr.mxu0 0.0
    %1979 = vmatpush1.msra.mxu0 0.0
    %1980 = vmatprep.subr.mxu0 0.0
    %1981 = vmatpush1.msra.mxu0 0.0
    %1982 = vmatprep.subr.mxu0 0.0
    %1983 = vmatpush1.msra.mxu0 0.0
    %1984 = vmatprep.mubr.f32.mxu0 0.0
    %1985 = vmatmul.mubr.f32.gmra.mrb[0].mxu0 %v1918
    %v1986 = vpop.f32.mrb[0].mxu0
    %v1987 = vadd.f32 0.0, %v1986
    %v1988 = vpop.f32.mrb[0].mxu0
    %1989 = vdwg.mxu0
    %v1991 = vrot.slane %v1987, 3
    %v1992 = vrot.slane %v1987, 4
    %v1995 = vadd.f32 %v1261, %v1991
    %v1996 = vadd.f32 %v1275, %v1992
    %v1997 = vtanh.pop %v1995
    %v1998 = vtanh.pop %v1996
    %v1999 = vxor.u32 %v1995, 2147483648
    %v2000 = vxor.u32 %v1996, 2147483648
    %v2001 = vmul.f32 %v1999, 1.442695
    %v2002 = vpow.pop %v2001
    %v2003 = vmul.f32 %v2000, 1.442695
    %v2004 = vpow.pop %v2003
    %v2005 = vadd.f32 %v2002, 1.0
    %v2006 = vadd.f32 %v2004, 1.0
    %v2007 = vrcp.pop %v2005
    %v2008 = vmul.f32 1.0, %v2007
    %v2009 = vrcp.pop %v2006
    %v2010 = vmul.f32 1.0, %v2009
    %v2013 = vrot.slane %v1997, 5
    %v2014 = vrot.slane %v1998, 4
    %v2015 = vsel %vm1388, %v2014, %v2013
    %v2019 = vrot.slane %v2008, 5
    %v2020 = vrot.slane %v2010, 4
    %v2021 = vsel %vm1388, %v2020, %v2019
    %v2023 = vsel %vm1384, %v2015, %v2021
    %v2024 = vmul.f32 %v2023, %v1908
    %2026 = vrot.lane.b32.xlu0 %v2023, 64
    %v2027 = vpop.permute.xlu0 %2026
    %v2029 = vmul.f32 %v2023, %v2027
    %2031 = vrot.lane.b32.xlu0 %v2029, 32
    %v2032 = vpop.permute.xlu0 %2031
    %v2034 = vadd.f32 %v2024, %v2032
    %v2035 = vtanh.pop %v2034
    %2037 = vrot.lane.b32.xlu0 %v2035, 64
    %v2038 = vpop.permute.xlu0 %2037
    %v2040 = vmul.f32 %v2023, %v2038
    %2042 = vrot.lane.b32.xlu0 %v2040, 32
    %v2043 = vpop.permute.xlu0 %2042
    %v2044 = vsel %vm307, %v2043, 0
    %2046 = vmatprep.subr.mxu0 0.0
    %2047 = vmatpush1.msra.mxu0 %v1179
    %2048 = vmatprep.subr.mxu0 0.0
    %2049 = vmatpush1.msra.mxu0 %v1180
    %2050 = vmatprep.subr.mxu0 0.0
    %2051 = vmatpush1.msra.mxu0 %v1181
    %2052 = vmatprep.subr.mxu0 0.0
    %2053 = vmatpush1.msra.mxu0 %v1182
    %2054 = vmatprep.subr.mxu0 0.0
    %2055 = vmatpush1.msra.mxu0 0.0
    %2056 = vmatprep.subr.mxu0 0.0
    %2057 = vmatpush1.msra.mxu0 0.0
    %2058 = vmatprep.subr.mxu0 0.0
    %2059 = vmatpush1.msra.mxu0 0.0
    %2060 = vmatprep.subr.mxu0 0.0
    %2061 = vmatpush1.msra.mxu0 0.0
    %2062 = vmatprep.subr.mxu0 0.0
    %2063 = vmatpush1.msra.mxu0 0.0
    %2064 = vmatprep.subr.mxu0 0.0
    %2065 = vmatpush1.msra.mxu0 0.0
    %2066 = vmatprep.subr.mxu0 0.0
    %2067 = vmatpush1.msra.mxu0 0.0
    %2068 = vmatprep.subr.mxu0 0.0
    %2069 = vmatpush1.msra.mxu0 0.0
    %2070 = vmatprep.subr.mxu0 0.0
    %2071 = vmatpush1.msra.mxu0 0.0
    %2072 = vmatprep.subr.mxu0 0.0
    %2073 = vmatpush1.msra.mxu0 0.0
    %2074 = vmatprep.subr.mxu0 0.0
    %2075 = vmatpush1.msra.mxu0 0.0
    %2076 = vmatprep.subr.mxu0 0.0
    %2077 = vmatpush1.msra.mxu0 0.0
    %2078 = vmatprep.subr.mxu0 0.0
    %2079 = vmatpush1.msra.mxu0 0.0
    %2080 = vmatprep.subr.mxu0 0.0
    %2081 = vmatpush1.msra.mxu0 0.0
    %2082 = vmatprep.subr.mxu0 0.0
    %2083 = vmatpush1.msra.mxu0 0.0
    %2084 = vmatprep.subr.mxu0 0.0
    %2085 = vmatpush1.msra.mxu0 0.0
    %2086 = vmatprep.subr.mxu0 0.0
    %2087 = vmatpush1.msra.mxu0 0.0
    %2088 = vmatprep.subr.mxu0 0.0
    %2089 = vmatpush1.msra.mxu0 0.0
    %2090 = vmatprep.subr.mxu0 0.0
    %2091 = vmatpush1.msra.mxu0 0.0
    %2092 = vmatprep.subr.mxu0 0.0
    %2093 = vmatpush1.msra.mxu0 0.0
    %2094 = vmatprep.subr.mxu0 0.0
    %2095 = vmatpush1.msra.mxu0 0.0
    %2096 = vmatprep.subr.mxu0 0.0
    %2097 = vmatpush1.msra.mxu0 0.0
    %2098 = vmatprep.subr.mxu0 0.0
    %2099 = vmatpush1.msra.mxu0 0.0
    %2100 = vmatprep.subr.mxu0 0.0
    %2101 = vmatpush1.msra.mxu0 0.0
    %2102 = vmatprep.subr.mxu0 0.0
    %2103 = vmatpush1.msra.mxu0 0.0
    %2104 = vmatprep.subr.mxu0 0.0
    %2105 = vmatpush1.msra.mxu0 0.0
    %2106 = vmatprep.subr.mxu0 0.0
    %2107 = vmatpush1.msra.mxu0 0.0
    %2108 = vmatprep.subr.mxu0 0.0
    %2109 = vmatpush1.msra.mxu0 0.0
    %2110 = vmatprep.mubr.f32.mxu0 0.0
    %2111 = vmatmul.mubr.f32.gmra.mrb[0].mxu0 %v2044
    %v2112 = vpop.f32.mrb[0].mxu0
    %v2113 = vadd.f32 0.0, %v2112
    %v2114 = vpop.f32.mrb[0].mxu0
    %2115 = vdwg.mxu0
    %v2117 = vrot.slane %v2113, 2
    %v2118 = vrot.slane %v2113, 3
    %v2121 = vadd.f32 %v1261, %v2117
    %v2122 = vadd.f32 %v1275, %v2118
    %v2123 = vtanh.pop %v2121
    %v2124 = vtanh.pop %v2122
    %v2125 = vxor.u32 %v2121, 2147483648
    %v2126 = vxor.u32 %v2122, 2147483648
    %v2127 = vmul.f32 %v2125, 1.442695
    %v2128 = vpow.pop %v2127
    %v2129 = vmul.f32 %v2126, 1.442695
    %v2130 = vpow.pop %v2129
    %v2131 = vadd.f32 %v2128, 1.0
    %v2132 = vadd.f32 %v2130, 1.0
    %v2133 = vrcp.pop %v2131
    %v2134 = vmul.f32 1.0, %v2133
    %v2135 = vrcp.pop %v2132
    %v2136 = vmul.f32 1.0, %v2135
    %v2139 = vrot.slane %v2123, 6
    %v2140 = vrot.slane %v2124, 5
    %v2141 = vsel %vm1388, %v2140, %v2139
    %v2145 = vrot.slane %v2134, 6
    %v2146 = vrot.slane %v2136, 5
    %v2147 = vsel %vm1388, %v2146, %v2145
    %v2149 = vsel %vm1384, %v2141, %v2147
    %v2150 = vmul.f32 %v2149, %v2034
    %2152 = vrot.lane.b32.xlu0 %v2149, 64
    %v2153 = vpop.permute.xlu0 %2152
    %v2155 = vmul.f32 %v2149, %v2153
    %2157 = vrot.lane.b32.xlu0 %v2155, 32
    %v2158 = vpop.permute.xlu0 %2157
    %v2160 = vadd.f32 %v2150, %v2158
    %v2161 = vtanh.pop %v2160
    %2163 = vrot.lane.b32.xlu0 %v2161, 64
    %v2164 = vpop.permute.xlu0 %2163
    %v2166 = vmul.f32 %v2149, %v2164
    %2168 = vrot.lane.b32.xlu0 %v2166, 32
    %v2169 = vpop.permute.xlu0 %2168
    %v2170 = vsel %vm307, %v2169, 0
    %2172 = vmatprep.subr.mxu0 0.0
    %2173 = vmatpush1.msra.mxu0 %v1179
    %2174 = vmatprep.subr.mxu0 0.0
    %2175 = vmatpush1.msra.mxu0 %v1180
    %2176 = vmatprep.subr.mxu0 0.0
    %2177 = vmatpush1.msra.mxu0 %v1181
    %2178 = vmatprep.subr.mxu0 0.0
    %2179 = vmatpush1.msra.mxu0 %v1182
    %2180 = vmatprep.subr.mxu0 0.0
    %2181 = vmatpush1.msra.mxu0 0.0
    %2182 = vmatprep.subr.mxu0 0.0
    %2183 = vmatpush1.msra.mxu0 0.0
    %2184 = vmatprep.subr.mxu0 0.0
    %2185 = vmatpush1.msra.mxu0 0.0
    %2186 = vmatprep.subr.mxu0 0.0
    %2187 = vmatpush1.msra.mxu0 0.0
    %2188 = vmatprep.subr.mxu0 0.0
    %2189 = vmatpush1.msra.mxu0 0.0
    %2190 = vmatprep.subr.mxu0 0.0
    %2191 = vmatpush1.msra.mxu0 0.0
    %2192 = vmatprep.subr.mxu0 0.0
    %2193 = vmatpush1.msra.mxu0 0.0
    %2194 = vmatprep.subr.mxu0 0.0
    %2195 = vmatpush1.msra.mxu0 0.0
    %2196 = vmatprep.subr.mxu0 0.0
    %2197 = vmatpush1.msra.mxu0 0.0
    %2198 = vmatprep.subr.mxu0 0.0
    %2199 = vmatpush1.msra.mxu0 0.0
    %2200 = vmatprep.subr.mxu0 0.0
    %2201 = vmatpush1.msra.mxu0 0.0
    %2202 = vmatprep.subr.mxu0 0.0
    %2203 = vmatpush1.msra.mxu0 0.0
    %2204 = vmatprep.subr.mxu0 0.0
    %2205 = vmatpush1.msra.mxu0 0.0
    %2206 = vmatprep.subr.mxu0 0.0
    %2207 = vmatpush1.msra.mxu0 0.0
    %2208 = vmatprep.subr.mxu0 0.0
    %2209 = vmatpush1.msra.mxu0 0.0
    %2210 = vmatprep.subr.mxu0 0.0
    %2211 = vmatpush1.msra.mxu0 0.0
    %2212 = vmatprep.subr.mxu0 0.0
    %2213 = vmatpush1.msra.mxu0 0.0
    %2214 = vmatprep.subr.mxu0 0.0
    %2215 = vmatpush1.msra.mxu0 0.0
    %2216 = vmatprep.subr.mxu0 0.0
    %2217 = vmatpush1.msra.mxu0 0.0
    %2218 = vmatprep.subr.mxu0 0.0
    %2219 = vmatpush1.msra.mxu0 0.0
    %2220 = vmatprep.subr.mxu0 0.0
    %2221 = vmatpush1.msra.mxu0 0.0
    %2222 = vmatprep.subr.mxu0 0.0
    %2223 = vmatpush1.msra.mxu0 0.0
    %2224 = vmatprep.subr.mxu0 0.0
    %2225 = vmatpush1.msra.mxu0 0.0
    %2226 = vmatprep.subr.mxu0 0.0
    %2227 = vmatpush1.msra.mxu0 0.0
    %2228 = vmatprep.subr.mxu0 0.0
    %2229 = vmatpush1.msra.mxu0 0.0
    %2230 = vmatprep.subr.mxu0 0.0
    %2231 = vmatpush1.msra.mxu0 0.0
    %2232 = vmatprep.subr.mxu0 0.0
    %2233 = vmatpush1.msra.mxu0 0.0
    %2234 = vmatprep.subr.mxu0 0.0
    %2235 = vmatpush1.msra.mxu0 0.0
    %2236 = vmatprep.mubr.f32.mxu0 0.0
    %2237 = vmatmul.mubr.f32.gmra.mrb[0].mxu0 %v2170
    %v2238 = vpop.f32.mrb[0].mxu0
    %v2239 = vadd.f32 0.0, %v2238
    %v2240 = vpop.f32.mrb[0].mxu0
    %2241 = vdwg.mxu0
    %v2243 = vrot.slane %v2239, 1
    %v2244 = vrot.slane %v2239, 2
    %v2247 = vadd.f32 %v1261, %v2243
    %v2248 = vadd.f32 %v1275, %v2244
    %v2249 = vtanh.pop %v2247
    %v2250 = vtanh.pop %v2248
    %v2251 = vxor.u32 %v2247, 2147483648
    %v2252 = vxor.u32 %v2248, 2147483648
    %v2253 = vmul.f32 %v2251, 1.442695
    %v2254 = vpow.pop %v2253
    %v2255 = vmul.f32 %v2252, 1.442695
    %v2256 = vpow.pop %v2255
    %v2257 = vadd.f32 %v2254, 1.0
    %v2258 = vadd.f32 %v2256, 1.0
    %v2259 = vrcp.pop %v2257
    %v2260 = vmul.f32 1.0, %v2259
    %v2261 = vrcp.pop %v2258
    %v2262 = vmul.f32 1.0, %v2261
    %v2265 = vrot.slane %v2249, 7
    %v2266 = vrot.slane %v2250, 6
    %v2267 = vsel %vm1388, %v2266, %v2265
    %v2271 = vrot.slane %v2260, 7
    %v2272 = vrot.slane %v2262, 6
    %v2273 = vsel %vm1388, %v2272, %v2271
    %v2275 = vsel %vm1384, %v2267, %v2273
    %v2276 = vmul.f32 %v2275, %v2160
    %2278 = vrot.lane.b32.xlu0 %v2275, 64
    %v2279 = vpop.permute.xlu0 %2278
    %v2281 = vmul.f32 %v2275, %v2279
    %2283 = vrot.lane.b32.xlu0 %v2281, 32
    %v2284 = vpop.permute.xlu0 %2283
    %v2286 = vadd.f32 %v2276, %v2284
    %v2287 = vtanh.pop %v2286
    %2289 = vrot.lane.b32.xlu0 %v2287, 64
    %v2290 = vpop.permute.xlu0 %2289
    %v2292 = vmul.f32 %v2275, %v2290
    %2294 = vrot.lane.b32.xlu0 %v2292, 32
    %v2295 = vpop.permute.xlu0 %2294
    %v2296 = vsel %vm307, %v2295, 0
    %2298 = vmatprep.subr.mxu0 0.0
    %2299 = vmatpush1.msra.mxu0 %v1179
    %2300 = vmatprep.subr.mxu0 0.0
    %2301 = vmatpush1.msra.mxu0 %v1180
    %2302 = vmatprep.subr.mxu0 0.0
    %2303 = vmatpush1.msra.mxu0 %v1181
    %2304 = vmatprep.subr.mxu0 0.0
    %2305 = vmatpush1.msra.mxu0 %v1182
    %2306 = vmatprep.subr.mxu0 0.0
    %2307 = vmatpush1.msra.mxu0 0.0
    %2308 = vmatprep.subr.mxu0 0.0
    %2309 = vmatpush1.msra.mxu0 0.0
    %2310 = vmatprep.subr.mxu0 0.0
    %2311 = vmatpush1.msra.mxu0 0.0
    %2312 = vmatprep.subr.mxu0 0.0
    %2313 = vmatpush1.msra.mxu0 0.0
    %2314 = vmatprep.subr.mxu0 0.0
    %2315 = vmatpush1.msra.mxu0 0.0
    %2316 = vmatprep.subr.mxu0 0.0
    %2317 = vmatpush1.msra.mxu0 0.0
    %2318 = vmatprep.subr.mxu0 0.0
    %2319 = vmatpush1.msra.mxu0 0.0
    %2320 = vmatprep.subr.mxu0 0.0
    %2321 = vmatpush1.msra.mxu0 0.0
    %2322 = vmatprep.subr.mxu0 0.0
    %2323 = vmatpush1.msra.mxu0 0.0
    %2324 = vmatprep.subr.mxu0 0.0
    %2325 = vmatpush1.msra.mxu0 0.0
    %2326 = vmatprep.subr.mxu0 0.0
    %2327 = vmatpush1.msra.mxu0 0.0
    %2328 = vmatprep.subr.mxu0 0.0
    %2329 = vmatpush1.msra.mxu0 0.0
    %2330 = vmatprep.subr.mxu0 0.0
    %2331 = vmatpush1.msra.mxu0 0.0
    %2332 = vmatprep.subr.mxu0 0.0
    %2333 = vmatpush1.msra.mxu0 0.0
    %2334 = vmatprep.subr.mxu0 0.0
    %2335 = vmatpush1.msra.mxu0 0.0
    %2336 = vmatprep.subr.mxu0 0.0
    %2337 = vmatpush1.msra.mxu0 0.0
    %2338 = vmatprep.subr.mxu0 0.0
    %2339 = vmatpush1.msra.mxu0 0.0
    %2340 = vmatprep.subr.mxu0 0.0
    %2341 = vmatpush1.msra.mxu0 0.0
    %2342 = vmatprep.subr.mxu0 0.0
    %2343 = vmatpush1.msra.mxu0 0.0
    %2344 = vmatprep.subr.mxu0 0.0
    %2345 = vmatpush1.msra.mxu0 0.0
    %2346 = vmatprep.subr.mxu0 0.0
    %2347 = vmatpush1.msra.mxu0 0.0
    %2348 = vmatprep.subr.mxu0 0.0
    %2349 = vmatpush1.msra.mxu0 0.0
    %2350 = vmatprep.subr.mxu0 0.0
    %2351 = vmatpush1.msra.mxu0 0.0
    %2352 = vmatprep.subr.mxu0 0.0
    %2353 = vmatpush1.msra.mxu0 0.0
    %2354 = vmatprep.subr.mxu0 0.0
    %2355 = vmatpush1.msra.mxu0 0.0
    %2356 = vmatprep.subr.mxu0 0.0
    %2357 = vmatpush1.msra.mxu0 0.0
    %2358 = vmatprep.subr.mxu0 0.0
    %2359 = vmatpush1.msra.mxu0 0.0
    %2360 = vmatprep.subr.mxu0 0.0
    %2361 = vmatpush1.msra.mxu0 0.0
    %2362 = vmatprep.mubr.f32.mxu0 0.0
    %2363 = vmatmul.mubr.f32.gmra.mrb[0].mxu0 %v2296
    %v2364 = vpop.f32.mrb[0].mxu0
    %v2365 = vadd.f32 0.0, %v2364
    %v2366 = vpop.f32.mrb[0].mxu0
    %2367 = vdwg.mxu0
    %v2369 = vrot.slane %v2365, 1
    %v2372 = vadd.f32 %v1266, %v2365
    %v2373 = vadd.f32 %v1280, %v2369
    %v2374 = vtanh.pop %v2372
    %v2375 = vtanh.pop %v2373
    %v2376 = vxor.u32 %v2372, 2147483648
    %v2377 = vxor.u32 %v2373, 2147483648
    %v2378 = vmul.f32 %v2376, 1.442695
    %v2379 = vpow.pop %v2378
    %v2380 = vmul.f32 %v2377, 1.442695
    %v2381 = vpow.pop %v2380
    %v2382 = vadd.f32 %v2379, 1.0
    %v2383 = vadd.f32 %v2381, 1.0
    %v2384 = vrcp.pop %v2382
    %v2385 = vmul.f32 1.0, %v2384
    %v2386 = vrcp.pop %v2383
    %v2387 = vmul.f32 1.0, %v2386
    %v2390 = vrot.slane %v2375, 7
    %v2391 = vsel %vm1388, %v2390, %v2374
    %v2395 = vrot.slane %v2387, 7
    %v2396 = vsel %vm1388, %v2395, %v2385
    %v2398 = vsel %vm1384, %v2391, %v2396
    %v2399 = vmul.f32 %v2398, %v2286
    %2401 = vrot.lane.b32.xlu0 %v2398, 64
    %v2402 = vpop.permute.xlu0 %2401
    %v2404 = vmul.f32 %v2398, %v2402
    %2406 = vrot.lane.b32.xlu0 %v2404, 32
    %v2407 = vpop.permute.xlu0 %2406
    %v2409 = vadd.f32 %v2399, %v2407
    %v2410 = vtanh.pop %v2409
    %2412 = vrot.lane.b32.xlu0 %v2410, 64
    %v2413 = vpop.permute.xlu0 %2412
    %v2415 = vmul.f32 %v2398, %v2413
    %2417 = vrot.lane.b32.xlu0 %v2415, 32
    %v2418 = vpop.permute.xlu0 %2417
    %v2419 = vsel %vm307, %v2418, 0
    %2421 = vmatprep.subr.mxu0 0.0
    %2422 = vmatpush1.msra.mxu0 %v1179
    %2423 = vmatprep.subr.mxu0 0.0
    %2424 = vmatpush1.msra.mxu0 %v1180
    %2425 = vmatprep.subr.mxu0 0.0
    %2426 = vmatpush1.msra.mxu0 %v1181
    %2427 = vmatprep.subr.mxu0 0.0
    %2428 = vmatpush1.msra.mxu0 %v1182
    %2429 = vmatprep.subr.mxu0 0.0
    %2430 = vmatpush1.msra.mxu0 0.0
    %2431 = vmatprep.subr.mxu0 0.0
    %2432 = vmatpush1.msra.mxu0 0.0
    %2433 = vmatprep.subr.mxu0 0.0
    %2434 = vmatpush1.msra.mxu0 0.0
    %2435 = vmatprep.subr.mxu0 0.0
    %2436 = vmatpush1.msra.mxu0 0.0
    %2437 = vmatprep.subr.mxu0 0.0
    %2438 = vmatpush1.msra.mxu0 0.0
    %2439 = vmatprep.subr.mxu0 0.0
    %2440 = vmatpush1.msra.mxu0 0.0
    %2441 = vmatprep.subr.mxu0 0.0
    %2442 = vmatpush1.msra.mxu0 0.0
    %2443 = vmatprep.subr.mxu0 0.0
    %2444 = vmatpush1.msra.mxu0 0.0
    %2445 = vmatprep.subr.mxu0 0.0
    %2446 = vmatpush1.msra.mxu0 0.0
    %2447 = vmatprep.subr.mxu0 0.0
    %2448 = vmatpush1.msra.mxu0 0.0
    %2449 = vmatprep.subr.mxu0 0.0
    %2450 = vmatpush1.msra.mxu0 0.0
    %2451 = vmatprep.subr.mxu0 0.0
    %2452 = vmatpush1.msra.mxu0 0.0
    %2453 = vmatprep.subr.mxu0 0.0
    %2454 = vmatpush1.msra.mxu0 0.0
    %2455 = vmatprep.subr.mxu0 0.0
    %2456 = vmatpush1.msra.mxu0 0.0
    %2457 = vmatprep.subr.mxu0 0.0
    %2458 = vmatpush1.msra.mxu0 0.0
    %2459 = vmatprep.subr.mxu0 0.0
    %2460 = vmatpush1.msra.mxu0 0.0
    %2461 = vmatprep.subr.mxu0 0.0
    %2462 = vmatpush1.msra.mxu0 0.0
    %2463 = vmatprep.subr.mxu0 0.0
    %2464 = vmatpush1.msra.mxu0 0.0
    %2465 = vmatprep.subr.mxu0 0.0
    %2466 = vmatpush1.msra.mxu0 0.0
    %2467 = vmatprep.subr.mxu0 0.0
    %2468 = vmatpush1.msra.mxu0 0.0
    %2469 = vmatprep.subr.mxu0 0.0
    %2470 = vmatpush1.msra.mxu0 0.0
    %2471 = vmatprep.subr.mxu0 0.0
    %2472 = vmatpush1.msra.mxu0 0.0
    %2473 = vmatprep.subr.mxu0 0.0
    %2474 = vmatpush1.msra.mxu0 0.0
    %2475 = vmatprep.subr.mxu0 0.0
    %2476 = vmatpush1.msra.mxu0 0.0
    %2477 = vmatprep.subr.mxu0 0.0
    %2478 = vmatpush1.msra.mxu0 0.0
    %2479 = vmatprep.subr.mxu0 0.0
    %2480 = vmatpush1.msra.mxu0 0.0
    %2481 = vmatprep.subr.mxu0 0.0
    %2482 = vmatpush1.msra.mxu0 0.0
    %2483 = vmatprep.subr.mxu0 0.0
    %2484 = vmatpush1.msra.mxu0 0.0
    %2485 = vmatprep.mubr.f32.mxu0 0.0
    %2486 = vmatmul.mubr.f32.gmra.mrb[0].mxu0 %v2419
    %v2487 = vpop.f32.mrb[0].mxu0
    %v2488 = vadd.f32 0.0, %v2487
    %v2489 = vpop.f32.mrb[0].mxu0
    %2490 = vdwg.mxu0
    %v2492 = vrot.slane %v2488, 7
    %v2495 = vadd.f32 %v1266, %v2492
    %v2496 = vadd.f32 %v1280, %v2488
    %v2497 = vtanh.pop %v2495
    %v2498 = vtanh.pop %v2496
    %v2499 = vxor.u32 %v2495, 2147483648
    %v2500 = vxor.u32 %v2496, 2147483648
    %v2501 = vmul.f32 %v2499, 1.442695
    %v2502 = vpow.pop %v2501
    %v2503 = vmul.f32 %v2500, 1.442695
    %v2504 = vpow.pop %v2503
    %v2505 = vadd.f32 %v2502, 1.0
    %v2506 = vadd.f32 %v2504, 1.0
    %v2507 = vrcp.pop %v2505
    %v2508 = vmul.f32 1.0, %v2507
    %v2509 = vrcp.pop %v2506
    %v2510 = vmul.f32 1.0, %v2509
    %v2513 = vrot.slane %v2497, 1
    %v2514 = vsel %vm1388, %v2498, %v2513
    %v2518 = vrot.slane %v2508, 1
    %v2519 = vsel %vm1388, %v2510, %v2518
    %v2521 = vsel %vm1384, %v2514, %v2519
    %v2522 = vmul.f32 %v2521, %v2409
    %2524 = vrot.lane.b32.xlu0 %v2521, 64
    %v2525 = vpop.permute.xlu0 %2524
    %v2527 = vmul.f32 %v2521, %v2525
    %2529 = vrot.lane.b32.xlu0 %v2527, 32
    %v2530 = vpop.permute.xlu0 %2529
    %v2532 = vadd.f32 %v2522, %v2530
    %v2533 = vtanh.pop %v2532
    %2535 = vrot.lane.b32.xlu0 %v2533, 64
    %v2536 = vpop.permute.xlu0 %2535
    %v2538 = vmul.f32 %v2521, %v2536
    %2540 = vrot.lane.b32.xlu0 %v2538, 32
    %v2541 = vpop.permute.xlu0 %2540
    %v2542 = vsel %vm307, %v2541, 0
    %2544 = vmatprep.subr.mxu0 0.0
    %2545 = vmatpush1.msra.mxu0 %v1179
    %2546 = vmatprep.subr.mxu0 0.0
    %2547 = vmatpush1.msra.mxu0 %v1180
    %2548 = vmatprep.subr.mxu0 0.0
    %2549 = vmatpush1.msra.mxu0 %v1181
    %2550 = vmatprep.subr.mxu0 0.0
    %2551 = vmatpush1.msra.mxu0 %v1182
    %2552 = vmatprep.subr.mxu0 0.0
    %2553 = vmatpush1.msra.mxu0 0.0
    %2554 = vmatprep.subr.mxu0 0.0
    %2555 = vmatpush1.msra.mxu0 0.0
    %2556 = vmatprep.subr.mxu0 0.0
    %2557 = vmatpush1.msra.mxu0 0.0
    %2558 = vmatprep.subr.mxu0 0.0
    %2559 = vmatpush1.msra.mxu0 0.0
    %2560 = vmatprep.subr.mxu0 0.0
    %2561 = vmatpush1.msra.mxu0 0.0
    %2562 = vmatprep.subr.mxu0 0.0
    %2563 = vmatpush1.msra.mxu0 0.0
    %2564 = vmatprep.subr.mxu0 0.0
    %2565 = vmatpush1.msra.mxu0 0.0
    %2566 = vmatprep.subr.mxu0 0.0
    %2567 = vmatpush1.msra.mxu0 0.0
    %2568 = vmatprep.subr.mxu0 0.0
    %2569 = vmatpush1.msra.mxu0 0.0
    %2570 = vmatprep.subr.mxu0 0.0
    %2571 = vmatpush1.msra.mxu0 0.0
    %2572 = vmatprep.subr.mxu0 0.0
    %2573 = vmatpush1.msra.mxu0 0.0
    %2574 = vmatprep.subr.mxu0 0.0
    %2575 = vmatpush1.msra.mxu0 0.0
    %2576 = vmatprep.subr.mxu0 0.0
    %2577 = vmatpush1.msra.mxu0 0.0
    %2578 = vmatprep.subr.mxu0 0.0
    %2579 = vmatpush1.msra.mxu0 0.0
    %2580 = vmatprep.subr.mxu0 0.0
    %2581 = vmatpush1.msra.mxu0 0.0
    %2582 = vmatprep.subr.mxu0 0.0
    %2583 = vmatpush1.msra.mxu0 0.0
    %2584 = vmatprep.subr.mxu0 0.0
    %2585 = vmatpush1.msra.mxu0 0.0
    %2586 = vmatprep.subr.mxu0 0.0
    %2587 = vmatpush1.msra.mxu0 0.0
    %2588 = vmatprep.subr.mxu0 0.0
    %2589 = vmatpush1.msra.mxu0 0.0
    %2590 = vmatprep.subr.mxu0 0.0
    %2591 = vmatpush1.msra.mxu0 0.0
    %2592 = vmatprep.subr.mxu0 0.0
    %2593 = vmatpush1.msra.mxu0 0.0
    %2594 = vmatprep.subr.mxu0 0.0
    %2595 = vmatpush1.msra.mxu0 0.0
    %2596 = vmatprep.subr.mxu0 0.0
    %2597 = vmatpush1.msra.mxu0 0.0
    %2598 = vmatprep.subr.mxu0 0.0
    %2599 = vmatpush1.msra.mxu0 0.0
    %2600 = vmatprep.subr.mxu0 0.0
    %2601 = vmatpush1.msra.mxu0 0.0
    %2602 = vmatprep.subr.mxu0 0.0
    %2603 = vmatpush1.msra.mxu0 0.0
    %2604 = vmatprep.subr.mxu0 0.0
    %2605 = vmatpush1.msra.mxu0 0.0
    %2606 = vmatprep.subr.mxu0 0.0
    %2607 = vmatpush1.msra.mxu0 0.0
    %2608 = vmatprep.mubr.f32.mxu0 0.0
    %2609 = vmatmul.mubr.f32.gmra.mrb[0].mxu0 %v2542
    %v2610 = vpop.f32.mrb[0].mxu0
    %v2611 = vadd.f32 0.0, %v2610
    %v2612 = vpop.f32.mrb[0].mxu0
    %2613 = vdwg.mxu0
    %v2615 = vrot.slane %v2611, 6
    %v2616 = vrot.slane %v2611, 7
    %v2619 = vadd.f32 %v1266, %v2615
    %v2620 = vadd.f32 %v1280, %v2616
    %v2621 = vtanh.pop %v2619
    %v2622 = vtanh.pop %v2620
    %v2623 = vxor.u32 %v2619, 2147483648
    %v2624 = vxor.u32 %v2620, 2147483648
    %v2625 = vmul.f32 %v2623, 1.442695
    %v2626 = vpow.pop %v2625
    %v2627 = vmul.f32 %v2624, 1.442695
    %v2628 = vpow.pop %v2627
    %v2629 = vadd.f32 %v2626, 1.0
    %v2630 = vadd.f32 %v2628, 1.0
    %v2631 = vrcp.pop %v2629
    %v2632 = vmul.f32 1.0, %v2631
    %v2633 = vrcp.pop %v2630
    %v2634 = vmul.f32 1.0, %v2633
    %v2637 = vrot.slane %v2621, 2
    %v2638 = vrot.slane %v2622, 1
    %v2639 = vsel %vm1388, %v2638, %v2637
    %v2643 = vrot.slane %v2632, 2
    %v2644 = vrot.slane %v2634, 1
    %v2645 = vsel %vm1388, %v2644, %v2643
    %v2647 = vsel %vm1384, %v2639, %v2645
    %v2648 = vmul.f32 %v2647, %v2532
    %2650 = vrot.lane.b32.xlu0 %v2647, 64
    %v2651 = vpop.permute.xlu0 %2650
    %v2653 = vmul.f32 %v2647, %v2651
    %2655 = vrot.lane.b32.xlu0 %v2653, 32
    %v2656 = vpop.permute.xlu0 %2655
    %v2658 = vadd.f32 %v2648, %v2656
    %v2659 = vtanh.pop %v2658
    %2661 = vrot.lane.b32.xlu0 %v2659, 64
    %v2662 = vpop.permute.xlu0 %2661
    %v2664 = vmul.f32 %v2647, %v2662
    %2666 = vrot.lane.b32.xlu0 %v2664, 32
    %v2667 = vpop.permute.xlu0 %2666
    %v2668 = vsel %vm307, %v2667, 0
    %2670 = vmatprep.subr.mxu0 0.0
    %2671 = vmatpush1.msra.mxu0 %v1179
    %2672 = vmatprep.subr.mxu0 0.0
    %2673 = vmatpush1.msra.mxu0 %v1180
    %2674 = vmatprep.subr.mxu0 0.0
    %2675 = vmatpush1.msra.mxu0 %v1181
    %2676 = vmatprep.subr.mxu0 0.0
    %2677 = vmatpush1.msra.mxu0 %v1182
    %2678 = vmatprep.subr.mxu0 0.0
    %2679 = vmatpush1.msra.mxu0 0.0
    %2680 = vmatprep.subr.mxu0 0.0
    %2681 = vmatpush1.msra.mxu0 0.0
    %2682 = vmatprep.subr.mxu0 0.0
    %2683 = vmatpush1.msra.mxu0 0.0
    %2684 = vmatprep.subr.mxu0 0.0
    %2685 = vmatpush1.msra.mxu0 0.0
    %2686 = vmatprep.subr.mxu0 0.0
    %2687 = vmatpush1.msra.mxu0 0.0
    %2688 = vmatprep.subr.mxu0 0.0
    %2689 = vmatpush1.msra.mxu0 0.0
    %2690 = vmatprep.subr.mxu0 0.0
    %2691 = vmatpush1.msra.mxu0 0.0
    %2692 = vmatprep.subr.mxu0 0.0
    %2693 = vmatpush1.msra.mxu0 0.0
    %2694 = vmatprep.subr.mxu0 0.0
    %2695 = vmatpush1.msra.mxu0 0.0
    %2696 = vmatprep.subr.mxu0 0.0
    %2697 = vmatpush1.msra.mxu0 0.0
    %2698 = vmatprep.subr.mxu0 0.0
    %2699 = vmatpush1.msra.mxu0 0.0
    %2700 = vmatprep.subr.mxu0 0.0
    %2701 = vmatpush1.msra.mxu0 0.0
    %2702 = vmatprep.subr.mxu0 0.0
    %2703 = vmatpush1.msra.mxu0 0.0
    %2704 = vmatprep.subr.mxu0 0.0
    %2705 = vmatpush1.msra.mxu0 0.0
    %2706 = vmatprep.subr.mxu0 0.0
    %2707 = vmatpush1.msra.mxu0 0.0
    %2708 = vmatprep.subr.mxu0 0.0
    %2709 = vmatpush1.msra.mxu0 0.0
    %2710 = vmatprep.subr.mxu0 0.0
    %2711 = vmatpush1.msra.mxu0 0.0
    %2712 = vmatprep.subr.mxu0 0.0
    %2713 = vmatpush1.msra.mxu0 0.0
    %2714 = vmatprep.subr.mxu0 0.0
    %2715 = vmatpush1.msra.mxu0 0.0
    %2716 = vmatprep.subr.mxu0 0.0
    %2717 = vmatpush1.msra.mxu0 0.0
    %2718 = vmatprep.subr.mxu0 0.0
    %2719 = vmatpush1.msra.mxu0 0.0
    %2720 = vmatprep.subr.mxu0 0.0
    %2721 = vmatpush1.msra.mxu0 0.0
    %2722 = vmatprep.subr.mxu0 0.0
    %2723 = vmatpush1.msra.mxu0 0.0
    %2724 = vmatprep.subr.mxu0 0.0
    %2725 = vmatpush1.msra.mxu0 0.0
    %2726 = vmatprep.subr.mxu0 0.0
    %2727 = vmatpush1.msra.mxu0 0.0
    %2728 = vmatprep.subr.mxu0 0.0
    %2729 = vmatpush1.msra.mxu0 0.0
    %2730 = vmatprep.subr.mxu0 0.0
    %2731 = vmatpush1.msra.mxu0 0.0
    %2732 = vmatprep.subr.mxu0 0.0
    %2733 = vmatpush1.msra.mxu0 0.0
    %2734 = vmatprep.mubr.f32.mxu0 0.0
    %2735 = vmatmul.mubr.f32.gmra.mrb[0].mxu0 %v2668
    %v2736 = vpop.f32.mrb[0].mxu0
    %v2737 = vadd.f32 0.0, %v2736
    %v2738 = vpop.f32.mrb[0].mxu0
    %2739 = vdwg.mxu0
    %v2741 = vrot.slane %v2737, 5
    %v2742 = vrot.slane %v2737, 6
    %v2745 = vadd.f32 %v1266, %v2741
    %v2746 = vadd.f32 %v1280, %v2742
    %v2747 = vtanh.pop %v2745
    %v2748 = vtanh.pop %v2746
    %v2749 = vxor.u32 %v2745, 2147483648
    %v2750 = vxor.u32 %v2746, 2147483648
    %v2751 = vmul.f32 %v2749, 1.442695
    %v2752 = vpow.pop %v2751
    %v2753 = vmul.f32 %v2750, 1.442695
    %v2754 = vpow.pop %v2753
    %v2755 = vadd.f32 %v2752, 1.0
    %v2756 = vadd.f32 %v2754, 1.0
    %v2757 = vrcp.pop %v2755
    %v2758 = vmul.f32 1.0, %v2757
    %v2759 = vrcp.pop %v2756
    %v2760 = vmul.f32 1.0, %v2759
    %v2763 = vrot.slane %v2747, 3
    %v2764 = vrot.slane %v2748, 2
    %v2765 = vsel %vm1388, %v2764, %v2763
    %v2769 = vrot.slane %v2758, 3
    %v2770 = vrot.slane %v2760, 2
    %v2771 = vsel %vm1388, %v2770, %v2769
    %v2773 = vsel %vm1384, %v2765, %v2771
    %v2774 = vmul.f32 %v2773, %v2658
    %2776 = vrot.lane.b32.xlu0 %v2773, 64
    %v2777 = vpop.permute.xlu0 %2776
    %v2779 = vmul.f32 %v2773, %v2777
    %2781 = vrot.lane.b32.xlu0 %v2779, 32
    %v2782 = vpop.permute.xlu0 %2781
    %v2784 = vadd.f32 %v2774, %v2782
    %v2785 = vtanh.pop %v2784
    %2787 = vrot.lane.b32.xlu0 %v2785, 64
    %v2788 = vpop.permute.xlu0 %2787
    %v2790 = vmul.f32 %v2773, %v2788
    %2792 = vrot.lane.b32.xlu0 %v2790, 32
    %v2793 = vpop.permute.xlu0 %2792
    %v2794 = vsel %vm307, %v2793, 0
    %2796 = vmatprep.subr.mxu0 0.0
    %2797 = vmatpush1.msra.mxu0 %v1179
    %2798 = vmatprep.subr.mxu0 0.0
    %2799 = vmatpush1.msra.mxu0 %v1180
    %2800 = vmatprep.subr.mxu0 0.0
    %2801 = vmatpush1.msra.mxu0 %v1181
    %2802 = vmatprep.subr.mxu0 0.0
    %2803 = vmatpush1.msra.mxu0 %v1182
    %2804 = vmatprep.subr.mxu0 0.0
    %2805 = vmatpush1.msra.mxu0 0.0
    %2806 = vmatprep.subr.mxu0 0.0
    %2807 = vmatpush1.msra.mxu0 0.0
    %2808 = vmatprep.subr.mxu0 0.0
    %2809 = vmatpush1.msra.mxu0 0.0
    %2810 = vmatprep.subr.mxu0 0.0
    %2811 = vmatpush1.msra.mxu0 0.0
    %2812 = vmatprep.subr.mxu0 0.0
    %2813 = vmatpush1.msra.mxu0 0.0
    %2814 = vmatprep.subr.mxu0 0.0
    %2815 = vmatpush1.msra.mxu0 0.0
    %2816 = vmatprep.subr.mxu0 0.0
    %2817 = vmatpush1.msra.mxu0 0.0
    %2818 = vmatprep.subr.mxu0 0.0
    %2819 = vmatpush1.msra.mxu0 0.0
    %2820 = vmatprep.subr.mxu0 0.0
    %2821 = vmatpush1.msra.mxu0 0.0
    %2822 = vmatprep.subr.mxu0 0.0
    %2823 = vmatpush1.msra.mxu0 0.0
    %2824 = vmatprep.subr.mxu0 0.0
    %2825 = vmatpush1.msra.mxu0 0.0
    %2826 = vmatprep.subr.mxu0 0.0
    %2827 = vmatpush1.msra.mxu0 0.0
    %2828 = vmatprep.subr.mxu0 0.0
    %2829 = vmatpush1.msra.mxu0 0.0
    %2830 = vmatprep.subr.mxu0 0.0
    %2831 = vmatpush1.msra.mxu0 0.0
    %2832 = vmatprep.subr.mxu0 0.0
    %2833 = vmatpush1.msra.mxu0 0.0
    %2834 = vmatprep.subr.mxu0 0.0
    %2835 = vmatpush1.msra.mxu0 0.0
    %2836 = vmatprep.subr.mxu0 0.0
    %2837 = vmatpush1.msra.mxu0 0.0
    %2838 = vmatprep.subr.mxu0 0.0
    %2839 = vmatpush1.msra.mxu0 0.0
    %2840 = vmatprep.subr.mxu0 0.0
    %2841 = vmatpush1.msra.mxu0 0.0
    %2842 = vmatprep.subr.mxu0 0.0
    %2843 = vmatpush1.msra.mxu0 0.0
    %2844 = vmatprep.subr.mxu0 0.0
    %2845 = vmatpush1.msra.mxu0 0.0
    %2846 = vmatprep.subr.mxu0 0.0
    %2847 = vmatpush1.msra.mxu0 0.0
    %2848 = vmatprep.subr.mxu0 0.0
    %2849 = vmatpush1.msra.mxu0 0.0
    %2850 = vmatprep.subr.mxu0 0.0
    %2851 = vmatpush1.msra.mxu0 0.0
    %2852 = vmatprep.subr.mxu0 0.0
    %2853 = vmatpush1.msra.mxu0 0.0
    %2854 = vmatprep.subr.mxu0 0.0
    %2855 = vmatpush1.msra.mxu0 0.0
    %2856 = vmatprep.subr.mxu0 0.0
    %2857 = vmatpush1.msra.mxu0 0.0
    %2858 = vmatprep.subr.mxu0 0.0
    %2859 = vmatpush1.msra.mxu0 0.0
    %2860 = vmatprep.mubr.f32.mxu0 0.0
    %2861 = vmatmul.mubr.f32.gmra.mrb[0].mxu0 %v2794
    %v2862 = vpop.f32.mrb[0].mxu0
    %v2863 = vadd.f32 0.0, %v2862
    %v2864 = vpop.f32.mrb[0].mxu0
    %2865 = vdwg.mxu0
    %v2867 = vrot.slane %v2863, 4
    %v2868 = vrot.slane %v2863, 5
    %v2871 = vadd.f32 %v1266, %v2867
    %v2872 = vadd.f32 %v1280, %v2868
    %v2873 = vtanh.pop %v2871
    %v2874 = vtanh.pop %v2872
    %v2875 = vxor.u32 %v2871, 2147483648
    %v2876 = vxor.u32 %v2872, 2147483648
    %v2877 = vmul.f32 %v2875, 1.442695
    %v2878 = vpow.pop %v2877
    %v2879 = vmul.f32 %v2876, 1.442695
    %v2880 = vpow.pop %v2879
    %v2881 = vadd.f32 %v2878, 1.0
    %v2882 = vadd.f32 %v2880, 1.0
    %v2883 = vrcp.pop %v2881
    %v2884 = vmul.f32 1.0, %v2883
    %v2885 = vrcp.pop %v2882
    %v2886 = vmul.f32 1.0, %v2885
    %v2889 = vrot.slane %v2873, 4
    %v2890 = vrot.slane %v2874, 3
    %v2891 = vsel %vm1388, %v2890, %v2889
    %v2895 = vrot.slane %v2884, 4
    %v2896 = vrot.slane %v2886, 3
    %v2897 = vsel %vm1388, %v2896, %v2895
    %v2899 = vsel %vm1384, %v2891, %v2897
    %v2900 = vmul.f32 %v2899, %v2784
    %2902 = vrot.lane.b32.xlu0 %v2899, 64
    %v2903 = vpop.permute.xlu0 %2902
    %v2905 = vmul.f32 %v2899, %v2903
    %2907 = vrot.lane.b32.xlu0 %v2905, 32
    %v2908 = vpop.permute.xlu0 %2907
    %v2910 = vadd.f32 %v2900, %v2908
    %v2911 = vtanh.pop %v2910
    %2913 = vrot.lane.b32.xlu0 %v2911, 64
    %v2914 = vpop.permute.xlu0 %2913
    %v2916 = vmul.f32 %v2899, %v2914
    %2918 = vrot.lane.b32.xlu0 %v2916, 32
    %v2919 = vpop.permute.xlu0 %2918
    %v2920 = vsel %vm307, %v2919, 0
    %2922 = vmatprep.subr.mxu0 0.0
    %2923 = vmatpush1.msra.mxu0 %v1179
    %2924 = vmatprep.subr.mxu0 0.0
    %2925 = vmatpush1.msra.mxu0 %v1180
    %2926 = vmatprep.subr.mxu0 0.0
    %2927 = vmatpush1.msra.mxu0 %v1181
    %2928 = vmatprep.subr.mxu0 0.0
    %2929 = vmatpush1.msra.mxu0 %v1182
    %2930 = vmatprep.subr.mxu0 0.0
    %2931 = vmatpush1.msra.mxu0 0.0
    %2932 = vmatprep.subr.mxu0 0.0
    %2933 = vmatpush1.msra.mxu0 0.0
    %2934 = vmatprep.subr.mxu0 0.0
    %2935 = vmatpush1.msra.mxu0 0.0
    %2936 = vmatprep.subr.mxu0 0.0
    %2937 = vmatpush1.msra.mxu0 0.0
    %2938 = vmatprep.subr.mxu0 0.0
    %2939 = vmatpush1.msra.mxu0 0.0
    %2940 = vmatprep.subr.mxu0 0.0
    %2941 = vmatpush1.msra.mxu0 0.0
    %2942 = vmatprep.subr.mxu0 0.0
    %2943 = vmatpush1.msra.mxu0 0.0
    %2944 = vmatprep.subr.mxu0 0.0
    %2945 = vmatpush1.msra.mxu0 0.0
    %2946 = vmatprep.subr.mxu0 0.0
    %2947 = vmatpush1.msra.mxu0 0.0
    %2948 = vmatprep.subr.mxu0 0.0
    %2949 = vmatpush1.msra.mxu0 0.0
    %2950 = vmatprep.subr.mxu0 0.0
    %2951 = vmatpush1.msra.mxu0 0.0
    %2952 = vmatprep.subr.mxu0 0.0
    %2953 = vmatpush1.msra.mxu0 0.0
    %2954 = vmatprep.subr.mxu0 0.0
    %2955 = vmatpush1.msra.mxu0 0.0
    %2956 = vmatprep.subr.mxu0 0.0
    %2957 = vmatpush1.msra.mxu0 0.0
    %2958 = vmatprep.subr.mxu0 0.0
    %2959 = vmatpush1.msra.mxu0 0.0
    %2960 = vmatprep.subr.mxu0 0.0
    %2961 = vmatpush1.msra.mxu0 0.0
    %2962 = vmatprep.subr.mxu0 0.0
    %2963 = vmatpush1.msra.mxu0 0.0
    %2964 = vmatprep.subr.mxu0 0.0
    %2965 = vmatpush1.msra.mxu0 0.0
    %2966 = vmatprep.subr.mxu0 0.0
    %2967 = vmatpush1.msra.mxu0 0.0
    %2968 = vmatprep.subr.mxu0 0.0
    %2969 = vmatpush1.msra.mxu0 0.0
    %2970 = vmatprep.subr.mxu0 0.0
    %2971 = vmatpush1.msra.mxu0 0.0
    %2972 = vmatprep.subr.mxu0 0.0
    %2973 = vmatpush1.msra.mxu0 0.0
    %2974 = vmatprep.subr.mxu0 0.0
    %2975 = vmatpush1.msra.mxu0 0.0
    %2976 = vmatprep.subr.mxu0 0.0
    %2977 = vmatpush1.msra.mxu0 0.0
    %2978 = vmatprep.subr.mxu0 0.0
    %2979 = vmatpush1.msra.mxu0 0.0
    %2980 = vmatprep.subr.mxu0 0.0
    %2981 = vmatpush1.msra.mxu0 0.0
    %2982 = vmatprep.subr.mxu0 0.0
    %2983 = vmatpush1.msra.mxu0 0.0
    %2984 = vmatprep.subr.mxu0 0.0
    %2985 = vmatpush1.msra.mxu0 0.0
    %2986 = vmatprep.mubr.f32.mxu0 0.0
    %2987 = vmatmul.mubr.f32.gmra.mrb[0].mxu0 %v2920
    %v2988 = vpop.f32.mrb[0].mxu0
    %v2989 = vadd.f32 0.0, %v2988
    %v2990 = vpop.f32.mrb[0].mxu0
    %2991 = vdwg.mxu0
    %v2993 = vrot.slane %v2989, 3
    %v2994 = vrot.slane %v2989, 4
    %v2997 = vadd.f32 %v1266, %v2993
    %v2998 = vadd.f32 %v1280, %v2994
    %v2999 = vtanh.pop %v2997
    %v3000 = vtanh.pop %v2998
    %v3001 = vxor.u32 %v2997, 2147483648
    %v3002 = vxor.u32 %v2998, 2147483648
    %v3003 = vmul.f32 %v3001, 1.442695
    %v3004 = vpow.pop %v3003
    %v3005 = vmul.f32 %v3002, 1.442695
    %v3006 = vpow.pop %v3005
    %v3007 = vadd.f32 %v3004, 1.0
    %v3008 = vadd.f32 %v3006, 1.0
    %v3009 = vrcp.pop %v3007
    %v3010 = vmul.f32 1.0, %v3009
    %v3011 = vrcp.pop %v3008
    %v3012 = vmul.f32 1.0, %v3011
    %v3015 = vrot.slane %v2999, 5
    %v3016 = vrot.slane %v3000, 4
    %v3017 = vsel %vm1388, %v3016, %v3015
    %v3021 = vrot.slane %v3010, 5
    %v3022 = vrot.slane %v3012, 4
    %v3023 = vsel %vm1388, %v3022, %v3021
    %v3025 = vsel %vm1384, %v3017, %v3023
    %v3026 = vmul.f32 %v3025, %v2910
    %3028 = vrot.lane.b32.xlu0 %v3025, 64
    %v3029 = vpop.permute.xlu0 %3028
    %v3031 = vmul.f32 %v3025, %v3029
    %3033 = vrot.lane.b32.xlu0 %v3031, 32
    %v3034 = vpop.permute.xlu0 %3033
    %v3036 = vadd.f32 %v3026, %v3034
    %v3037 = vtanh.pop %v3036
    %3039 = vrot.lane.b32.xlu0 %v3037, 64
    %v3040 = vpop.permute.xlu0 %3039
    %v3042 = vmul.f32 %v3025, %v3040
    %3044 = vrot.lane.b32.xlu0 %v3042, 32
    %v3045 = vpop.permute.xlu0 %3044
    %v3046 = vsel %vm307, %v3045, 0
    %3048 = vmatprep.subr.mxu0 0.0
    %3049 = vmatpush1.msra.mxu0 %v1179
    %3050 = vmatprep.subr.mxu0 0.0
    %3051 = vmatpush1.msra.mxu0 %v1180
    %3052 = vmatprep.subr.mxu0 0.0
    %3053 = vmatpush1.msra.mxu0 %v1181
    %3054 = vmatprep.subr.mxu0 0.0
    %3055 = vmatpush1.msra.mxu0 %v1182
    %3056 = vmatprep.subr.mxu0 0.0
    %3057 = vmatpush1.msra.mxu0 0.0
    %3058 = vmatprep.subr.mxu0 0.0
    %3059 = vmatpush1.msra.mxu0 0.0
    %3060 = vmatprep.subr.mxu0 0.0
    %3061 = vmatpush1.msra.mxu0 0.0
    %3062 = vmatprep.subr.mxu0 0.0
    %3063 = vmatpush1.msra.mxu0 0.0
    %3064 = vmatprep.subr.mxu0 0.0
    %3065 = vmatpush1.msra.mxu0 0.0
    %3066 = vmatprep.subr.mxu0 0.0
    %3067 = vmatpush1.msra.mxu0 0.0
    %3068 = vmatprep.subr.mxu0 0.0
    %3069 = vmatpush1.msra.mxu0 0.0
    %3070 = vmatprep.subr.mxu0 0.0
    %3071 = vmatpush1.msra.mxu0 0.0
    %3072 = vmatprep.subr.mxu0 0.0
    %3073 = vmatpush1.msra.mxu0 0.0
    %3074 = vmatprep.subr.mxu0 0.0
    %3075 = vmatpush1.msra.mxu0 0.0
    %3076 = vmatprep.subr.mxu0 0.0
    %3077 = vmatpush1.msra.mxu0 0.0
    %3078 = vmatprep.subr.mxu0 0.0
    %3079 = vmatpush1.msra.mxu0 0.0
    %3080 = vmatprep.subr.mxu0 0.0
    %3081 = vmatpush1.msra.mxu0 0.0
    %3082 = vmatprep.subr.mxu0 0.0
    %3083 = vmatpush1.msra.mxu0 0.0
    %3084 = vmatprep.subr.mxu0 0.0
    %3085 = vmatpush1.msra.mxu0 0.0
    %3086 = vmatprep.subr.mxu0 0.0
    %3087 = vmatpush1.msra.mxu0 0.0
    %3088 = vmatprep.subr.mxu0 0.0
    %3089 = vmatpush1.msra.mxu0 0.0
    %3090 = vmatprep.subr.mxu0 0.0
    %3091 = vmatpush1.msra.mxu0 0.0
    %3092 = vmatprep.subr.mxu0 0.0
    %3093 = vmatpush1.msra.mxu0 0.0
    %3094 = vmatprep.subr.mxu0 0.0
    %3095 = vmatpush1.msra.mxu0 0.0
    %3096 = vmatprep.subr.mxu0 0.0
    %3097 = vmatpush1.msra.mxu0 0.0
    %3098 = vmatprep.subr.mxu0 0.0
    %3099 = vmatpush1.msra.mxu0 0.0
    %3100 = vmatprep.subr.mxu0 0.0
    %3101 = vmatpush1.msra.mxu0 0.0
    %3102 = vmatprep.subr.mxu0 0.0
    %3103 = vmatpush1.msra.mxu0 0.0
    %3104 = vmatprep.subr.mxu0 0.0
    %3105 = vmatpush1.msra.mxu0 0.0
    %3106 = vmatprep.subr.mxu0 0.0
    %3107 = vmatpush1.msra.mxu0 0.0
    %3108 = vmatprep.subr.mxu0 0.0
    %3109 = vmatpush1.msra.mxu0 0.0
    %3110 = vmatprep.subr.mxu0 0.0
    %3111 = vmatpush1.msra.mxu0 0.0
    %3112 = vmatprep.mubr.f32.mxu0 0.0
    %3113 = vmatmul.mubr.f32.gmra.mrb[0].mxu0 %v3046
    %v3114 = vpop.f32.mrb[0].mxu0
    %v3115 = vadd.f32 0.0, %v3114
    %v3116 = vpop.f32.mrb[0].mxu0
    %3117 = vdwg.mxu0
    %v3119 = vrot.slane %v3115, 2
    %v3120 = vrot.slane %v3115, 3
    %v3123 = vadd.f32 %v1266, %v3119
    %v3124 = vadd.f32 %v1280, %v3120
    %v3125 = vtanh.pop %v3123
    %v3126 = vtanh.pop %v3124
    %v3127 = vxor.u32 %v3123, 2147483648
    %v3128 = vxor.u32 %v3124, 2147483648
    %v3129 = vmul.f32 %v3127, 1.442695
    %v3130 = vpow.pop %v3129
    %v3131 = vmul.f32 %v3128, 1.442695
    %v3132 = vpow.pop %v3131
    %v3133 = vadd.f32 %v3130, 1.0
    %v3134 = vadd.f32 %v3132, 1.0
    %v3135 = vrcp.pop %v3133
    %v3136 = vmul.f32 1.0, %v3135
    %v3137 = vrcp.pop %v3134
    %v3138 = vmul.f32 1.0, %v3137
    %v3141 = vrot.slane %v3125, 6
    %v3142 = vrot.slane %v3126, 5
    %v3143 = vsel %vm1388, %v3142, %v3141
    %v3147 = vrot.slane %v3136, 6
    %v3148 = vrot.slane %v3138, 5
    %v3149 = vsel %vm1388, %v3148, %v3147
    %v3151 = vsel %vm1384, %v3143, %v3149
    %v3152 = vmul.f32 %v3151, %v3036
    %3154 = vrot.lane.b32.xlu0 %v3151, 64
    %v3155 = vpop.permute.xlu0 %3154
    %v3157 = vmul.f32 %v3151, %v3155
    %3159 = vrot.lane.b32.xlu0 %v3157, 32
    %v3160 = vpop.permute.xlu0 %3159
    %v3162 = vadd.f32 %v3152, %v3160
    %v3163 = vtanh.pop %v3162
    %3165 = vrot.lane.b32.xlu0 %v3163, 64
    %v3166 = vpop.permute.xlu0 %3165
    %v3168 = vmul.f32 %v3151, %v3166
    %3170 = vrot.lane.b32.xlu0 %v3168, 32
    %v3171 = vpop.permute.xlu0 %3170
    %v3172 = vsel %vm307, %v3171, 0
    %3174 = vmatprep.subr.mxu0 0.0
    %3175 = vmatpush1.msra.mxu0 %v1179
    %3176 = vmatprep.subr.mxu0 0.0
    %3177 = vmatpush1.msra.mxu0 %v1180
    %3178 = vmatprep.subr.mxu0 0.0
    %3179 = vmatpush1.msra.mxu0 %v1181
    %3180 = vmatprep.subr.mxu0 0.0
    %3181 = vmatpush1.msra.mxu0 %v1182
    %3182 = vmatprep.subr.mxu0 0.0
    %3183 = vmatpush1.msra.mxu0 0.0
    %3184 = vmatprep.subr.mxu0 0.0
    %3185 = vmatpush1.msra.mxu0 0.0
    %3186 = vmatprep.subr.mxu0 0.0
    %3187 = vmatpush1.msra.mxu0 0.0
    %3188 = vmatprep.subr.mxu0 0.0
    %3189 = vmatpush1.msra.mxu0 0.0
    %3190 = vmatprep.subr.mxu0 0.0
    %3191 = vmatpush1.msra.mxu0 0.0
    %3192 = vmatprep.subr.mxu0 0.0
    %3193 = vmatpush1.msra.mxu0 0.0
    %3194 = vmatprep.subr.mxu0 0.0
    %3195 = vmatpush1.msra.mxu0 0.0
    %3196 = vmatprep.subr.mxu0 0.0
    %3197 = vmatpush1.msra.mxu0 0.0
    %3198 = vmatprep.subr.mxu0 0.0
    %3199 = vmatpush1.msra.mxu0 0.0
    %3200 = vmatprep.subr.mxu0 0.0
    %3201 = vmatpush1.msra.mxu0 0.0
    %3202 = vmatprep.subr.mxu0 0.0
    %3203 = vmatpush1.msra.mxu0 0.0
    %3204 = vmatprep.subr.mxu0 0.0
    %3205 = vmatpush1.msra.mxu0 0.0
    %3206 = vmatprep.subr.mxu0 0.0
    %3207 = vmatpush1.msra.mxu0 0.0
    %3208 = vmatprep.subr.mxu0 0.0
    %3209 = vmatpush1.msra.mxu0 0.0
    %3210 = vmatprep.subr.mxu0 0.0
    %3211 = vmatpush1.msra.mxu0 0.0
    %3212 = vmatprep.subr.mxu0 0.0
    %3213 = vmatpush1.msra.mxu0 0.0
    %3214 = vmatprep.subr.mxu0 0.0
    %3215 = vmatpush1.msra.mxu0 0.0
    %3216 = vmatprep.subr.mxu0 0.0
    %3217 = vmatpush1.msra.mxu0 0.0
    %3218 = vmatprep.subr.mxu0 0.0
    %3219 = vmatpush1.msra.mxu0 0.0
    %3220 = vmatprep.subr.mxu0 0.0
    %3221 = vmatpush1.msra.mxu0 0.0
    %3222 = vmatprep.subr.mxu0 0.0
    %3223 = vmatpush1.msra.mxu0 0.0
    %3224 = vmatprep.subr.mxu0 0.0
    %3225 = vmatpush1.msra.mxu0 0.0
    %3226 = vmatprep.subr.mxu0 0.0
    %3227 = vmatpush1.msra.mxu0 0.0
    %3228 = vmatprep.subr.mxu0 0.0
    %3229 = vmatpush1.msra.mxu0 0.0
    %3230 = vmatprep.subr.mxu0 0.0
    %3231 = vmatpush1.msra.mxu0 0.0
    %3232 = vmatprep.subr.mxu0 0.0
    %3233 = vmatpush1.msra.mxu0 0.0
    %3234 = vmatprep.subr.mxu0 0.0
    %3235 = vmatpush1.msra.mxu0 0.0
    %3236 = vmatprep.subr.mxu0 0.0
    %3237 = vmatpush1.msra.mxu0 0.0
    %3238 = vmatprep.mubr.f32.mxu0 0.0
    %3239 = vmatmul.mubr.f32.gmra.mrb[0].mxu0 %v3172
    %v3240 = vpop.f32.mrb[0].mxu0
    %v3241 = vadd.f32 0.0, %v3240
    %v3242 = vpop.f32.mrb[0].mxu0
    %3243 = vdwg.mxu0
    %v3245 = vrot.slane %v3241, 1
    %v3246 = vrot.slane %v3241, 2
    %v3249 = vadd.f32 %v1266, %v3245
    %v3250 = vadd.f32 %v1280, %v3246
    %v3251 = vtanh.pop %v3249
    %v3252 = vtanh.pop %v3250
    %v3253 = vxor.u32 %v3249, 2147483648
    %v3254 = vxor.u32 %v3250, 2147483648
    %v3255 = vmul.f32 %v3253, 1.442695
    %v3256 = vpow.pop %v3255
    %v3257 = vmul.f32 %v3254, 1.442695
    %v3258 = vpow.pop %v3257
    %v3259 = vadd.f32 %v3256, 1.0
    %v3260 = vadd.f32 %v3258, 1.0
    %v3261 = vrcp.pop %v3259
    %v3262 = vmul.f32 1.0, %v3261
    %v3263 = vrcp.pop %v3260
    %v3264 = vmul.f32 1.0, %v3263
    %v3267 = vrot.slane %v3251, 7
    %v3268 = vrot.slane %v3252, 6
    %v3269 = vsel %vm1388, %v3268, %v3267
    %v3273 = vrot.slane %v3262, 7
    %v3274 = vrot.slane %v3264, 6
    %v3275 = vsel %vm1388, %v3274, %v3273
    %v3277 = vsel %vm1384, %v3269, %v3275
    %v3278 = vmul.f32 %v3277, %v3162
    %3280 = vrot.lane.b32.xlu0 %v3277, 64
    %v3281 = vpop.permute.xlu0 %3280
    %v3283 = vmul.f32 %v3277, %v3281
    %3285 = vrot.lane.b32.xlu0 %v3283, 32
    %v3286 = vpop.permute.xlu0 %3285
    %v3288 = vadd.f32 %v3278, %v3286
    %v3289 = vtanh.pop %v3288
    %3291 = vrot.lane.b32.xlu0 %v3289, 64
    %v3292 = vpop.permute.xlu0 %3291
    %v3294 = vmul.f32 %v3277, %v3292
    %v3295 = vld [vmem:[#allocation7] sm:$0xff]
    %v3296 = vld [vmem:[#allocation7 + $0x8] sm:$0xff]
    %v3297 = vld [vmem:[#allocation7 + $0x10] sm:$0xff]
    %v3298 = vld [vmem:[#allocation7 + $0x18] sm:$0xff]
    %v3299 = vld [vmem:[%s8] sm:$0x1]
    %v3301 = vlaneseq
    %v3302 = vshrl.u32 %v3301, 7
    %v3303 = vsub.s32 0, %v3302
    %v3304 = vrot.slane %v3299, %v3303
    %v3306 = vrot.slane %v249, 7
    %v3307 = vrot.slane %v264, 6
    %v3308 = vsel %vm1388, %v3307, %v3306
    %v3309 = vsel %vm307, %v3308, 0
    %3311 = vmatprep.subr.mxu0 0.0
    %3312 = vmatpush1.msra.mxu0 %v3295
    %3313 = vmatprep.subr.mxu0 0.0
    %3314 = vmatpush1.msra.mxu0 %v3296
    %3315 = vmatprep.subr.mxu0 0.0
    %3316 = vmatpush1.msra.mxu0 %v3297
    %3317 = vmatprep.subr.mxu0 0.0
    %3318 = vmatpush1.msra.mxu0 %v3298
    %3319 = vmatprep.subr.mxu0 0.0
    %3320 = vmatpush1.msra.mxu0 0.0
    %3321 = vmatprep.subr.mxu0 0.0
    %3322 = vmatpush1.msra.mxu0 0.0
    %3323 = vmatprep.subr.mxu0 0.0
    %3324 = vmatpush1.msra.mxu0 0.0
    %3325 = vmatprep.subr.mxu0 0.0
    %3326 = vmatpush1.msra.mxu0 0.0
    %3327 = vmatprep.subr.mxu0 0.0
    %3328 = vmatpush1.msra.mxu0 0.0
    %3329 = vmatprep.subr.mxu0 0.0
    %3330 = vmatpush1.msra.mxu0 0.0
    %3331 = vmatprep.subr.mxu0 0.0
    %3332 = vmatpush1.msra.mxu0 0.0
    %3333 = vmatprep.subr.mxu0 0.0
    %3334 = vmatpush1.msra.mxu0 0.0
    %3335 = vmatprep.subr.mxu0 0.0
    %3336 = vmatpush1.msra.mxu0 0.0
    %3337 = vmatprep.subr.mxu0 0.0
    %3338 = vmatpush1.msra.mxu0 0.0
    %3339 = vmatprep.subr.mxu0 0.0
    %3340 = vmatpush1.msra.mxu0 0.0
    %3341 = vmatprep.subr.mxu0 0.0
    %3342 = vmatpush1.msra.mxu0 0.0
    %3343 = vmatprep.subr.mxu0 0.0
    %3344 = vmatpush1.msra.mxu0 0.0
    %3345 = vmatprep.subr.mxu0 0.0
    %3346 = vmatpush1.msra.mxu0 0.0
    %3347 = vmatprep.subr.mxu0 0.0
    %3348 = vmatpush1.msra.mxu0 0.0
    %3349 = vmatprep.subr.mxu0 0.0
    %3350 = vmatpush1.msra.mxu0 0.0
    %3351 = vmatprep.subr.mxu0 0.0
    %3352 = vmatpush1.msra.mxu0 0.0
    %3353 = vmatprep.subr.mxu0 0.0
    %3354 = vmatpush1.msra.mxu0 0.0
    %3355 = vmatprep.subr.mxu0 0.0
    %3356 = vmatpush1.msra.mxu0 0.0
    %3357 = vmatprep.subr.mxu0 0.0
    %3358 = vmatpush1.msra.mxu0 0.0
    %3359 = vmatprep.subr.mxu0 0.0
    %3360 = vmatpush1.msra.mxu0 0.0
    %3361 = vmatprep.subr.mxu0 0.0
    %3362 = vmatpush1.msra.mxu0 0.0
    %3363 = vmatprep.subr.mxu0 0.0
    %3364 = vmatpush1.msra.mxu0 0.0
    %3365 = vmatprep.subr.mxu0 0.0
    %3366 = vmatpush1.msra.mxu0 0.0
    %3367 = vmatprep.subr.mxu0 0.0
    %3368 = vmatpush1.msra.mxu0 0.0
    %3369 = vmatprep.subr.mxu0 0.0
    %3370 = vmatpush1.msra.mxu0 0.0
    %3371 = vmatprep.subr.mxu0 0.0
    %3372 = vmatpush1.msra.mxu0 0.0
    %3373 = vmatprep.subr.mxu0 0.0
    %3374 = vmatpush1.msra.mxu0 0.0
    %3375 = vmatprep.mubr.f32.mxu0 0.0
    %3376 = vmatmul.mubr.f32.gmra.mrb[0].mxu0 %v3309
    %v3377 = vpop.f32.mrb[0].mxu0
    %v3378 = vadd.f32 %v3304, %v3377
    %v3379 = vpop.f32.mrb[0].mxu0
    %3380 = vdwg.mxu0
    %v3381 = vtanh.pop %v3378
    %v3382 = vxor.u32 %v3378, 2147483648
    %v3383 = vmul.f32 %v3382, 1.442695
    %v3384 = vpow.pop %v3383
    %v3385 = vadd.f32 %v3384, 1.0
    %v3386 = vrcp.pop %v3385
    %v3387 = vmul.f32 1.0, %v3386
    %v3388 = vsel %vm1384, %v3381, %v3387
    %3390 = vrot.lane.b32.xlu0 %v3388, 64
    %v3391 = vpop.permute.xlu0 %3390
    %v3393 = vmul.f32 %v3388, %v3391
    %v3394 = vtanh.pop %v3393
    %3396 = vrot.lane.b32.xlu0 %v3394, 96
    %v3397 = vpop.permute.xlu0 %3396
    %v3399 = vmul.f32 %v3388, %v3397
    %v3402 = vsel %vm1388, %v1178, %v1170
    %3405 = vrot.lane.b32.xlu0 %v3294, 32
    %v3406 = vpop.permute.xlu0 %3405
    %3409 = vrot.lane.b32.xlu0 %v3399, 64
    %v3410 = vpop.permute.xlu0 %3409
    %v3412 = vsel %vm307, %v3406, %v3410
    %v3413 = vmax.f32 %v3402, 0.0
    %v3414 = vmax.f32 %v3412, 0.0
    %v3415 = vld [vmem:[#allocation8] sm:$0xff]
    %v3416 = vld [vmem:[#allocation8 + $0x8] sm:$0xff]
    %v3417 = vld [vmem:[#allocation8 + $0x10] sm:$0xff]
    %v3418 = vld [vmem:[#allocation8 + $0x18] sm:$0xff]
    %v3419 = vld [vmem:[#allocation8 + $0x20] sm:$0xff]
    %v3420 = vld [vmem:[#allocation8 + $0x28] sm:$0xff]
    %v3421 = vld [vmem:[#allocation8 + $0x30] sm:$0xff]
    %v3422 = vld [vmem:[#allocation8 + $0x38] sm:$0xff]
    %v3423 = vld [vmem:[#allocation8 + $0x40] sm:$0xff]
    %v3424 = vld [vmem:[#allocation8 + $0x48] sm:$0xff]
    %v3425 = vld [vmem:[#allocation8 + $0x50] sm:$0xff]
    %v3426 = vld [vmem:[#allocation8 + $0x58] sm:$0xff]
    %v3427 = vld [vmem:[#allocation8 + $0x60] sm:$0xff]
    %v3428 = vld [vmem:[#allocation8 + $0x68] sm:$0xff]
    %v3429 = vld [vmem:[#allocation8 + $0x70] sm:$0xff]
    %v3430 = vld [vmem:[#allocation8 + $0x78] sm:$0xff]
    %v3431 = vld [vmem:[#allocation8 + $0x80] sm:$0xff]
    %v3432 = vld [vmem:[#allocation8 + $0x88] sm:$0xff]
    %v3433 = vld [vmem:[#allocation8 + $0x90] sm:$0xff]
    %v3434 = vld [vmem:[#allocation8 + $0x98] sm:$0xff]
    %v3435 = vld [vmem:[#allocation8 + $0xa0] sm:$0xff]
    %v3436 = vld [vmem:[#allocation8 + $0xa8] sm:$0xff]
    %v3437 = vld [vmem:[#allocation8 + $0xb0] sm:$0xff]
    %v3438 = vld [vmem:[#allocation8 + $0xb8] sm:$0xff]
    %v3439 = vld [vmem:[%s10] sm:$0x1]
    %v3441 = vlaneseq
    %v3442 = vshrl.u32 %v3441, 7
    %v3443 = vsub.s32 0, %v3442
    %v3444 = vrot.slane %v3439, %v3443
    %vm3446 = vcmask 523264
    %v3448 = vsel %vm3446, %v3414, 0
    %3450 = vmatprep.subr.mxu0 0.0
    %3451 = vmatpush1.msra.mxu0 %v3415
    %3452 = vmatprep.subr.mxu0 0.0
    %3453 = vmatpush1.msra.mxu0 %v3416
    %3454 = vmatprep.subr.mxu0 0.0
    %3455 = vmatpush1.msra.mxu0 %v3417
    %3456 = vmatprep.subr.mxu0 0.0
    %3457 = vmatpush1.msra.mxu0 %v3418
    %3458 = vmatprep.subr.mxu0 0.0
    %3459 = vmatpush1.msra.mxu0 %v3419
    %3460 = vmatprep.subr.mxu0 0.0
    %3461 = vmatpush1.msra.mxu0 %v3420
    %3462 = vmatprep.subr.mxu0 0.0
    %3463 = vmatpush1.msra.mxu0 %v3421
    %3464 = vmatprep.subr.mxu0 0.0
    %3465 = vmatpush1.msra.mxu0 %v3422
    %3466 = vmatprep.subr.mxu0 0.0
    %3467 = vmatpush1.msra.mxu0 %v3423
    %3468 = vmatprep.subr.mxu0 0.0
    %3469 = vmatpush1.msra.mxu0 %v3424
    %3470 = vmatprep.subr.mxu0 0.0
    %3471 = vmatpush1.msra.mxu0 %v3425
    %3472 = vmatprep.subr.mxu0 0.0
    %3473 = vmatpush1.msra.mxu0 %v3426
    %3474 = vmatprep.subr.mxu0 0.0
    %3475 = vmatpush1.msra.mxu0 %v3427
    %3476 = vmatprep.subr.mxu0 0.0
    %3477 = vmatpush1.msra.mxu0 %v3428
    %3478 = vmatprep.subr.mxu0 0.0
    %3479 = vmatpush1.msra.mxu0 %v3429
    %3480 = vmatprep.subr.mxu0 0.0
    %3481 = vmatpush1.msra.mxu0 %v3430
    %3482 = vmatprep.subr.mxu0 0.0
    %3483 = vmatpush1.msra.mxu0 %v3431
    %3484 = vmatprep.subr.mxu0 0.0
    %3485 = vmatpush1.msra.mxu0 %v3432
    %3486 = vmatprep.subr.mxu0 0.0
    %3487 = vmatpush1.msra.mxu0 %v3433
    %3488 = vmatprep.subr.mxu0 0.0
    %3489 = vmatpush1.msra.mxu0 %v3434
    %3490 = vmatprep.subr.mxu0 0.0
    %3491 = vmatpush1.msra.mxu0 %v3435
    %3492 = vmatprep.subr.mxu0 0.0
    %3493 = vmatpush1.msra.mxu0 %v3436
    %3494 = vmatprep.subr.mxu0 0.0
    %3495 = vmatpush1.msra.mxu0 %v3437
    %3496 = vmatprep.subr.mxu0 0.0
    %3497 = vmatpush1.msra.mxu0 %v3438
    %3498 = vmatprep.subr.mxu0 0.0
    %3499 = vmatpush1.msra.mxu0 0.0
    %3500 = vmatprep.subr.mxu0 0.0
    %3501 = vmatpush1.msra.mxu0 0.0
    %3502 = vmatprep.subr.mxu0 0.0
    %3503 = vmatpush1.msra.mxu0 0.0
    %3504 = vmatprep.subr.mxu0 0.0
    %3505 = vmatpush1.msra.mxu0 0.0
    %3506 = vmatprep.subr.mxu0 0.0
    %3507 = vmatpush1.msra.mxu0 0.0
    %3508 = vmatprep.subr.mxu0 0.0
    %3509 = vmatpush1.msra.mxu0 0.0
    %3510 = vmatprep.subr.mxu0 0.0
    %3511 = vmatpush1.msra.mxu0 0.0
    %3512 = vmatprep.subr.mxu0 0.0
    %3513 = vmatpush1.msra.mxu0 0.0
    %3514 = vmatprep.mubr.f32.mxu0 %v3448
    %3515 = vmatmul.mubr.f32.gmra.mrb[0].mxu0 %v3413
    %v3516 = vpop.f32.mrb[0].mxu0
    %v3517 = vadd.f32 %v3444, %v3516
    %v3518 = vpop.f32.mrb[0].mxu0
    %3519 = vdwg.mxu0
    %3520 = vst [vmem:[#allocation10] sm:$0x3] %v3517
    // Predicated region
    $region62: #{tpu_custom_call.1} parent=1 // pred_check
      _
    $region63: #{tpu_custom_call.1} parent=1 // pred_check_branch
      %3522 = sbr.rel (0) target = $region65
    $region64: #{tpu_custom_call.1} parent=1 // pred_region
      %s3524 = ssub.s32 32, 32
      %3525 = vsyncadd [#allocation4], %s3524
      %s3527 = sshll.u32 [#allocation10], 4
      %s3528 = int_to_ptr.vmem [resolvable:$true] %s3527
      %3530 = dma.vmem_to_hbm [thread:$0]  %s3528, 32, %s11, [#allocation4]
    $region65: #{tpu_custom_call.1} parent=1 // pred_fallthru
      _
    // Predicated region
    $region66: #{tpu_custom_call.1} parent=1 // pred_check
      _
    $region67: #{tpu_custom_call.1} parent=1 // pred_check_branch
      %3532 = sbr.rel (0) target = $region69
    $region68: #{tpu_custom_call.1} parent=1 // pred_region
      %3533 = dma.done [#allocation4], 32
    $region69: #{tpu_custom_call.1} parent=1 // pred_fallthru
      _
    %3534 = vsyncpa [#allocation3], 1
    %3535 = vsyncpa [#allocation6], 1
    %3536 = vsyncpa [#allocation9], 1
    %3537 = vsyncpa [#allocation4], 1

</llo_original>
